<compile_context>
chip_gen: v6e
topology: v6e:2x2x1
jax: 0.10.0
libtpu: 0.0.40
codegen_flags: <defaults>
</compile_context>

<pallas_src>
import functools

import numpy as np
import jax
import jax.numpy as jnp
from jax import lax
from jax.experimental import pallas as pl
from jax.experimental.pallas import tpu as pltpu


_NEG_BIG = -1e30   # bias for padded logit lanes (keeps log_softmax exact)
_LANE = 128


# ----------------------------------------------------------------------------
# Fused per-image kernel: conv1+pool1 -> conv2+pool2 -> fc1 -> fc2 -> fc3.
# All intermediates live in vregs/VMEM; the only HBM write is one lane-dense
# (1, NPAD) logits row per image.
# ----------------------------------------------------------------------------
def _lenet_image_kernel(x_ref, sel1_ref, m1_ref, b1_ref, sel2_ref, m2_ref,
                        b2_ref, w1h_ref, fb1_ref, w2_ref, fb2_ref, w3_ref,
                        fb3_ref, o_ref, *, use_log_softmax):
    dot = functools.partial(jnp.dot, preferred_element_type=jnp.float32)

    x = x_ref[0]                                   # (28, 28) f32, one image

    # --- conv1 (5x5 valid) + bias + ReLU + 2x2 max-pool ----------------------
    # One selection matmul gathers, for every kernel-row offset kh and both
    # vertical pool parities s, the 12 stride-2 input rows (s at 16-row
    # spacing, kh blocks at 32-row spacing).  Each kh then needs ONE tap
    # matmul whose 256 lanes hold both horizontal pool parities t (two
    # zero-padded 128-lane blocks).
    rows1 = dot(sel1_ref[...], x)                  # (160, 28)
    p = [dot(rows1[kh * 32:(kh + 1) * 32, :], m1_ref[kh]) for kh in range(5)]
    z1 = ((p[0] + p[1]) + (p[2] + p[3])) + p[4]    # (32, 256)
    zp1 = jnp.maximum(jnp.maximum(z1[0:12, 0:128], z1[0:12, 128:256]),
                      jnp.maximum(z1[16:28, 0:128], z1[16:28, 128:256]))
    p1 = jnp.maximum(zp1 + b1_ref[...], 0.0)       # (12, 128): [h, w*6+c]

    # --- conv2 + bias + ReLU + 2x2 max-pool (same scheme) ---------------------
    rows2 = dot(sel2_ref[...], p1)                 # (80, 128)
    p = [dot(rows2[kh * 16:(kh + 1) * 16, :], m2_ref[kh]) for kh in range(5)]
    z2 = ((p[0] + p[1]) + (p[2] + p[3])) + p[4]    # (16, 256)
    zp2 = jnp.maximum(jnp.maximum(z2[0:4, 0:128], z2[0:4, 128:256]),
                      jnp.maximum(z2[8:12, 0:128], z2[8:12, 128:256]))
    p2 = jnp.maximum(zp2 + b2_ref[...], 0.0)       # (4, 128): [i, j*16+o]

    # --- fc1: torch NCHW flatten folded into per-spatial-row weight slabs ----
    h = ((dot(p2[0:1, :], w1h_ref[0]) + dot(p2[1:2, :], w1h_ref[1])) +
         (dot(p2[2:3, :], w1h_ref[2]) + dot(p2[3:4, :], w1h_ref[3])))
    h = jnp.maximum(h + fb1_ref[...], 0.0)         # (1, 128), lanes>=120 zero

    # --- fc2 + ReLU, fc3 (output lane-padded to a multiple of 128) ------------
    h = jnp.maximum(dot(h, w2_ref[...]) + fb2_ref[...], 0.0)   # (1, 128)
    logits = dot(h, w3_ref[...]) + fb3_ref[...]                # (1, NPAD)

    if use_log_softmax:
        # Padded lanes carry a -1e30 bias: exp underflows to exactly 0.
        m = jnp.max(logits, axis=1, keepdims=True)
        lse = jnp.log(jnp.sum(jnp.exp(logits - m), axis=1, keepdims=True)) + m
        logits = logits - lse

    o_ref[0] = logits.astype(o_ref.dtype)


# ----------------------------------------------------------------------------
# Parameters (PyTorch layout) and one-time, batch-independent repacking.
# ----------------------------------------------------------------------------
def init_lenet_params(key, num_classes):
    ks = jax.random.split(key, 10)
    return {
        "conv1_w": jax.random.normal(ks[0], (6, 1, 5, 5), jnp.float32) * 0.1,
        "conv1_b": jax.random.normal(ks[1], (6,), jnp.float32) * 0.1,
        "conv2_w": jax.random.normal(ks[2], (16, 6, 5, 5), jnp.float32) * 0.1,
        "conv2_b": jax.random.normal(ks[3], (16,), jnp.float32) * 0.1,
        "fc1_w": jax.random.normal(ks[4], (120, 16 * 4 * 4), jnp.float32) * 0.05,
        "fc1_b": jax.random.normal(ks[5], (120,), jnp.float32) * 0.05,
        "fc2_w": jax.random.normal(ks[6], (84, 120), jnp.float32) * 0.05,
        "fc2_b": jax.random.normal(ks[7], (84,), jnp.float32) * 0.05,
        "fc3_w": jax.random.normal(ks[8], (num_classes, 84), jnp.float32) * 0.05,
        "fc3_b": jax.random.normal(ks[9], (num_classes,), jnp.float32) * 0.05,
    }


def prepare_lenet_constants(params, num_classes):
    """Repack PyTorch-layout LeNet weights into per-image, lane-dense matmul
    operands.  Runs once in numpy at init; independent of batch size."""
    K, C1, C2 = 5, 6, 16
    H0, HP1, HP2 = 28, 12, 4        # input H=W, pooled conv1 H=W, pooled conv2 H=W
    L = _LANE

    w1 = np.asarray(params["conv1_w"], np.float32)   # (6, 1, 5, 5)
    b1 = np.asarray(params["conv1_b"], np.float32)
    w2 = np.asarray(params["conv2_w"], np.float32)   # (16, 6, 5, 5)
    b2 = np.asarray(params["conv2_b"], np.float32)
    f1w = np.asarray(params["fc1_w"], np.float32)    # (120, 256)
    f1b = np.asarray(params["fc1_b"], np.float32)
    f2w = np.asarray(params["fc2_w"], np.float32)    # (84, 120)
    f2b = np.asarray(params["fc2_b"], np.float32)
    f3w = np.asarray(params["fc3_w"], np.float32)    # (C, 84)
    f3b = np.asarray(params["fc3_b"], np.float32)
    NH1, NH2 = f1w.shape[0], f2w.shape[0]            # 120, 84

    # conv1 selection: SEL1[kh*32 + s*16 + i, 2i+s+kh] = 1 (s-parities stacked
    # with 8-aligned 16-row spacing; one matmul gathers all kh row slabs).
    SEL1 = np.zeros((K * 32, H0), np.float32)
    for kh in range(K):
        for s in range(2):
            for i in range(HP1):
                SEL1[kh * 32 + s * 16 + i, 2 * i + s + kh] = 1.0
    # conv1 taps: both horizontal parities t packed as two 128-lane blocks.
    M1 = np.zeros((K, H0, 2 * L), np.float32)
    for kh in range(K):
        for t in range(2):
            for j in range(HP1):
                for kw in range(K):
                    M1[kh, 2 * j + t + kw,
                       t * L + j * C1: t * L + (j + 1) * C1] = w1[:, 0, kh, kw]
    b1r = np.zeros((1, L), np.float32)
    for j in range(HP1):
        b1r[0, j * C1:(j + 1) * C1] = b1

    # conv2 selection / taps, same construction on the (12, 128) p1 slab.
    SEL2 = np.zeros((K * 16, HP1), np.float32)
    for kh in range(K):
        for s in range(2):
            for i in range(HP2):
                SEL2[kh * 16 + s * 8 + i, 2 * i + s + kh] = 1.0
    M2 = np.zeros((K, L, 2 * L), np.float32)
    for kh in range(K):
        for t in range(2):
            for j in range(HP2):
                for kw in range(K):
                    w = 2 * j + t + kw
                    for c in range(C1):
                        M2[kh, w * C1 + c,
                           t * L + j * C2: t * L + (j + 1) * C2] = w2[:, c, kh, kw]
    b2r = np.zeros((1, L), np.float32)
    for j in range(HP2):
        b2r[0, j * C2:(j + 1) * C2] = b2

    # fc1: per-spatial-row weight slabs so the torch x.view(-1, 256) NCHW
    # flatten needs no in-kernel rearrangement; lanes padded 120 -> 128.
    W1h = np.zeros((HP2, L, L), np.float32)
    for i in range(HP2):
        for j in range(HP2):
            for o in range(C2):
                W1h[i, j * C2 + o, :NH1] = f1w[:, o * (HP2 * HP2) + i * HP2 + j]
    fb1 = np.zeros((1, L), np.float32)
    fb1[0, :NH1] = f1b

    # fc2 / fc3: pre-transposed, rows/lanes zero-padded to 128; fc3 padded
    # lanes get a -1e30 bias (inert for log_softmax, sliced off in wrapper).
    W2 = np.zeros((L, L), np.float32)
    W2[:NH1, :NH2] = f2w.T
    fb2 = np.zeros((1, L), np.float32)
    fb2[0, :NH2] = f2b
    npad = ((num_classes + L - 1) // L) * L
    W3 = np.zeros((L, npad), np.float32)
    W3[:NH2, :num_classes] = f3w.T
    fb3 = np.full((1, npad), _NEG_BIG, np.float32)
    fb3[0, :num_classes] = f3b

    consts = dict(SEL1=SEL1, M1=M1, b1r=b1r, SEL2=SEL2, M2=M2, b2r=b2r,
                  W1h=W1h, fb1=fb1, W2=W2, fb2=fb2, W3=W3, fb3=fb3)
    return {k: jnp.asarray(v) for k, v in consts.items()}


# ----------------------------------------------------------------------------
# Forward wrapper: one pallas_call, grid over the batch ("parallel" so the
# two TensorCores on v7x split it; no-op on v5e/v6e).
# ----------------------------------------------------------------------------
def lenet_forward(consts, x, *, num_classes, use_log_softmax=False):
    """x: (B, 1, 28, 28) float32 NCHW -> (B, num_classes)."""
    B = x.shape[0]
    assert x.shape[1:] == (1, 28, 28), "LeNet expects (B, 1, 28, 28) input"
    npad = consts["W3"].shape[1]
    x3 = x.reshape(B, 28, 28).astype(jnp.float32)          # free layout change

    const_names = ("SEL1", "M1", "b1r", "SEL2", "M2", "b2r",
                   "W1h", "fb1", "W2", "fb2", "W3", "fb3")
    const_args = [consts[k] for k in const_names]

    def const_spec(a):
        n = a.ndim
        return pl.BlockSpec(a.shape, lambda b, n=n: (0,) * n)   # resident, DMA'd once

    in_specs = ([pl.BlockSpec((1, 28, 28), lambda b: (b, 0, 0))]
                + [const_spec(a) for a in const_args])

    out = pl.pallas_call(
        functools.partial(_lenet_image_kernel, use_log_softmax=use_log_softmax),
        out_shape=jax.ShapeDtypeStruct((B, 1, npad), jnp.float32),
        grid=(B,),
        in_specs=in_specs,
        out_specs=pl.BlockSpec((1, 1, npad), lambda b: (b, 0, 0)),
        compiler_params=pltpu.CompilerParams(
            dimension_semantics=("parallel",)),
    )(x3, *const_args)
    return out[:, 0, :num_classes]


# ----------------------------------------------------------------------------
# Pure-JAX/XLA reference of the PyTorch forward (correctness check).
# ----------------------------------------------------------------------------
def lenet_reference(params, x, use_log_softmax=False):
    hi = lax.Precision.HIGHEST
    y = lax.conv_general_dilated(
        x, params["conv1_w"], (1, 1), "VALID",
        dimension_numbers=("NCHW", "OIHW", "NCHW"), precision=hi)
    y = jax.nn.relu(y + params["conv1_b"][None, :, None, None])
    y = lax.reduce_window(y, -jnp.inf, lax.max, (1, 1, 2, 2), (1, 1, 2, 2), "VALID")
    y = lax.conv_general_dilated(
        y, params["conv2_w"], (1, 1), "VALID",
        dimension_numbers=("NCHW", "OIHW", "NCHW"), precision=hi)
    y = jax.nn.relu(y + params["conv2_b"][None, :, None, None])
    y = lax.reduce_window(y, -jnp.inf, lax.max, (1, 1, 2, 2), (1, 1, 2, 2), "VALID")
    y = y.reshape(y.shape[0], -1)
    y = jax.nn.relu(jnp.dot(y, params["fc1_w"].T, precision=hi) + params["fc1_b"])
    y = jax.nn.relu(jnp.dot(y, params["fc2_w"].T, precision=hi) + params["fc2_b"])
    y = jnp.dot(y, params["fc3_w"].T, precision=hi) + params["fc3_b"]
    if use_log_softmax:
        y = jax.nn.log_softmax(y, axis=1)
    return y


if __name__ == "__main__":
    num_classes = 10
    batch = 2
    key = jax.random.PRNGKey(0)
    k_param, k_x = jax.random.split(key)

    params = init_lenet_params(k_param, num_classes)
    consts = prepare_lenet_constants(params, num_classes)   # batch-independent
    # LeNet's fc1 (16*4*4) implies a 28x28 single-channel input.
    x = jax.random.normal(k_x, (batch, 1, 28, 28), jnp.float32)

    fwd = jax.jit(functools.partial(
        lenet_forward, num_classes=num_classes, use_log_softmax=False))
    logits = fwd(consts, x)
    jax.block_until_ready(logits)
    assert logits.shape == (batch, num_classes)

    fwd_ls = jax.jit(functools.partial(
        lenet_forward, num_classes=num_classes, use_log_softmax=True))
    logp = fwd_ls(consts, x)
    jax.block_until_ready(logp)
    assert logp.shape == (batch, num_classes)

    # Numerical parity with the PyTorch-semantics reference.
    ref = lenet_reference(params, x, use_log_softmax=False)
    ref_ls = lenet_reference(params, x, use_log_softmax=True)
    assert jnp.allclose(logits, ref, rtol=5e-3, atol=5e-3), float(
        jnp.max(jnp.abs(logits - ref)))
    assert jnp.allclose(logp, ref_ls, rtol=5e-3, atol=5e-3), float(
        jnp.max(jnp.abs(logp - ref_ls)))

    print("KERNEL_OK")
</pallas_src>

<mosaic_0001>
module attributes {stable_mosaic.version = 11 : i64} {
  func.func @_lenet_image_kernel(%arg0: i32, %arg1: memref<1x28x28xf32, #tpu.memory_space<vmem>>, %arg2: memref<160x28xf32, #tpu.memory_space<vmem>>, %arg3: memref<5x28x256xf32, #tpu.memory_space<vmem>>, %arg4: memref<1x128xf32, #tpu.memory_space<vmem>>, %arg5: memref<80x12xf32, #tpu.memory_space<vmem>>, %arg6: memref<5x128x256xf32, #tpu.memory_space<vmem>>, %arg7: memref<1x128xf32, #tpu.memory_space<vmem>>, %arg8: memref<4x128x128xf32, #tpu.memory_space<vmem>>, %arg9: memref<1x128xf32, #tpu.memory_space<vmem>>, %arg10: memref<128x128xf32, #tpu.memory_space<vmem>>, %arg11: memref<1x128xf32, #tpu.memory_space<vmem>>, %arg12: memref<128x128xf32, #tpu.memory_space<vmem>>, %arg13: memref<1x128xf32, #tpu.memory_space<vmem>>, %arg14: memref<1x1x128xf32, #tpu.memory_space<vmem>>) attributes {dimension_semantics = [#tpu.dimension_semantics<parallel>], iteration_bounds = array<i64: 2>, scalar_prefetch = 0 : i64, scratch_operands = 0 : i64, tpu.core_type = #tpu.core_type<tc>, window_params = [{transform_indices = @transform_0, window_bounds = array<i64: 1, 28, 28>}, {pipeline_mode = #tpu.pipeline_mode<synchronous>, transform_indices = @transform_1, window_bounds = array<i64: 160, 28>}, {pipeline_mode = #tpu.pipeline_mode<synchronous>, transform_indices = @transform_2, window_bounds = array<i64: 5, 28, 256>}, {pipeline_mode = #tpu.pipeline_mode<synchronous>, transform_indices = @transform_3, window_bounds = array<i64: 1, 128>}, {pipeline_mode = #tpu.pipeline_mode<synchronous>, transform_indices = @transform_4, window_bounds = array<i64: 80, 12>}, {pipeline_mode = #tpu.pipeline_mode<synchronous>, transform_indices = @transform_5, window_bounds = array<i64: 5, 128, 256>}, {pipeline_mode = #tpu.pipeline_mode<synchronous>, transform_indices = @transform_6, window_bounds = array<i64: 1, 128>}, {pipeline_mode = #tpu.pipeline_mode<synchronous>, transform_indices = @transform_7, window_bounds = array<i64: 4, 128, 128>}, {pipeline_mode = #tpu.pipeline_mode<synchronous>, transform_indices = @transform_8, window_bounds = array<i64: 1, 128>}, {pipeline_mode = #tpu.pipeline_mode<synchronous>, transform_indices = @transform_9, window_bounds = array<i64: 128, 128>}, {pipeline_mode = #tpu.pipeline_mode<synchronous>, transform_indices = @transform_10, window_bounds = array<i64: 1, 128>}, {pipeline_mode = #tpu.pipeline_mode<synchronous>, transform_indices = @transform_11, window_bounds = array<i64: 128, 128>}, {pipeline_mode = #tpu.pipeline_mode<synchronous>, transform_indices = @transform_12, window_bounds = array<i64: 1, 128>}, {transform_indices = @transform_13, window_bounds = array<i64: 1, 1, 128>}]} {
    %c0 = arith.constant 0 : index
    %c0_0 = arith.constant 0 : index
    %c0_1 = arith.constant 0 : index
    %0 = vector.load %arg1[%c0, %c0_0, %c0_1] : memref<1x28x28xf32, #tpu.memory_space<vmem>>, vector<1x28x28xf32>
    %1 = vector.shape_cast %0 : vector<1x28x28xf32> to vector<28x28xf32>
    %c0_2 = arith.constant 0 : index
    %c0_3 = arith.constant 0 : index
    %2 = vector.load %arg2[%c0_2, %c0_3] : memref<160x28xf32, #tpu.memory_space<vmem>>, vector<160x28xf32>
    %cst = arith.constant dense<0.000000e+00> : vector<160x28xf32>
    %3 = tpu.matmul %2, %1, %cst {dimension_numbers = #tpu.dot_dimension_numbers<[1], [0], [0], [1], [0, 0, 1, 1], [], []>} : vector<160x28xf32>, vector<28x28xf32>, vector<160x28xf32> -> vector<160x28xf32>
    %4 = vector.extract_strided_slice %3 {offsets = [0, 0], sizes = [32, 28], strides = [1, 1]} : vector<160x28xf32> to vector<32x28xf32>
    %c0_4 = arith.constant 0 : index
    %c0_5 = arith.constant 0 : index
    %c0_6 = arith.constant 0 : index
    %5 = vector.load %arg3[%c0_4, %c0_5, %c0_6] : memref<5x28x256xf32, #tpu.memory_space<vmem>>, vector<1x28x256xf32>
    %6 = vector.shape_cast %5 : vector<1x28x256xf32> to vector<28x256xf32>
    %cst_7 = arith.constant dense<0.000000e+00> : vector<32x256xf32>
    %7 = tpu.matmul %4, %6, %cst_7 {dimension_numbers = #tpu.dot_dimension_numbers<[1], [0], [0], [1], [0, 0, 1, 1], [], []>} : vector<32x28xf32>, vector<28x256xf32>, vector<32x256xf32> -> vector<32x256xf32>
    %8 = vector.extract_strided_slice %3 {offsets = [32, 0], sizes = [32, 28], strides = [1, 1]} : vector<160x28xf32> to vector<32x28xf32>
    %c1 = arith.constant 1 : index
    %c0_8 = arith.constant 0 : index
    %c0_9 = arith.constant 0 : index
    %9 = vector.load %arg3[%c1, %c0_8, %c0_9] : memref<5x28x256xf32, #tpu.memory_space<vmem>>, vector<1x28x256xf32>
    %10 = vector.shape_cast %9 : vector<1x28x256xf32> to vector<28x256xf32>
    %cst_10 = arith.constant dense<0.000000e+00> : vector<32x256xf32>
    %11 = tpu.matmul %8, %10, %cst_10 {dimension_numbers = #tpu.dot_dimension_numbers<[1], [0], [0], [1], [0, 0, 1, 1], [], []>} : vector<32x28xf32>, vector<28x256xf32>, vector<32x256xf32> -> vector<32x256xf32>
    %12 = vector.extract_strided_slice %3 {offsets = [64, 0], sizes = [32, 28], strides = [1, 1]} : vector<160x28xf32> to vector<32x28xf32>
    %c2 = arith.constant 2 : index
    %c0_11 = arith.constant 0 : index
    %c0_12 = arith.constant 0 : index
    %13 = vector.load %arg3[%c2, %c0_11, %c0_12] : memref<5x28x256xf32, #tpu.memory_space<vmem>>, vector<1x28x256xf32>
    %14 = vector.shape_cast %13 : vector<1x28x256xf32> to vector<28x256xf32>
    %cst_13 = arith.constant dense<0.000000e+00> : vector<32x256xf32>
    %15 = tpu.matmul %12, %14, %cst_13 {dimension_numbers = #tpu.dot_dimension_numbers<[1], [0], [0], [1], [0, 0, 1, 1], [], []>} : vector<32x28xf32>, vector<28x256xf32>, vector<32x256xf32> -> vector<32x256xf32>
    %16 = vector.extract_strided_slice %3 {offsets = [96, 0], sizes = [32, 28], strides = [1, 1]} : vector<160x28xf32> to vector<32x28xf32>
    %c3 = arith.constant 3 : index
    %c0_14 = arith.constant 0 : index
    %c0_15 = arith.constant 0 : index
    %17 = vector.load %arg3[%c3, %c0_14, %c0_15] : memref<5x28x256xf32, #tpu.memory_space<vmem>>, vector<1x28x256xf32>
    %18 = vector.shape_cast %17 : vector<1x28x256xf32> to vector<28x256xf32>
    %cst_16 = arith.constant dense<0.000000e+00> : vector<32x256xf32>
    %19 = tpu.matmul %16, %18, %cst_16 {dimension_numbers = #tpu.dot_dimension_numbers<[1], [0], [0], [1], [0, 0, 1, 1], [], []>} : vector<32x28xf32>, vector<28x256xf32>, vector<32x256xf32> -> vector<32x256xf32>
    %20 = vector.extract_strided_slice %3 {offsets = [128, 0], sizes = [32, 28], strides = [1, 1]} : vector<160x28xf32> to vector<32x28xf32>
    %c4 = arith.constant 4 : index
    %c0_17 = arith.constant 0 : index
    %c0_18 = arith.constant 0 : index
    %21 = vector.load %arg3[%c4, %c0_17, %c0_18] : memref<5x28x256xf32, #tpu.memory_space<vmem>>, vector<1x28x256xf32>
    %22 = vector.shape_cast %21 : vector<1x28x256xf32> to vector<28x256xf32>
    %cst_19 = arith.constant dense<0.000000e+00> : vector<32x256xf32>
    %23 = tpu.matmul %20, %22, %cst_19 {dimension_numbers = #tpu.dot_dimension_numbers<[1], [0], [0], [1], [0, 0, 1, 1], [], []>} : vector<32x28xf32>, vector<28x256xf32>, vector<32x256xf32> -> vector<32x256xf32>
    %24 = arith.addf %7, %11 : vector<32x256xf32>
    %25 = arith.addf %15, %19 : vector<32x256xf32>
    %26 = arith.addf %24, %25 : vector<32x256xf32>
    %27 = arith.addf %26, %23 : vector<32x256xf32>
    %28 = vector.extract_strided_slice %27 {offsets = [0, 0], sizes = [12, 128], strides = [1, 1]} : vector<32x256xf32> to vector<12x128xf32>
    %29 = vector.extract_strided_slice %27 {offsets = [0, 128], sizes = [12, 128], strides = [1, 1]} : vector<32x256xf32> to vector<12x128xf32>
    %30 = arith.maximumf %28, %29 : vector<12x128xf32>
    %31 = vector.extract_strided_slice %27 {offsets = [16, 0], sizes = [12, 128], strides = [1, 1]} : vector<32x256xf32> to vector<12x128xf32>
    %32 = vector.extract_strided_slice %27 {offsets = [16, 128], sizes = [12, 128], strides = [1, 1]} : vector<32x256xf32> to vector<12x128xf32>
    %33 = arith.maximumf %31, %32 : vector<12x128xf32>
    %34 = arith.maximumf %30, %33 : vector<12x128xf32>
    %c0_20 = arith.constant 0 : index
    %c0_21 = arith.constant 0 : index
    %35 = vector.load %arg4[%c0_20, %c0_21] : memref<1x128xf32, #tpu.memory_space<vmem>>, vector<1x128xf32>
    %36 = vector.broadcast %35 : vector<1x128xf32> to vector<12x128xf32>
    %37 = arith.addf %34, %36 : vector<12x128xf32>
    %cst_22 = arith.constant 0.000000e+00 : f32
    %38 = vector.broadcast %cst_22 : f32 to vector<12x128xf32>
    %39 = arith.maximumf %37, %38 : vector<12x128xf32>
    %c0_23 = arith.constant 0 : index
    %c0_24 = arith.constant 0 : index
    %40 = vector.load %arg5[%c0_23, %c0_24] : memref<80x12xf32, #tpu.memory_space<vmem>>, vector<80x12xf32>
    %cst_25 = arith.constant dense<0.000000e+00> : vector<80x128xf32>
    %41 = tpu.matmul %40, %39, %cst_25 {dimension_numbers = #tpu.dot_dimension_numbers<[1], [0], [0], [1], [0, 0, 1, 1], [], []>} : vector<80x12xf32>, vector<12x128xf32>, vector<80x128xf32> -> vector<80x128xf32>
    %42 = vector.extract_strided_slice %41 {offsets = [0, 0], sizes = [16, 128], strides = [1, 1]} : vector<80x128xf32> to vector<16x128xf32>
    %c0_26 = arith.constant 0 : index
    %c0_27 = arith.constant 0 : index
    %c0_28 = arith.constant 0 : index
    %43 = vector.load %arg6[%c0_26, %c0_27, %c0_28] : memref<5x128x256xf32, #tpu.memory_space<vmem>>, vector<1x128x256xf32>
    %44 = vector.shape_cast %43 : vector<1x128x256xf32> to vector<128x256xf32>
    %cst_29 = arith.constant dense<0.000000e+00> : vector<16x256xf32>
    %45 = tpu.matmul %42, %44, %cst_29 {dimension_numbers = #tpu.dot_dimension_numbers<[1], [0], [0], [1], [0, 0, 1, 1], [], []>} : vector<16x128xf32>, vector<128x256xf32>, vector<16x256xf32> -> vector<16x256xf32>
    %46 = vector.extract_strided_slice %41 {offsets = [16, 0], sizes = [16, 128], strides = [1, 1]} : vector<80x128xf32> to vector<16x128xf32>
    %c1_30 = arith.constant 1 : index
    %c0_31 = arith.constant 0 : index
    %c0_32 = arith.constant 0 : index
    %47 = vector.load %arg6[%c1_30, %c0_31, %c0_32] : memref<5x128x256xf32, #tpu.memory_space<vmem>>, vector<1x128x256xf32>
    %48 = vector.shape_cast %47 : vector<1x128x256xf32> to vector<128x256xf32>
    %cst_33 = arith.constant dense<0.000000e+00> : vector<16x256xf32>
    %49 = tpu.matmul %46, %48, %cst_33 {dimension_numbers = #tpu.dot_dimension_numbers<[1], [0], [0], [1], [0, 0, 1, 1], [], []>} : vector<16x128xf32>, vector<128x256xf32>, vector<16x256xf32> -> vector<16x256xf32>
    %50 = vector.extract_strided_slice %41 {offsets = [32, 0], sizes = [16, 128], strides = [1, 1]} : vector<80x128xf32> to vector<16x128xf32>
    %c2_34 = arith.constant 2 : index
    %c0_35 = arith.constant 0 : index
    %c0_36 = arith.constant 0 : index
    %51 = vector.load %arg6[%c2_34, %c0_35, %c0_36] : memref<5x128x256xf32, #tpu.memory_space<vmem>>, vector<1x128x256xf32>
    %52 = vector.shape_cast %51 : vector<1x128x256xf32> to vector<128x256xf32>
    %cst_37 = arith.constant dense<0.000000e+00> : vector<16x256xf32>
    %53 = tpu.matmul %50, %52, %cst_37 {dimension_numbers = #tpu.dot_dimension_numbers<[1], [0], [0], [1], [0, 0, 1, 1], [], []>} : vector<16x128xf32>, vector<128x256xf32>, vector<16x256xf32> -> vector<16x256xf32>
    %54 = vector.extract_strided_slice %41 {offsets = [48, 0], sizes = [16, 128], strides = [1, 1]} : vector<80x128xf32> to vector<16x128xf32>
    %c3_38 = arith.constant 3 : index
    %c0_39 = arith.constant 0 : index
    %c0_40 = arith.constant 0 : index
    %55 = vector.load %arg6[%c3_38, %c0_39, %c0_40] : memref<5x128x256xf32, #tpu.memory_space<vmem>>, vector<1x128x256xf32>
    %56 = vector.shape_cast %55 : vector<1x128x256xf32> to vector<128x256xf32>
    %cst_41 = arith.constant dense<0.000000e+00> : vector<16x256xf32>
    %57 = tpu.matmul %54, %56, %cst_41 {dimension_numbers = #tpu.dot_dimension_numbers<[1], [0], [0], [1], [0, 0, 1, 1], [], []>} : vector<16x128xf32>, vector<128x256xf32>, vector<16x256xf32> -> vector<16x256xf32>
    %58 = vector.extract_strided_slice %41 {offsets = [64, 0], sizes = [16, 128], strides = [1, 1]} : vector<80x128xf32> to vector<16x128xf32>
    %c4_42 = arith.constant 4 : index
    %c0_43 = arith.constant 0 : index
    %c0_44 = arith.constant 0 : index
    %59 = vector.load %arg6[%c4_42, %c0_43, %c0_44] : memref<5x128x256xf32, #tpu.memory_space<vmem>>, vector<1x128x256xf32>
    %60 = vector.shape_cast %59 : vector<1x128x256xf32> to vector<128x256xf32>
    %cst_45 = arith.constant dense<0.000000e+00> : vector<16x256xf32>
    %61 = tpu.matmul %58, %60, %cst_45 {dimension_numbers = #tpu.dot_dimension_numbers<[1], [0], [0], [1], [0, 0, 1, 1], [], []>} : vector<16x128xf32>, vector<128x256xf32>, vector<16x256xf32> -> vector<16x256xf32>
    %62 = arith.addf %45, %49 : vector<16x256xf32>
    %63 = arith.addf %53, %57 : vector<16x256xf32>
    %64 = arith.addf %62, %63 : vector<16x256xf32>
    %65 = arith.addf %64, %61 : vector<16x256xf32>
    %66 = vector.extract_strided_slice %65 {offsets = [0, 0], sizes = [4, 128], strides = [1, 1]} : vector<16x256xf32> to vector<4x128xf32>
    %67 = vector.extract_strided_slice %65 {offsets = [0, 128], sizes = [4, 128], strides = [1, 1]} : vector<16x256xf32> to vector<4x128xf32>
    %68 = arith.maximumf %66, %67 : vector<4x128xf32>
    %69 = vector.extract_strided_slice %65 {offsets = [8, 0], sizes = [4, 128], strides = [1, 1]} : vector<16x256xf32> to vector<4x128xf32>
    %70 = vector.extract_strided_slice %65 {offsets = [8, 128], sizes = [4, 128], strides = [1, 1]} : vector<16x256xf32> to vector<4x128xf32>
    %71 = arith.maximumf %69, %70 : vector<4x128xf32>
    %72 = arith.maximumf %68, %71 : vector<4x128xf32>
    %c0_46 = arith.constant 0 : index
    %c0_47 = arith.constant 0 : index
    %73 = vector.load %arg7[%c0_46, %c0_47] : memref<1x128xf32, #tpu.memory_space<vmem>>, vector<1x128xf32>
    %74 = vector.broadcast %73 : vector<1x128xf32> to vector<4x128xf32>
    %75 = arith.addf %72, %74 : vector<4x128xf32>
    %cst_48 = arith.constant 0.000000e+00 : f32
    %76 = vector.broadcast %cst_48 : f32 to vector<4x128xf32>
    %77 = arith.maximumf %75, %76 : vector<4x128xf32>
    %78 = vector.extract_strided_slice %77 {offsets = [0, 0], sizes = [1, 128], strides = [1, 1]} : vector<4x128xf32> to vector<1x128xf32>
    %c0_49 = arith.constant 0 : index
    %c0_50 = arith.constant 0 : index
    %c0_51 = arith.constant 0 : index
    %79 = vector.load %arg8[%c0_49, %c0_50, %c0_51] : memref<4x128x128xf32, #tpu.memory_space<vmem>>, vector<1x128x128xf32>
    %80 = vector.shape_cast %79 : vector<1x128x128xf32> to vector<128x128xf32>
    %cst_52 = arith.constant dense<0.000000e+00> : vector<1x128xf32>
    %81 = tpu.matmul %78, %80, %cst_52 {dimension_numbers = #tpu.dot_dimension_numbers<[1], [0], [0], [1], [0, 0, 1, 1], [], []>} : vector<1x128xf32>, vector<128x128xf32>, vector<1x128xf32> -> vector<1x128xf32>
    %82 = vector.extract_strided_slice %77 {offsets = [1, 0], sizes = [1, 128], strides = [1, 1]} : vector<4x128xf32> to vector<1x128xf32>
    %c1_53 = arith.constant 1 : index
    %c0_54 = arith.constant 0 : index
    %c0_55 = arith.constant 0 : index
    %83 = vector.load %arg8[%c1_53, %c0_54, %c0_55] : memref<4x128x128xf32, #tpu.memory_space<vmem>>, vector<1x128x128xf32>
    %84 = vector.shape_cast %83 : vector<1x128x128xf32> to vector<128x128xf32>
    %cst_56 = arith.constant dense<0.000000e+00> : vector<1x128xf32>
    %85 = tpu.matmul %82, %84, %cst_56 {dimension_numbers = #tpu.dot_dimension_numbers<[1], [0], [0], [1], [0, 0, 1, 1], [], []>} : vector<1x128xf32>, vector<128x128xf32>, vector<1x128xf32> -> vector<1x128xf32>
    %86 = arith.addf %81, %85 : vector<1x128xf32>
    %87 = vector.extract_strided_slice %77 {offsets = [2, 0], sizes = [1, 128], strides = [1, 1]} : vector<4x128xf32> to vector<1x128xf32>
    %c2_57 = arith.constant 2 : index
    %c0_58 = arith.constant 0 : index
    %c0_59 = arith.constant 0 : index
    %88 = vector.load %arg8[%c2_57, %c0_58, %c0_59] : memref<4x128x128xf32, #tpu.memory_space<vmem>>, vector<1x128x128xf32>
    %89 = vector.shape_cast %88 : vector<1x128x128xf32> to vector<128x128xf32>
    %cst_60 = arith.constant dense<0.000000e+00> : vector<1x128xf32>
    %90 = tpu.matmul %87, %89, %cst_60 {dimension_numbers = #tpu.dot_dimension_numbers<[1], [0], [0], [1], [0, 0, 1, 1], [], []>} : vector<1x128xf32>, vector<128x128xf32>, vector<1x128xf32> -> vector<1x128xf32>
    %91 = vector.extract_strided_slice %77 {offsets = [3, 0], sizes = [1, 128], strides = [1, 1]} : vector<4x128xf32> to vector<1x128xf32>
    %c3_61 = arith.constant 3 : index
    %c0_62 = arith.constant 0 : index
    %c0_63 = arith.constant 0 : index
    %92 = vector.load %arg8[%c3_61, %c0_62, %c0_63] : memref<4x128x128xf32, #tpu.memory_space<vmem>>, vector<1x128x128xf32>
    %93 = vector.shape_cast %92 : vector<1x128x128xf32> to vector<128x128xf32>
    %cst_64 = arith.constant dense<0.000000e+00> : vector<1x128xf32>
    %94 = tpu.matmul %91, %93, %cst_64 {dimension_numbers = #tpu.dot_dimension_numbers<[1], [0], [0], [1], [0, 0, 1, 1], [], []>} : vector<1x128xf32>, vector<128x128xf32>, vector<1x128xf32> -> vector<1x128xf32>
    %95 = arith.addf %90, %94 : vector<1x128xf32>
    %96 = arith.addf %86, %95 : vector<1x128xf32>
    %c0_65 = arith.constant 0 : index
    %c0_66 = arith.constant 0 : index
    %97 = vector.load %arg9[%c0_65, %c0_66] : memref<1x128xf32, #tpu.memory_space<vmem>>, vector<1x128xf32>
    %98 = arith.addf %96, %97 : vector<1x128xf32>
    %cst_67 = arith.constant 0.000000e+00 : f32
    %99 = vector.broadcast %cst_67 : f32 to vector<1x128xf32>
    %100 = arith.maximumf %98, %99 : vector<1x128xf32>
    %c0_68 = arith.constant 0 : index
    %c0_69 = arith.constant 0 : index
    %101 = vector.load %arg10[%c0_68, %c0_69] : memref<128x128xf32, #tpu.memory_space<vmem>>, vector<128x128xf32>
    %cst_70 = arith.constant dense<0.000000e+00> : vector<1x128xf32>
    %102 = tpu.matmul %100, %101, %cst_70 {dimension_numbers = #tpu.dot_dimension_numbers<[1], [0], [0], [1], [0, 0, 1, 1], [], []>} : vector<1x128xf32>, vector<128x128xf32>, vector<1x128xf32> -> vector<1x128xf32>
    %c0_71 = arith.constant 0 : index
    %c0_72 = arith.constant 0 : index
    %103 = vector.load %arg11[%c0_71, %c0_72] : memref<1x128xf32, #tpu.memory_space<vmem>>, vector<1x128xf32>
    %104 = arith.addf %102, %103 : vector<1x128xf32>
    %cst_73 = arith.constant 0.000000e+00 : f32
    %105 = vector.broadcast %cst_73 : f32 to vector<1x128xf32>
    %106 = arith.maximumf %104, %105 : vector<1x128xf32>
    %c0_74 = arith.constant 0 : index
    %c0_75 = arith.constant 0 : index
    %107 = vector.load %arg12[%c0_74, %c0_75] : memref<128x128xf32, #tpu.memory_space<vmem>>, vector<128x128xf32>
    %cst_76 = arith.constant dense<0.000000e+00> : vector<1x128xf32>
    %108 = tpu.matmul %106, %107, %cst_76 {dimension_numbers = #tpu.dot_dimension_numbers<[1], [0], [0], [1], [0, 0, 1, 1], [], []>} : vector<1x128xf32>, vector<128x128xf32>, vector<1x128xf32> -> vector<1x128xf32>
    %c0_77 = arith.constant 0 : index
    %c0_78 = arith.constant 0 : index
    %109 = vector.load %arg13[%c0_77, %c0_78] : memref<1x128xf32, #tpu.memory_space<vmem>>, vector<1x128xf32>
    %110 = arith.addf %108, %109 : vector<1x128xf32>
    %c0_79 = arith.constant 0 : index
    %c0_80 = arith.constant 0 : index
    %c0_81 = arith.constant 0 : index
    %111 = vector.load %arg14[%c0_79, %c0_80, %c0_81] : memref<1x1x128xf32, #tpu.memory_space<vmem>>, vector<1x1x128xf32>
    %112 = vector.shape_cast %111 : vector<1x1x128xf32> to vector<1x128xf32>
    %113 = vector.shape_cast %110 : vector<1x128xf32> to vector<1x1x128xf32>
    tpu.vector_store %arg14[%c0_79, %c0_80, %c0_81], %113 {strides = array<i32>} : memref<1x1x128xf32, #tpu.memory_space<vmem>>, vector<1x1x128xf32>,
    return
  }
  func.func @transform_0(%arg0: i32) -> (i32, i32, i32) {
    %c0_i32 = arith.constant 0 : i32
    %c0_i32_0 = arith.constant 0 : i32
    %c0_i32_1 = arith.constant 0 : i32
    return %arg0, %c0_i32, %c0_i32_0 : i32, i32, i32
  }
  func.func @transform_1(%arg0: i32) -> (i32, i32) {
    %c0_i32 = arith.constant 0 : i32
    %c0_i32_0 = arith.constant 0 : i32
    %c0_i32_1 = arith.constant 0 : i32
    return %c0_i32, %c0_i32_0 : i32, i32
  }
  func.func @transform_2(%arg0: i32) -> (i32, i32, i32) {
    %c0_i32 = arith.constant 0 : i32
    %c0_i32_0 = arith.constant 0 : i32
    %c0_i32_1 = arith.constant 0 : i32
    %c0_i32_2 = arith.constant 0 : i32
    return %c0_i32, %c0_i32_0, %c0_i32_1 : i32, i32, i32
  }
  func.func @transform_3(%arg0: i32) -> (i32, i32) {
    %c0_i32 = arith.constant 0 : i32
    %c0_i32_0 = arith.constant 0 : i32
    %c0_i32_1 = arith.constant 0 : i32
    return %c0_i32, %c0_i32_0 : i32, i32
  }
  func.func @transform_4(%arg0: i32) -> (i32, i32) {
    %c0_i32 = arith.constant 0 : i32
    %c0_i32_0 = arith.constant 0 : i32
    %c0_i32_1 = arith.constant 0 : i32
    return %c0_i32, %c0_i32_0 : i32, i32
  }
  func.func @transform_5(%arg0: i32) -> (i32, i32, i32) {
    %c0_i32 = arith.constant 0 : i32
    %c0_i32_0 = arith.constant 0 : i32
    %c0_i32_1 = arith.constant 0 : i32
    %c0_i32_2 = arith.constant 0 : i32
    return %c0_i32, %c0_i32_0, %c0_i32_1 : i32, i32, i32
  }
  func.func @transform_6(%arg0: i32) -> (i32, i32) {
    %c0_i32 = arith.constant 0 : i32
    %c0_i32_0 = arith.constant 0 : i32
    %c0_i32_1 = arith.constant 0 : i32
    return %c0_i32, %c0_i32_0 : i32, i32
  }
  func.func @transform_7(%arg0: i32) -> (i32, i32, i32) {
    %c0_i32 = arith.constant 0 : i32
    %c0_i32_0 = arith.constant 0 : i32
    %c0_i32_1 = arith.constant 0 : i32
    %c0_i32_2 = arith.constant 0 : i32
    return %c0_i32, %c0_i32_0, %c0_i32_1 : i32, i32, i32
  }
  func.func @transform_8(%arg0: i32) -> (i32, i32) {
    %c0_i32 = arith.constant 0 : i32
    %c0_i32_0 = arith.constant 0 : i32
    %c0_i32_1 = arith.constant 0 : i32
    return %c0_i32, %c0_i32_0 : i32, i32
  }
  func.func @transform_9(%arg0: i32) -> (i32, i32) {
    %c0_i32 = arith.constant 0 : i32
    %c0_i32_0 = arith.constant 0 : i32
    %c0_i32_1 = arith.constant 0 : i32
    return %c0_i32, %c0_i32_0 : i32, i32
  }
  func.func @transform_10(%arg0: i32) -> (i32, i32) {
    %c0_i32 = arith.constant 0 : i32
    %c0_i32_0 = arith.constant 0 : i32
    %c0_i32_1 = arith.constant 0 : i32
    return %c0_i32, %c0_i32_0 : i32, i32
  }
  func.func @transform_11(%arg0: i32) -> (i32, i32) {
    %c0_i32 = arith.constant 0 : i32
    %c0_i32_0 = arith.constant 0 : i32
    %c0_i32_1 = arith.constant 0 : i32
    return %c0_i32, %c0_i32_0 : i32, i32
  }
  func.func @transform_12(%arg0: i32) -> (i32, i32) {
    %c0_i32 = arith.constant 0 : i32
    %c0_i32_0 = arith.constant 0 : i32
    %c0_i32_1 = arith.constant 0 : i32
    return %c0_i32, %c0_i32_0 : i32, i32
  }
  func.func @transform_13(%arg0: i32) -> (i32, i32, i32) {
    %c0_i32 = arith.constant 0 : i32
    %c0_i32_0 = arith.constant 0 : i32
    %c0_i32_1 = arith.constant 0 : i32
    return %arg0, %c0_i32, %c0_i32_0 : i32, i32, i32
  }
}

</mosaic_0001>

<llo_original>
// kernel: lenet_forward.1
$region0: #{lenet_forward.1}
  #allocation0 [shape = 'u32[]', space=smem, size = 0x4, offset = 0x4, fixed_abs, tag = 'smem constant byte address 0x4 - core index']
  #allocation1 [shape = 'u32[144,128]{1,0:T(1,128)}', space=vmem, size = 0x12000, scoped, tag = 'internal scratch']
  %s0 = inlined_call_operand.vmem [shape: f32[2,28,28], index: 0, kind: input, shape index: {}]
  %s1 = inlined_call_operand.vmem [shape: f32[160,28], index: 1, kind: input, shape index: {}]
  %s2 = inlined_call_operand.hbm [shape: f32[5,28,256], index: 2, kind: input, shape index: {}]
  %s3 = inlined_call_operand.vmem [shape: f32[1,128], index: 3, kind: input, shape index: {}]
  %s4 = inlined_call_operand.vmem [shape: f32[80,12], index: 4, kind: input, shape index: {}]
  %s5 = inlined_call_operand.hbm [shape: f32[5,128,256], index: 5, kind: input, shape index: {}]
  %s6 = inlined_call_operand.vmem [shape: f32[1,128], index: 6, kind: input, shape index: {}]
  %s7 = inlined_call_operand.vmem [shape: f32[4,128,128], index: 7, kind: input, shape index: {}]
  %s8 = inlined_call_operand.vmem [shape: f32[1,128], index: 8, kind: input, shape index: {}]
  %s9 = inlined_call_operand.hbm [shape: f32[128,128], index: 9, kind: input, shape index: {}]
  %s10 = inlined_call_operand.vmem [shape: f32[1,128], index: 10, kind: input, shape index: {}]
  %s11 = inlined_call_operand.hbm [shape: f32[128,128], index: 11, kind: input, shape index: {}]
  %s12 = inlined_call_operand.vmem [shape: f32[1,128], index: 12, kind: input, shape index: {}]
  %s13 = inlined_call_operand.hbm [shape: f32[2,1,128], index: 13, kind: output, shape index: {}]
  %s14 = sld [smem:[#allocation0]]
  $region101: #{lenet_forward.1} parent=0
    _
  %s16 = ssub.s32 1, %s14
  %s17 = scalar_select 0, %s16, %s14
  $region1: #{lenet_forward.1} parent=0
    #allocation2 [shape = 'u8[163840]{0}', space=vmem, size = 0x28000, scoped, tag = 'input window, operand 2, single buffered']
    #allocation3 [shape = 's32[2]{0}', space=sflag, size = 0x8, scoped, tag = 'scoped memory for lenet_forward.1']
    #allocation4 [shape = 's32[2]{0}', space=sflag, size = 0x8, scoped, tag = 'scoped memory for lenet_forward.1']
    #allocation5 [shape = 'u8[655360]{0}', space=vmem, size = 0xa0000, scoped, tag = 'input window, operand 5, single buffered']
    #allocation6 [shape = 's32[1]{0}', space=sflag, size = 0x4, scoped, tag = 'scoped memory for lenet_forward.1']
    #allocation7 [shape = 'u8[65536]{0}', space=vmem, size = 0x10000, scoped, tag = 'input window, operand 9, single buffered']
    #allocation8 [shape = 'u8[65536]{0}', space=vmem, size = 0x10000, scoped, tag = 'input window, operand 11, single buffered']
    #allocation9 [shape = 's32[1]{0}', space=sflag, size = 0x4, scoped, tag = 'scoped memory for lenet_forward.1']
    #allocation10 [shape = 'u8[1024]{0}', space=vmem, size = 0x400, scoped, tag = 'output window, operand 0']
    %18 = vsyncpa [#allocation3], 0
    %19 = vsyncpa [#allocation6], 0
    %20 = vsyncpa [#allocation9], 0
    %21 = vsyncpa [#allocation4], 0
    %s22 = scalar_lea.sflag [#allocation4], 1
    %23 = vsyncpa %s22, 0
    loop: start=0, step=1, limit=4
    $region2: #{lenet_forward.1} parent=1 // loop_pre_header
      _
    $region3: #{lenet_forward.1} parent=1 // loop_header
      %s25 = sphi 0, %s29
      %p26 = scmp.ge.s32.totalorder %s25, 4
      %s35 = sphi 0, %s37
      %s38 = sphi 0, %s35
      %s39 = sphi 0, %s38
      %s55 = sphi 0, %s39
      %s59 = sphi 0, %s59
      %s61 = sphi 0, %s59
      %s62 = sphi 0, %s61
      %s76 = sphi 0, %s62
      %s80 = sphi 0, %s80
      %s82 = sphi 0, %s80
      %s83 = sphi 0, %s82
      %s97 = sphi 0, %s83
      %s101 = sphi 0, %s101
      %s103 = sphi 0, %s101
      %s104 = sphi 0, %s103
      %s118 = sphi 0, %s104
      %s122 = sphi 0, %s122
      %s124 = sphi 0, %s122
      %s125 = sphi 0, %s124
      %s139 = sphi 0, %s125
      %s143 = sphi 0, %s143
      %s145 = sphi 0, %s143
      %s146 = sphi 0, %s145
      %s160 = sphi 0, %s146
      %s164 = sphi 0, %s164
      %s166 = sphi 0, %s164
      %s167 = sphi 0, %s166
      %s181 = sphi 0, %s167
      %s185 = sphi 0, %s185
      %s187 = sphi 0, %s185
      %s188 = sphi 0, %s187
      %s202 = sphi 0, %s188
      %s206 = sphi 0, %s206
      %s208 = sphi 0, %s206
      %s209 = sphi 0, %s208
      %s223 = sphi 0, %s209
      %s227 = sphi 0, %s227
      %s229 = sphi 0, %s227
      %s230 = sphi 0, %s229
      %s244 = sphi 0, %s230
      %s248 = sphi 0, %s248
      %s250 = sphi 0, %s248
      %s251 = sphi 0, %s250
      %s265 = sphi 0, %s251
      %s269 = sphi 0, %s269
      %s271 = sphi 0, %s269
      %s272 = sphi 0, %s271
      %s286 = sphi 0, %s272
      %s290 = sphi 0, %s290
      %s292 = sphi 0, %s290
      %s293 = sphi 0, %s292
      %s307 = sphi 0, %s293
      %s313 = sphi 0, %s315
      %s316 = sphi 0, %s313
      %s317 = sphi 0, %s316
      %s333 = sphi 0, %s317
    $region4: #{lenet_forward.1} parent=1 // loop_header_branch
      %28 = sbr.rel (%p26) target = $region8
    $region5: #{lenet_forward.1} parent=1 // loop_body
      %s30 = ssub.s32 %s25, 1
      %s31 = ssub.s32 %s25, 2
      %s32 = sadd.s32 %s25, 1
      %s33 = ssub.s32 %s25, %s32
      %p34 = scmp.eq.s32.totalorder %s33, 0
      %s36 = sadd.s32 %s35, 1
      %s37 = scalar_select %p34, %s35, %s36
      %p40 = pneg %p34
      %p41 = scmp.eq.s32.totalorder %s25, 1
      %p42 = por %p40, %p41
      %p43 = scmp.ne.s32.totalorder %s35, %s38
      %p44 = scmp.eq.s32.totalorder %s25, 0
      %p45 = por %p43, %p44
      %p46 = scmp.ne.s32.totalorder %s35, %s38
      %p47 = scmp.eq.s32.totalorder %s30, 1
      %p48 = por %p46, %p47
      %p49 = scmp.ne.s32.totalorder %s38, %s39
      %p50 = scmp.eq.s32.totalorder %s30, 0
      %p51 = por %p49, %p50
      %p52 = scmp.ne.s32.totalorder %s38, %s39
      %p53 = scmp.eq.s32.totalorder %s31, 1
      %p54 = por %p52, %p53
      %p56 = scmp.ne.s32.totalorder %s39, %s55
      %p57 = scmp.eq.s32.totalorder %s31, 0
      %p58 = por %p56, %p57
      %s60 = sadd.s32 %s59, 1
      %p63 = scmp.eq.s32.totalorder %s25, 1
      %p64 = scmp.ne.s32.totalorder %s59, %s61
      %p65 = scmp.eq.s32.totalorder %s25, 0
      %p66 = por %p64, %p65
      %p67 = scmp.ne.s32.totalorder %s59, %s61
      %p68 = scmp.eq.s32.totalorder %s30, 1
      %p69 = por %p67, %p68
      %p70 = scmp.ne.s32.totalorder %s61, %s62
      %p71 = scmp.eq.s32.totalorder %s30, 0
      %p72 = por %p70, %p71
      %p73 = scmp.ne.s32.totalorder %s61, %s62
      %p74 = scmp.eq.s32.totalorder %s31, 1
      %p75 = por %p73, %p74
      %p77 = scmp.ne.s32.totalorder %s62, %s76
      %p78 = scmp.eq.s32.totalorder %s31, 0
      %p79 = por %p77, %p78
      %s81 = sadd.s32 %s80, 1
      %p84 = scmp.eq.s32.totalorder %s25, 1
      %p85 = scmp.ne.s32.totalorder %s80, %s82
      %p86 = scmp.eq.s32.totalorder %s25, 0
      %p87 = por %p85, %p86
      %p88 = scmp.ne.s32.totalorder %s80, %s82
      %p89 = scmp.eq.s32.totalorder %s30, 1
      %p90 = por %p88, %p89
      %p91 = scmp.ne.s32.totalorder %s82, %s83
      %p92 = scmp.eq.s32.totalorder %s30, 0
      %p93 = por %p91, %p92
      %p94 = scmp.ne.s32.totalorder %s82, %s83
      %p95 = scmp.eq.s32.totalorder %s31, 1
      %p96 = por %p94, %p95
      %p98 = scmp.ne.s32.totalorder %s83, %s97
      %p99 = scmp.eq.s32.totalorder %s31, 0
      %p100 = por %p98, %p99
      %s102 = sadd.s32 %s101, 1
      %p105 = scmp.eq.s32.totalorder %s25, 1
      %p106 = scmp.ne.s32.totalorder %s101, %s103
      %p107 = scmp.eq.s32.totalorder %s25, 0
      %p108 = por %p106, %p107
      %p109 = scmp.ne.s32.totalorder %s101, %s103
      %p110 = scmp.eq.s32.totalorder %s30, 1
      %p111 = por %p109, %p110
      %p112 = scmp.ne.s32.totalorder %s103, %s104
      %p113 = scmp.eq.s32.totalorder %s30, 0
      %p114 = por %p112, %p113
      %p115 = scmp.ne.s32.totalorder %s103, %s104
      %p116 = scmp.eq.s32.totalorder %s31, 1
      %p117 = por %p115, %p116
      %p119 = scmp.ne.s32.totalorder %s104, %s118
      %p120 = scmp.eq.s32.totalorder %s31, 0
      %p121 = por %p119, %p120
      %s123 = sadd.s32 %s122, 1
      %p126 = scmp.eq.s32.totalorder %s25, 1
      %p127 = scmp.ne.s32.totalorder %s122, %s124
      %p128 = scmp.eq.s32.totalorder %s25, 0
      %p129 = por %p127, %p128
      %p130 = scmp.ne.s32.totalorder %s122, %s124
      %p131 = scmp.eq.s32.totalorder %s30, 1
      %p132 = por %p130, %p131
      %p133 = scmp.ne.s32.totalorder %s124, %s125
      %p134 = scmp.eq.s32.totalorder %s30, 0
      %p135 = por %p133, %p134
      %p136 = scmp.ne.s32.totalorder %s124, %s125
      %p137 = scmp.eq.s32.totalorder %s31, 1
      %p138 = por %p136, %p137
      %p140 = scmp.ne.s32.totalorder %s125, %s139
      %p141 = scmp.eq.s32.totalorder %s31, 0
      %p142 = por %p140, %p141
      %s144 = sadd.s32 %s143, 1
      %p147 = scmp.eq.s32.totalorder %s25, 1
      %p148 = scmp.ne.s32.totalorder %s143, %s145
      %p149 = scmp.eq.s32.totalorder %s25, 0
      %p150 = por %p148, %p149
      %p151 = scmp.ne.s32.totalorder %s143, %s145
      %p152 = scmp.eq.s32.totalorder %s30, 1
      %p153 = por %p151, %p152
      %p154 = scmp.ne.s32.totalorder %s145, %s146
      %p155 = scmp.eq.s32.totalorder %s30, 0
      %p156 = por %p154, %p155
      %p157 = scmp.ne.s32.totalorder %s145, %s146
      %p158 = scmp.eq.s32.totalorder %s31, 1
      %p159 = por %p157, %p158
      %p161 = scmp.ne.s32.totalorder %s146, %s160
      %p162 = scmp.eq.s32.totalorder %s31, 0
      %p163 = por %p161, %p162
      %s165 = sadd.s32 %s164, 1
      %p168 = scmp.eq.s32.totalorder %s25, 1
      %p169 = scmp.ne.s32.totalorder %s164, %s166
      %p170 = scmp.eq.s32.totalorder %s25, 0
      %p171 = por %p169, %p170
      %p172 = scmp.ne.s32.totalorder %s164, %s166
      %p173 = scmp.eq.s32.totalorder %s30, 1
      %p174 = por %p172, %p173
      %p175 = scmp.ne.s32.totalorder %s166, %s167
      %p176 = scmp.eq.s32.totalorder %s30, 0
      %p177 = por %p175, %p176
      %p178 = scmp.ne.s32.totalorder %s166, %s167
      %p179 = scmp.eq.s32.totalorder %s31, 1
      %p180 = por %p178, %p179
      %p182 = scmp.ne.s32.totalorder %s167, %s181
      %p183 = scmp.eq.s32.totalorder %s31, 0
      %p184 = por %p182, %p183
      %s186 = sadd.s32 %s185, 1
      %p189 = scmp.eq.s32.totalorder %s25, 1
      %p190 = scmp.ne.s32.totalorder %s185, %s187
      %p191 = scmp.eq.s32.totalorder %s25, 0
      %p192 = por %p190, %p191
      %p193 = scmp.ne.s32.totalorder %s185, %s187
      %p194 = scmp.eq.s32.totalorder %s30, 1
      %p195 = por %p193, %p194
      %p196 = scmp.ne.s32.totalorder %s187, %s188
      %p197 = scmp.eq.s32.totalorder %s30, 0
      %p198 = por %p196, %p197
      %p199 = scmp.ne.s32.totalorder %s187, %s188
      %p200 = scmp.eq.s32.totalorder %s31, 1
      %p201 = por %p199, %p200
      %p203 = scmp.ne.s32.totalorder %s188, %s202
      %p204 = scmp.eq.s32.totalorder %s31, 0
      %p205 = por %p203, %p204
      %s207 = sadd.s32 %s206, 1
      %p210 = scmp.eq.s32.totalorder %s25, 1
      %p211 = scmp.ne.s32.totalorder %s206, %s208
      %p212 = scmp.eq.s32.totalorder %s25, 0
      %p213 = por %p211, %p212
      %p214 = scmp.ne.s32.totalorder %s206, %s208
      %p215 = scmp.eq.s32.totalorder %s30, 1
      %p216 = por %p214, %p215
      %p217 = scmp.ne.s32.totalorder %s208, %s209
      %p218 = scmp.eq.s32.totalorder %s30, 0
      %p219 = por %p217, %p218
      %p220 = scmp.ne.s32.totalorder %s208, %s209
      %p221 = scmp.eq.s32.totalorder %s31, 1
      %p222 = por %p220, %p221
      %p224 = scmp.ne.s32.totalorder %s209, %s223
      %p225 = scmp.eq.s32.totalorder %s31, 0
      %p226 = por %p224, %p225
      %s228 = sadd.s32 %s227, 1
      %p231 = scmp.eq.s32.totalorder %s25, 1
      %p232 = scmp.ne.s32.totalorder %s227, %s229
      %p233 = scmp.eq.s32.totalorder %s25, 0
      %p234 = por %p232, %p233
      %p235 = scmp.ne.s32.totalorder %s227, %s229
      %p236 = scmp.eq.s32.totalorder %s30, 1
      %p237 = por %p235, %p236
      %p238 = scmp.ne.s32.totalorder %s229, %s230
      %p239 = scmp.eq.s32.totalorder %s30, 0
      %p240 = por %p238, %p239
      %p241 = scmp.ne.s32.totalorder %s229, %s230
      %p242 = scmp.eq.s32.totalorder %s31, 1
      %p243 = por %p241, %p242
      %p245 = scmp.ne.s32.totalorder %s230, %s244
      %p246 = scmp.eq.s32.totalorder %s31, 0
      %p247 = por %p245, %p246
      %s249 = sadd.s32 %s248, 1
      %p252 = scmp.eq.s32.totalorder %s25, 1
      %p253 = scmp.ne.s32.totalorder %s248, %s250
      %p254 = scmp.eq.s32.totalorder %s25, 0
      %p255 = por %p253, %p254
      %p256 = scmp.ne.s32.totalorder %s248, %s250
      %p257 = scmp.eq.s32.totalorder %s30, 1
      %p258 = por %p256, %p257
      %p259 = scmp.ne.s32.totalorder %s250, %s251
      %p260 = scmp.eq.s32.totalorder %s30, 0
      %p261 = por %p259, %p260
      %p262 = scmp.ne.s32.totalorder %s250, %s251
      %p263 = scmp.eq.s32.totalorder %s31, 1
      %p264 = por %p262, %p263
      %p266 = scmp.ne.s32.totalorder %s251, %s265
      %p267 = scmp.eq.s32.totalorder %s31, 0
      %p268 = por %p266, %p267
      %s270 = sadd.s32 %s269, 1
      %p273 = scmp.eq.s32.totalorder %s25, 1
      %p274 = scmp.ne.s32.totalorder %s269, %s271
      %p275 = scmp.eq.s32.totalorder %s25, 0
      %p276 = por %p274, %p275
      %p277 = scmp.ne.s32.totalorder %s269, %s271
      %p278 = scmp.eq.s32.totalorder %s30, 1
      %p279 = por %p277, %p278
      %p280 = scmp.ne.s32.totalorder %s271, %s272
      %p281 = scmp.eq.s32.totalorder %s30, 0
      %p282 = por %p280, %p281
      %p283 = scmp.ne.s32.totalorder %s271, %s272
      %p284 = scmp.eq.s32.totalorder %s31, 1
      %p285 = por %p283, %p284
      %p287 = scmp.ne.s32.totalorder %s272, %s286
      %p288 = scmp.eq.s32.totalorder %s31, 0
      %p289 = por %p287, %p288
      %s291 = sadd.s32 %s290, 1
      %p294 = scmp.eq.s32.totalorder %s25, 1
      %p295 = scmp.ne.s32.totalorder %s290, %s292
      %p296 = scmp.eq.s32.totalorder %s25, 0
      %p297 = por %p295, %p296
      %p298 = scmp.ne.s32.totalorder %s290, %s292
      %p299 = scmp.eq.s32.totalorder %s30, 1
      %p300 = por %p298, %p299
      %p301 = scmp.ne.s32.totalorder %s292, %s293
      %p302 = scmp.eq.s32.totalorder %s30, 0
      %p303 = por %p301, %p302
      %p304 = scmp.ne.s32.totalorder %s292, %s293
      %p305 = scmp.eq.s32.totalorder %s31, 1
      %p306 = por %p304, %p305
      %p308 = scmp.ne.s32.totalorder %s293, %s307
      %p309 = scmp.eq.s32.totalorder %s31, 0
      %p310 = por %p308, %p309
      %s311 = ssub.s32 %s25, %s32
      %p312 = scmp.eq.s32.totalorder %s311, 0
      %s314 = sadd.s32 %s313, 1
      %s315 = scalar_select %p312, %s313, %s314
      %p318 = pneg %p312
      %p319 = scmp.eq.s32.totalorder %s25, 1
      %p320 = por %p318, %p319
      %p321 = scmp.ne.s32.totalorder %s313, %s316
      %p322 = scmp.eq.s32.totalorder %s25, 0
      %p323 = por %p321, %p322
      %p324 = scmp.ne.s32.totalorder %s313, %s316
      %p325 = scmp.eq.s32.totalorder %s30, 1
      %p326 = por %p324, %p325
      %p327 = scmp.ne.s32.totalorder %s316, %s317
      %p328 = scmp.eq.s32.totalorder %s30, 0
      %p329 = por %p327, %p328
      %p330 = scmp.ne.s32.totalorder %s316, %s317
      %p331 = scmp.eq.s32.totalorder %s31, 1
      %p332 = por %p330, %p331
      %p334 = scmp.ne.s32.totalorder %s317, %s333
      %p335 = scmp.eq.s32.totalorder %s31, 0
      %p336 = por %p334, %p335
      %p337 = scmp.le.s32.totalorder 1, %s25
      %p338 = scmp.lt.s32.totalorder %s25, 3
      %p339 = pnand %p337, %p338
      %p340 = pneg %p339
      // Predicated region
      $region9: #{lenet_forward.1} parent=5 // pred_check
        _
      $region10: #{lenet_forward.1} parent=5 // pred_check_branch
        %342 = sbr.rel (%p339) target = $region12
      $region11: #{lenet_forward.1} parent=5 // pred_region
        %s343 = ssub.s32 %s25, 1
        // Predicated region
        $region13: #{lenet_forward.1} parent=11 // pred_check
          %p344 = pneg %p72
        $region14: #{lenet_forward.1} parent=11 // pred_check_branch
          %346 = sbr.rel (%p344) target = $region16
        $region15: #{lenet_forward.1} parent=11 // pred_region
          _
        $region16: #{lenet_forward.1} parent=11 // pred_fallthru
          _
        // Predicated region
        $region17: #{lenet_forward.1} parent=11 // pred_check
          %p347 = pneg %p93
        $region18: #{lenet_forward.1} parent=11 // pred_check_branch
          %349 = sbr.rel (%p347) target = $region20
        $region19: #{lenet_forward.1} parent=11 // pred_region
          %s351 = ssub.s32 5120, 5120
          %352 = vsyncadd [#allocation3], %s351
          %s353 = sshll.u32 [#allocation2], 4
          %s354 = int_to_ptr.vmem [resolvable:$true] %s353
          %359 = dma.hbm_to_vmem [thread:$0]  %s2, 5120, %s354, [#allocation3], 256, 256, 16
        $region20: #{lenet_forward.1} parent=11 // pred_fallthru
          _
        // Predicated region
        $region21: #{lenet_forward.1} parent=11 // pred_check
          %p360 = pneg %p114
        $region22: #{lenet_forward.1} parent=11 // pred_check_branch
          %362 = sbr.rel (%p360) target = $region24
        $region23: #{lenet_forward.1} parent=11 // pred_region
          _
        $region24: #{lenet_forward.1} parent=11 // pred_fallthru
          _
        // Predicated region
        $region25: #{lenet_forward.1} parent=11 // pred_check
          %p363 = pneg %p135
        $region26: #{lenet_forward.1} parent=11 // pred_check_branch
          %365 = sbr.rel (%p363) target = $region28
        $region27: #{lenet_forward.1} parent=11 // pred_region
          _
        $region28: #{lenet_forward.1} parent=11 // pred_fallthru
          _
        // Predicated region
        $region29: #{lenet_forward.1} parent=11 // pred_check
          %p366 = pneg %p156
        $region30: #{lenet_forward.1} parent=11 // pred_check_branch
          %368 = sbr.rel (%p366) target = $region32
        $region31: #{lenet_forward.1} parent=11 // pred_region
          %s370 = ssub.s32 20480, 20480
          %371 = vsyncadd [#allocation6], %s370
          %s372 = sshll.u32 [#allocation5], 4
          %s373 = int_to_ptr.vmem [resolvable:$true] %s372
          %378 = dma.hbm_to_vmem [thread:$0]  %s5, 20480, %s373, [#allocation6], 256, 256, 16
        $region32: #{lenet_forward.1} parent=11 // pred_fallthru
          _
        // Predicated region
        $region33: #{lenet_forward.1} parent=11 // pred_check
          %p379 = pneg %p177
        $region34: #{lenet_forward.1} parent=11 // pred_check_branch
          %381 = sbr.rel (%p379) target = $region36
        $region35: #{lenet_forward.1} parent=11 // pred_region
          _
        $region36: #{lenet_forward.1} parent=11 // pred_fallthru
          _
        // Predicated region
        $region37: #{lenet_forward.1} parent=11 // pred_check
          %p382 = pneg %p198
        $region38: #{lenet_forward.1} parent=11 // pred_check_branch
          %384 = sbr.rel (%p382) target = $region40
        $region39: #{lenet_forward.1} parent=11 // pred_region
          _
        $region40: #{lenet_forward.1} parent=11 // pred_fallthru
          _
        // Predicated region
        $region41: #{lenet_forward.1} parent=11 // pred_check
          %p385 = pneg %p219
        $region42: #{lenet_forward.1} parent=11 // pred_check_branch
          %387 = sbr.rel (%p385) target = $region44
        $region43: #{lenet_forward.1} parent=11 // pred_region
          _
        $region44: #{lenet_forward.1} parent=11 // pred_fallthru
          _
        // Predicated region
        $region45: #{lenet_forward.1} parent=11 // pred_check
          %p388 = pneg %p240
        $region46: #{lenet_forward.1} parent=11 // pred_check_branch
          %390 = sbr.rel (%p388) target = $region48
        $region47: #{lenet_forward.1} parent=11 // pred_region
          %s392 = ssub.s32 2048, 2048
          %393 = vsyncadd [#allocation6], %s392
          %s394 = sshll.u32 [#allocation7], 4
          %s395 = int_to_ptr.vmem [resolvable:$true] %s394
          %400 = dma.hbm_to_vmem [thread:$0]  %s9, 2048, %s395, [#allocation6], 128, 128, 8
        $region48: #{lenet_forward.1} parent=11 // pred_fallthru
          _
        // Predicated region
        $region49: #{lenet_forward.1} parent=11 // pred_check
          %p401 = pneg %p261
        $region50: #{lenet_forward.1} parent=11 // pred_check_branch
          %403 = sbr.rel (%p401) target = $region52
        $region51: #{lenet_forward.1} parent=11 // pred_region
          _
        $region52: #{lenet_forward.1} parent=11 // pred_fallthru
          _
        // Predicated region
        $region53: #{lenet_forward.1} parent=11 // pred_check
          %p404 = pneg %p282
        $region54: #{lenet_forward.1} parent=11 // pred_check_branch
          %406 = sbr.rel (%p404) target = $region56
        $region55: #{lenet_forward.1} parent=11 // pred_region
          %s408 = ssub.s32 2048, 2048
          %409 = vsyncadd [#allocation9], %s408
          %s410 = sshll.u32 [#allocation8], 4
          %s411 = int_to_ptr.vmem [resolvable:$true] %s410
          %416 = dma.hbm_to_vmem [thread:$0]  %s11, 2048, %s411, [#allocation9], 128, 128, 8
        $region56: #{lenet_forward.1} parent=11 // pred_fallthru
          _
        // Predicated region
        $region57: #{lenet_forward.1} parent=11 // pred_check
          %p417 = pneg %p303
        $region58: #{lenet_forward.1} parent=11 // pred_check_branch
          %419 = sbr.rel (%p417) target = $region60
        $region59: #{lenet_forward.1} parent=11 // pred_region
          _
        $region60: #{lenet_forward.1} parent=11 // pred_fallthru
          _
      $region12: #{lenet_forward.1} parent=5 // pred_fallthru
        _
      %p420 = scmp.lt.s32.totalorder %s25, 2
      // Predicated region
      $region61: #{lenet_forward.1} parent=5 // pred_check
        %p421 = pneg %p420
      $region62: #{lenet_forward.1} parent=5 // pred_check_branch
        %423 = sbr.rel (%p421) target = $region64
      $region63: #{lenet_forward.1} parent=5 // pred_region
        // Predicated region
        $region65: #{lenet_forward.1} parent=63 // pred_check
          %p424 = pneg %p45
        $region66: #{lenet_forward.1} parent=63 // pred_check_branch
          %426 = sbr.rel (%p424) target = $region68
        $region67: #{lenet_forward.1} parent=63 // pred_region
          %p427 = scmp.lt.s32.totalorder %s25, 1
          %s428 = scalar_select %p427, %s25, 1
          %s429 = smul.addr %s428, 4
          %s430 = smul.addr %s429, 8
          %s431 = scalar_lea.vmem %s0, %s430
        $region68: #{lenet_forward.1} parent=63 // pred_fallthru
          _
      $region64: #{lenet_forward.1} parent=5 // pred_fallthru
        _
      %p432 = scmp.le.s32.totalorder 1, %s25
      %p433 = scmp.lt.s32.totalorder %s25, 3
      %p434 = pnand %p432, %p433
      %p435 = pneg %p434
      // Predicated region
      $region69: #{lenet_forward.1} parent=5 // pred_check
        _
      $region70: #{lenet_forward.1} parent=5 // pred_check_branch
        %437 = sbr.rel (%p434) target = $region72
      $region71: #{lenet_forward.1} parent=5 // pred_region
        %s438 = ssub.s32 %s25, 1
        // Predicated region
        $region73: #{lenet_forward.1} parent=71 // pred_check
          %p439 = pneg %p93
        $region74: #{lenet_forward.1} parent=71 // pred_check_branch
          %441 = sbr.rel (%p439) target = $region76
        $region75: #{lenet_forward.1} parent=71 // pred_region
          %442 = dma.done [#allocation3], 5120
        $region76: #{lenet_forward.1} parent=71 // pred_fallthru
          _
        // Predicated region
        $region77: #{lenet_forward.1} parent=71 // pred_check
          %p443 = pneg %p156
        $region78: #{lenet_forward.1} parent=71 // pred_check_branch
          %445 = sbr.rel (%p443) target = $region80
        $region79: #{lenet_forward.1} parent=71 // pred_region
          %446 = dma.done [#allocation6], 20480
        $region80: #{lenet_forward.1} parent=71 // pred_fallthru
          _
        // Predicated region
        $region81: #{lenet_forward.1} parent=71 // pred_check
          %p447 = pneg %p240
        $region82: #{lenet_forward.1} parent=71 // pred_check_branch
          %449 = sbr.rel (%p447) target = $region84
        $region83: #{lenet_forward.1} parent=71 // pred_region
          %450 = dma.done [#allocation6], 2048
        $region84: #{lenet_forward.1} parent=71 // pred_fallthru
          _
        // Predicated region
        $region85: #{lenet_forward.1} parent=71 // pred_check
          %p451 = pneg %p282
        $region86: #{lenet_forward.1} parent=71 // pred_check_branch
          %453 = sbr.rel (%p451) target = $region88
        $region87: #{lenet_forward.1} parent=71 // pred_region
          %454 = dma.done [#allocation9], 2048
        $region88: #{lenet_forward.1} parent=71 // pred_fallthru
          _
        %p455 = scmp.lt.s32.totalorder %s30, 1
        %s456 = scalar_select %p455, %s30, 1
        %s457 = smul.addr %s456, 4
        %s458 = smul.addr %s457, 8
        %s459 = scalar_lea.vmem %s0, %s458
        %p460 = pneg %p51
        %p461 = pneg %p48
        %p462 = pneg %p72
        %p463 = pneg %p69
        %p464 = pneg %p93
        %p465 = pneg %p90
        %p466 = pneg %p114
        %p467 = pneg %p111
        %p468 = pneg %p135
        %p469 = pneg %p132
        %p470 = pneg %p156
        %p471 = pneg %p153
        %p472 = pneg %p177
        %p473 = pneg %p174
        %p474 = pneg %p198
        %p475 = pneg %p195
        %p476 = pneg %p219
        %p477 = pneg %p216
        %p478 = pneg %p240
        %p479 = pneg %p237
        %p480 = pneg %p261
        %p481 = pneg %p258
        %p482 = pneg %p282
        %p483 = pneg %p279
        %p484 = pneg %p303
        %p485 = pneg %p300
        %p486 = pneg %p329
        %p487 = pneg %p326
        %s488 = sand.u32 %s316, 1
        %s489 = scalar_lea.sflag [#allocation4], %s488
        %s490 = sand.u32 %s316, 1
        %s491 = scalar_lea.vmem [#allocation10], %s490
        %p492 = scmp.lt.s32.totalorder %s30, 1
        %s493 = scalar_select %p492, %s30, 1
        %s494 = smul.addr %s493, 4
        %s495 = smul.addr %s494, 8
        %s496 = scalar_lea.vmem %s0, %s495
        %v497 = vld [vmem:[%s496] sm:$0xff]
        %v498 = vld [vmem:[%s496 + $0x8] sm:$0xff]
        %v499 = vld [vmem:[%s496 + $0x10] sm:$0xff]
        %v500 = vld [vmem:[%s496 + $0x18] sm:$0xf]
        %v501 = vld [vmem:[%s1] sm:$0xff]
        %v502 = vld [vmem:[%s1 + $0x8] sm:$0xff]
        %v503 = vld [vmem:[%s1 + $0x10] sm:$0xff]
        %v504 = vld [vmem:[%s1 + $0x18] sm:$0xff]
        %v505 = vld [vmem:[%s1 + $0x20] sm:$0xff]
        %v506 = vld [vmem:[%s1 + $0x28] sm:$0xff]
        %v507 = vld [vmem:[%s1 + $0x30] sm:$0xff]
        %v508 = vld [vmem:[%s1 + $0x38] sm:$0xff]
        %v509 = vld [vmem:[%s1 + $0x40] sm:$0xff]
        %v510 = vld [vmem:[%s1 + $0x48] sm:$0xff]
        %v511 = vld [vmem:[%s1 + $0x50] sm:$0xff]
        %v512 = vld [vmem:[%s1 + $0x58] sm:$0xff]
        %v513 = vld [vmem:[%s1 + $0x60] sm:$0xff]
        %v514 = vld [vmem:[%s1 + $0x68] sm:$0xff]
        %v515 = vld [vmem:[%s1 + $0x70] sm:$0xff]
        %v516 = vld [vmem:[%s1 + $0x78] sm:$0xff]
        %v517 = vld [vmem:[%s1 + $0x80] sm:$0xff]
        %v518 = vld [vmem:[%s1 + $0x88] sm:$0xff]
        %v519 = vld [vmem:[%s1 + $0x90] sm:$0xff]
        %v520 = vld [vmem:[%s1 + $0x98] sm:$0xff]
        %vm521 = vcmask 228352
        %v523 = vsel %vm521, %v501, 0
        %v526 = vsel %vm521, %v502, 0
        %v529 = vsel %vm521, %v503, 0
        %v532 = vsel %vm521, %v504, 0
        %v535 = vsel %vm521, %v505, 0
        %v538 = vsel %vm521, %v506, 0
        %v541 = vsel %vm521, %v507, 0
        %v544 = vsel %vm521, %v508, 0
        %v547 = vsel %vm521, %v509, 0
        %v550 = vsel %vm521, %v510, 0
        %v553 = vsel %vm521, %v511, 0
        %v556 = vsel %vm521, %v512, 0
        %v559 = vsel %vm521, %v513, 0
        %v562 = vsel %vm521, %v514, 0
        %v565 = vsel %vm521, %v515, 0
        %v568 = vsel %vm521, %v516, 0
        %v571 = vsel %vm521, %v517, 0
        %v574 = vsel %vm521, %v518, 0
        %v577 = vsel %vm521, %v519, 0
        %v580 = vsel %vm521, %v520, 0
        %vm582 = vcmask 1043456
        %v584 = vsel %vm582, %v500, 0
        %586 = vmatprep.subr.mxu0 0.0
        %587 = vmatpush1.msra.mxu0 0.0
        %588 = vmatprep.subr.mxu0 0.0
        %589 = vmatpush1.msra.mxu0 0.0
        %590 = vmatprep.subr.mxu0 0.0
        %591 = vmatpush1.msra.mxu0 0.0
        %592 = vmatprep.subr.mxu0 0.0
        %593 = vmatpush1.msra.mxu0 0.0
        %594 = vmatprep.subr.mxu0 0.0
        %595 = vmatpush1.msra.mxu0 0.0
        %596 = vmatprep.subr.mxu0 0.0
        %597 = vmatpush1.msra.mxu0 0.0
        %598 = vmatprep.subr.mxu0 0.0
        %599 = vmatpush1.msra.mxu0 0.0
        %600 = vmatprep.subr.mxu0 0.0
        %601 = vmatpush1.msra.mxu0 0.0
        %602 = vmatprep.subr.mxu0 0.0
        %603 = vmatpush1.msra.mxu0 0.0
        %604 = vmatprep.subr.mxu0 0.0
        %605 = vmatpush1.msra.mxu0 0.0
        %606 = vmatprep.subr.mxu0 0.0
        %607 = vmatpush1.msra.mxu0 0.0
        %608 = vmatprep.subr.mxu0 0.0
        %609 = vmatpush1.msra.mxu0 0.0
        %610 = vmatprep.subr.mxu0 0.0
        %611 = vmatpush1.msra.mxu0 %v584
        %612 = vmatprep.subr.mxu0 0.0
        %613 = vmatpush1.msra.mxu0 %v499
        %614 = vmatprep.subr.mxu0 0.0
        %615 = vmatpush1.msra.mxu0 %v498
        %616 = vmatprep.subr.mxu0 0.0
        %617 = vmatpush1.msra.mxu0 %v497
        %618 = vmatprep.subr.mxu0 0.0
        %619 = vmatpush2.msra.mxu0 0.0
        %620 = vmatprep.subr.mxu0 0.0
        %621 = vmatpush2.msra.mxu0 0.0
        %622 = vmatprep.subr.mxu0 0.0
        %623 = vmatpush2.msra.mxu0 0.0
        %624 = vmatprep.subr.mxu0 0.0
        %625 = vmatpush2.msra.mxu0 0.0
        %626 = vmatprep.subr.mxu0 0.0
        %627 = vmatpush2.msra.mxu0 0.0
        %628 = vmatprep.subr.mxu0 0.0
        %629 = vmatpush2.msra.mxu0 0.0
        %630 = vmatprep.subr.mxu0 0.0
        %631 = vmatpush2.msra.mxu0 0.0
        %632 = vmatprep.subr.mxu0 0.0
        %633 = vmatpush2.msra.mxu0 0.0
        %634 = vmatprep.subr.mxu0 0.0
        %635 = vmatpush2.msra.mxu0 0.0
        %636 = vmatprep.subr.mxu0 0.0
        %637 = vmatpush2.msra.mxu0 0.0
        %638 = vmatprep.subr.mxu0 0.0
        %639 = vmatpush2.msra.mxu0 0.0
        %640 = vmatprep.subr.mxu0 0.0
        %641 = vmatpush2.msra.mxu0 0.0
        %642 = vmatprep.subr.mxu0 0.0
        %643 = vmatpush2.msra.mxu0 0.0
        %644 = vmatprep.subr.mxu0 0.0
        %645 = vmatpush2.msra.mxu0 0.0
        %646 = vmatprep.subr.mxu0 0.0
        %647 = vmatpush2.msra.mxu0 0.0
        %648 = vmatprep.subr.mxu0 0.0
        %649 = vmatpush2.msra.mxu0 0.0
        %650 = vmatprep.mubr.f32.mxu0 0.0
        %651 = vmatmul.mubr.f32.gmra.mxu0 %v523
        %v652 = vpop.f32.mrf.mxu0
        %v653 = vadd.f32 0.0, %v652
        %v654 = vpop.f32.mrf.mxu0
        %655 = vmatprep.mubr.f32.mxu0 0.0
        %656 = vmatmul.mubr.f32.gmra.mxu0 %v526
        %v657 = vpop.f32.mrf.mxu0
        %v658 = vadd.f32 0.0, %v657
        %v659 = vpop.f32.mrf.mxu0
        %660 = vmatprep.mubr.f32.mxu0 0.0
        %661 = vmatmul.mubr.f32.gmra.mxu0 %v529
        %v662 = vpop.f32.mrf.mxu0
        %v663 = vadd.f32 0.0, %v662
        %v664 = vpop.f32.mrf.mxu0
        %665 = vmatprep.mubr.f32.mxu0 0.0
        %666 = vmatmul.mubr.f32.gmra.mxu0 %v532
        %v667 = vpop.f32.mrf.mxu0
        %v668 = vadd.f32 0.0, %v667
        %v669 = vpop.f32.mrf.mxu0
        %670 = vmatprep.mubr.f32.mxu0 0.0
        %671 = vmatmul.mubr.f32.gmra.mxu0 %v535
        %v672 = vpop.f32.mrf.mxu0
        %v673 = vadd.f32 0.0, %v672
        %v674 = vpop.f32.mrf.mxu0
        %675 = vmatprep.mubr.f32.mxu0 0.0
        %676 = vmatmul.mubr.f32.gmra.mxu0 %v538
        %v677 = vpop.f32.mrf.mxu0
        %v678 = vadd.f32 0.0, %v677
        %v679 = vpop.f32.mrf.mxu0
        %680 = vmatprep.mubr.f32.mxu0 0.0
        %681 = vmatmul.mubr.f32.gmra.mxu0 %v541
        %v682 = vpop.f32.mrf.mxu0
        %v683 = vadd.f32 0.0, %v682
        %v684 = vpop.f32.mrf.mxu0
        %685 = vmatprep.mubr.f32.mxu0 0.0
        %686 = vmatmul.mubr.f32.gmra.mxu0 %v544
        %v687 = vpop.f32.mrf.mxu0
        %v688 = vadd.f32 0.0, %v687
        %v689 = vpop.f32.mrf.mxu0
        %690 = vmatprep.mubr.f32.mxu0 0.0
        %691 = vmatmul.mubr.f32.gmra.mxu0 %v547
        %v692 = vpop.f32.mrf.mxu0
        %v693 = vadd.f32 0.0, %v692
        %v694 = vpop.f32.mrf.mxu0
        %695 = vmatprep.mubr.f32.mxu0 0.0
        %696 = vmatmul.mubr.f32.gmra.mxu0 %v550
        %v697 = vpop.f32.mrf.mxu0
        %v698 = vadd.f32 0.0, %v697
        %v699 = vpop.f32.mrf.mxu0
        %700 = vmatprep.mubr.f32.mxu0 0.0
        %701 = vmatmul.mubr.f32.gmra.mxu0 %v553
        %v702 = vpop.f32.mrf.mxu0
        %v703 = vadd.f32 0.0, %v702
        %v704 = vpop.f32.mrf.mxu0
        %705 = vmatprep.mubr.f32.mxu0 0.0
        %706 = vmatmul.mubr.f32.gmra.mxu0 %v556
        %v707 = vpop.f32.mrf.mxu0
        %v708 = vadd.f32 0.0, %v707
        %v709 = vpop.f32.mrf.mxu0
        %710 = vmatprep.mubr.f32.mxu0 0.0
        %711 = vmatmul.mubr.f32.gmra.mxu0 %v559
        %v712 = vpop.f32.mrf.mxu0
        %v713 = vadd.f32 0.0, %v712
        %v714 = vpop.f32.mrf.mxu0
        %715 = vmatprep.mubr.f32.mxu0 0.0
        %716 = vmatmul.mubr.f32.gmra.mxu0 %v562
        %v717 = vpop.f32.mrf.mxu0
        %v718 = vadd.f32 0.0, %v717
        %v719 = vpop.f32.mrf.mxu0
        %720 = vmatprep.mubr.f32.mxu0 0.0
        %721 = vmatmul.mubr.f32.gmra.mxu0 %v565
        %v722 = vpop.f32.mrf.mxu0
        %v723 = vadd.f32 0.0, %v722
        %v724 = vpop.f32.mrf.mxu0
        %725 = vmatprep.mubr.f32.mxu0 0.0
        %726 = vmatmul.mubr.f32.gmra.mxu0 %v568
        %v727 = vpop.f32.mrf.mxu0
        %v728 = vadd.f32 0.0, %v727
        %v729 = vpop.f32.mrf.mxu0
        %730 = vmatprep.mubr.f32.mxu0 0.0
        %731 = vmatmul.mubr.f32.gmra.mxu0 %v571
        %v732 = vpop.f32.mrf.mxu0
        %v733 = vadd.f32 0.0, %v732
        %v734 = vpop.f32.mrf.mxu0
        %735 = vmatprep.mubr.f32.mxu0 0.0
        %736 = vmatmul.mubr.f32.gmra.mxu0 %v574
        %v737 = vpop.f32.mrf.mxu0
        %v738 = vadd.f32 0.0, %v737
        %v739 = vpop.f32.mrf.mxu0
        %740 = vmatprep.mubr.f32.mxu0 0.0
        %741 = vmatmul.mubr.f32.gmra.mxu0 %v577
        %v742 = vpop.f32.mrf.mxu0
        %v743 = vadd.f32 0.0, %v742
        %v744 = vpop.f32.mrf.mxu0
        %745 = vmatprep.mubr.f32.mxu0 0.0
        %746 = vmatmul.mubr.f32.gmra.mxu0 %v580
        %v747 = vpop.f32.mrf.mxu0
        %v748 = vadd.f32 0.0, %v747
        %v749 = vpop.f32.mrf.mxu0
        %750 = vdwg.mxu0
        %v751 = vld [vmem:[#allocation2] sm:$0xff]
        %v752 = vld [vmem:[#allocation2 + $0x8] sm:$0xff]
        %v753 = vld [vmem:[#allocation2 + $0x10] sm:$0xff]
        %v754 = vld [vmem:[#allocation2 + $0x18] sm:$0xff]
        %v755 = vld [vmem:[#allocation2 + $0x20] sm:$0xff]
        %v756 = vld [vmem:[#allocation2 + $0x28] sm:$0xff]
        %v757 = vld [vmem:[#allocation2 + $0x30] sm:$0xf]
        %v758 = vld [vmem:[#allocation2 + $0x38] sm:$0xf]
        %s759 = scalar_lea.vmem [#allocation2], 64
        %v760 = vld [vmem:[%s759] sm:$0xff]
        %v761 = vld [vmem:[%s759 + $0x8] sm:$0xff]
        %v762 = vld [vmem:[%s759 + $0x10] sm:$0xff]
        %v763 = vld [vmem:[%s759 + $0x18] sm:$0xff]
        %v764 = vld [vmem:[%s759 + $0x20] sm:$0xff]
        %v765 = vld [vmem:[%s759 + $0x28] sm:$0xff]
        %v766 = vld [vmem:[%s759 + $0x30] sm:$0xf]
        %v767 = vld [vmem:[%s759 + $0x38] sm:$0xf]
        %v769 = vsel %vm521, %v673, 0
        %v772 = vsel %vm521, %v678, 0
        %v775 = vsel %vm521, %v683, 0
        %v778 = vsel %vm521, %v688, 0
        %v781 = vsel %vm582, %v766, 0
        %v784 = vsel %vm582, %v767, 0
        %786 = vmatprep.subr.mxu0 0.0
        %787 = vmatpush1.msra.mxu0 0.0
        %788 = vmatprep.subr.mxu0 0.0
        %789 = vmatpush1.msra.mxu0 0.0
        %790 = vmatprep.subr.mxu0 0.0
        %791 = vmatpush1.msra.mxu0 0.0
        %792 = vmatprep.subr.mxu0 0.0
        %793 = vmatpush1.msra.mxu0 0.0
        %794 = vmatprep.subr.mxu0 0.0
        %795 = vmatpush1.msra.mxu0 0.0
        %796 = vmatprep.subr.mxu0 0.0
        %797 = vmatpush1.msra.mxu0 0.0
        %798 = vmatprep.subr.mxu0 0.0
        %799 = vmatpush1.msra.mxu0 0.0
        %800 = vmatprep.subr.mxu0 0.0
        %801 = vmatpush1.msra.mxu0 0.0
        %802 = vmatprep.subr.mxu0 0.0
        %803 = vmatpush1.msra.mxu0 0.0
        %804 = vmatprep.subr.mxu0 0.0
        %805 = vmatpush1.msra.mxu0 0.0
        %806 = vmatprep.subr.mxu0 0.0
        %807 = vmatpush1.msra.mxu0 0.0
        %808 = vmatprep.subr.mxu0 0.0
        %809 = vmatpush1.msra.mxu0 0.0
        %810 = vmatprep.subr.mxu0 %v784
        %811 = vmatpush1.msra.mxu0 %v781
        %812 = vmatprep.subr.mxu0 %v765
        %813 = vmatpush1.msra.mxu0 %v764
        %814 = vmatprep.subr.mxu0 %v763
        %815 = vmatpush1.msra.mxu0 %v762
        %816 = vmatprep.subr.mxu0 %v761
        %817 = vmatpush1.msra.mxu0 %v760
        %818 = vmatprep.subr.mxu0 0.0
        %819 = vmatpush2.msra.mxu0 0.0
        %820 = vmatprep.subr.mxu0 0.0
        %821 = vmatpush2.msra.mxu0 0.0
        %822 = vmatprep.subr.mxu0 0.0
        %823 = vmatpush2.msra.mxu0 0.0
        %824 = vmatprep.subr.mxu0 0.0
        %825 = vmatpush2.msra.mxu0 0.0
        %826 = vmatprep.subr.mxu0 0.0
        %827 = vmatpush2.msra.mxu0 0.0
        %828 = vmatprep.subr.mxu0 0.0
        %829 = vmatpush2.msra.mxu0 0.0
        %830 = vmatprep.subr.mxu0 0.0
        %831 = vmatpush2.msra.mxu0 0.0
        %832 = vmatprep.subr.mxu0 0.0
        %833 = vmatpush2.msra.mxu0 0.0
        %834 = vmatprep.subr.mxu0 0.0
        %835 = vmatpush2.msra.mxu0 0.0
        %836 = vmatprep.subr.mxu0 0.0
        %837 = vmatpush2.msra.mxu0 0.0
        %838 = vmatprep.subr.mxu0 0.0
        %839 = vmatpush2.msra.mxu0 0.0
        %840 = vmatprep.subr.mxu0 0.0
        %841 = vmatpush2.msra.mxu0 0.0
        %842 = vmatprep.subr.mxu0 0.0
        %843 = vmatpush2.msra.mxu0 0.0
        %844 = vmatprep.subr.mxu0 0.0
        %845 = vmatpush2.msra.mxu0 0.0
        %846 = vmatprep.subr.mxu0 0.0
        %847 = vmatpush2.msra.mxu0 0.0
        %848 = vmatprep.subr.mxu0 0.0
        %849 = vmatpush2.msra.mxu0 0.0
        %850 = vmatprep.mubr.f32.mxu0 0.0
        %851 = vmatmul.mubr.f32.gmra.mxu0 %v769
        %v852 = vpop.f32.mrf.mxu0
        %v853 = vadd.f32 0.0, %v852
        %v854 = vpop.f32.mrf.mxu0
        %v855 = vadd.f32 0.0, %v854
        %856 = vmatprep.mubr.f32.mxu0 0.0
        %857 = vmatmul.mubr.f32.gmra.mxu0 %v772
        %v858 = vpop.f32.mrf.mxu0
        %v859 = vadd.f32 0.0, %v858
        %v860 = vpop.f32.mrf.mxu0
        %v861 = vadd.f32 0.0, %v860
        %862 = vmatprep.mubr.f32.mxu0 0.0
        %863 = vmatmul.mubr.f32.gmra.mxu0 %v775
        %v864 = vpop.f32.mrf.mxu0
        %v865 = vadd.f32 0.0, %v864
        %v866 = vpop.f32.mrf.mxu0
        %v867 = vadd.f32 0.0, %v866
        %868 = vmatprep.mubr.f32.mxu0 0.0
        %869 = vmatmul.mubr.f32.gmra.mxu0 %v778
        %v870 = vpop.f32.mrf.mxu0
        %v871 = vadd.f32 0.0, %v870
        %v872 = vpop.f32.mrf.mxu0
        %v873 = vadd.f32 0.0, %v872
        %874 = vdwg.mxu0
        %s875 = scalar_lea.vmem [#allocation2], 128
        %v876 = vld [vmem:[%s875] sm:$0xff]
        %v877 = vld [vmem:[%s875 + $0x8] sm:$0xff]
        %v878 = vld [vmem:[%s875 + $0x10] sm:$0xff]
        %v879 = vld [vmem:[%s875 + $0x18] sm:$0xff]
        %v880 = vld [vmem:[%s875 + $0x20] sm:$0xff]
        %v881 = vld [vmem:[%s875 + $0x28] sm:$0xff]
        %v882 = vld [vmem:[%s875 + $0x30] sm:$0xf]
        %v883 = vld [vmem:[%s875 + $0x38] sm:$0xf]
        %s884 = scalar_lea.vmem [#allocation2], 192
        %v885 = vld [vmem:[%s884] sm:$0xff]
        %v886 = vld [vmem:[%s884 + $0x8] sm:$0xff]
        %v887 = vld [vmem:[%s884 + $0x10] sm:$0xff]
        %v888 = vld [vmem:[%s884 + $0x18] sm:$0xff]
        %v889 = vld [vmem:[%s884 + $0x20] sm:$0xff]
        %v890 = vld [vmem:[%s884 + $0x28] sm:$0xff]
        %v891 = vld [vmem:[%s884 + $0x30] sm:$0xf]
        %v892 = vld [vmem:[%s884 + $0x38] sm:$0xf]
        %v894 = vsel %vm521, %v713, 0
        %v897 = vsel %vm521, %v718, 0
        %v900 = vsel %vm521, %v723, 0
        %v903 = vsel %vm521, %v728, 0
        %v906 = vsel %vm582, %v891, 0
        %v909 = vsel %vm582, %v892, 0
        %911 = vmatprep.subr.mxu0 0.0
        %912 = vmatpush1.msra.mxu0 0.0
        %913 = vmatprep.subr.mxu0 0.0
        %914 = vmatpush1.msra.mxu0 0.0
        %915 = vmatprep.subr.mxu0 0.0
        %916 = vmatpush1.msra.mxu0 0.0
        %917 = vmatprep.subr.mxu0 0.0
        %918 = vmatpush1.msra.mxu0 0.0
        %919 = vmatprep.subr.mxu0 0.0
        %920 = vmatpush1.msra.mxu0 0.0
        %921 = vmatprep.subr.mxu0 0.0
        %922 = vmatpush1.msra.mxu0 0.0
        %923 = vmatprep.subr.mxu0 0.0
        %924 = vmatpush1.msra.mxu0 0.0
        %925 = vmatprep.subr.mxu0 0.0
        %926 = vmatpush1.msra.mxu0 0.0
        %927 = vmatprep.subr.mxu0 0.0
        %928 = vmatpush1.msra.mxu0 0.0
        %929 = vmatprep.subr.mxu0 0.0
        %930 = vmatpush1.msra.mxu0 0.0
        %931 = vmatprep.subr.mxu0 0.0
        %932 = vmatpush1.msra.mxu0 0.0
        %933 = vmatprep.subr.mxu0 0.0
        %934 = vmatpush1.msra.mxu0 0.0
        %935 = vmatprep.subr.mxu0 %v909
        %936 = vmatpush1.msra.mxu0 %v906
        %937 = vmatprep.subr.mxu0 %v890
        %938 = vmatpush1.msra.mxu0 %v889
        %939 = vmatprep.subr.mxu0 %v888
        %940 = vmatpush1.msra.mxu0 %v887
        %941 = vmatprep.subr.mxu0 %v886
        %942 = vmatpush1.msra.mxu0 %v885
        %943 = vmatprep.subr.mxu0 0.0
        %944 = vmatpush2.msra.mxu0 0.0
        %945 = vmatprep.subr.mxu0 0.0
        %946 = vmatpush2.msra.mxu0 0.0
        %947 = vmatprep.subr.mxu0 0.0
        %948 = vmatpush2.msra.mxu0 0.0
        %949 = vmatprep.subr.mxu0 0.0
        %950 = vmatpush2.msra.mxu0 0.0
        %951 = vmatprep.subr.mxu0 0.0
        %952 = vmatpush2.msra.mxu0 0.0
        %953 = vmatprep.subr.mxu0 0.0
        %954 = vmatpush2.msra.mxu0 0.0
        %955 = vmatprep.subr.mxu0 0.0
        %956 = vmatpush2.msra.mxu0 0.0
        %957 = vmatprep.subr.mxu0 0.0
        %958 = vmatpush2.msra.mxu0 0.0
        %959 = vmatprep.subr.mxu0 0.0
        %960 = vmatpush2.msra.mxu0 0.0
        %961 = vmatprep.subr.mxu0 0.0
        %962 = vmatpush2.msra.mxu0 0.0
        %963 = vmatprep.subr.mxu0 0.0
        %964 = vmatpush2.msra.mxu0 0.0
        %965 = vmatprep.subr.mxu0 0.0
        %966 = vmatpush2.msra.mxu0 0.0
        %967 = vmatprep.subr.mxu0 0.0
        %968 = vmatpush2.msra.mxu0 0.0
        %969 = vmatprep.subr.mxu0 0.0
        %970 = vmatpush2.msra.mxu0 0.0
        %971 = vmatprep.subr.mxu0 0.0
        %972 = vmatpush2.msra.mxu0 0.0
        %973 = vmatprep.subr.mxu0 0.0
        %974 = vmatpush2.msra.mxu0 0.0
        %975 = vmatprep.mubr.f32.mxu0 0.0
        %976 = vmatmul.mubr.f32.gmra.mxu0 %v894
        %v977 = vpop.f32.mrf.mxu0
        %v978 = vadd.f32 0.0, %v977
        %v979 = vpop.f32.mrf.mxu0
        %v980 = vadd.f32 0.0, %v979
        %981 = vmatprep.mubr.f32.mxu0 0.0
        %982 = vmatmul.mubr.f32.gmra.mxu0 %v897
        %v983 = vpop.f32.mrf.mxu0
        %v984 = vadd.f32 0.0, %v983
        %v985 = vpop.f32.mrf.mxu0
        %v986 = vadd.f32 0.0, %v985
        %987 = vmatprep.mubr.f32.mxu0 0.0
        %988 = vmatmul.mubr.f32.gmra.mxu0 %v900
        %v989 = vpop.f32.mrf.mxu0
        %v990 = vadd.f32 0.0, %v989
        %v991 = vpop.f32.mrf.mxu0
        %v992 = vadd.f32 0.0, %v991
        %993 = vmatprep.mubr.f32.mxu0 0.0
        %994 = vmatmul.mubr.f32.gmra.mxu0 %v903
        %v995 = vpop.f32.mrf.mxu0
        %v996 = vadd.f32 0.0, %v995
        %v997 = vpop.f32.mrf.mxu0
        %v998 = vadd.f32 0.0, %v997
        %999 = vdwg.mxu0
        %s1000 = scalar_lea.vmem [#allocation2], 256
        %v1001 = vld [vmem:[%s1000] sm:$0xff]
        %v1002 = vld [vmem:[%s1000 + $0x8] sm:$0xff]
        %v1003 = vld [vmem:[%s1000 + $0x10] sm:$0xff]
        %v1004 = vld [vmem:[%s1000 + $0x18] sm:$0xff]
        %v1005 = vld [vmem:[%s1000 + $0x20] sm:$0xff]
        %v1006 = vld [vmem:[%s1000 + $0x28] sm:$0xff]
        %v1007 = vld [vmem:[%s1000 + $0x30] sm:$0xf]
        %v1008 = vld [vmem:[%s1000 + $0x38] sm:$0xf]
        %v1010 = vsel %vm521, %v733, 0
        %v1013 = vsel %vm521, %v738, 0
        %v1016 = vsel %vm521, %v743, 0
        %v1019 = vsel %vm521, %v748, 0
        %v1022 = vsel %vm582, %v1007, 0
        %v1025 = vsel %vm582, %v1008, 0
        %1027 = vmatprep.subr.mxu0 0.0
        %1028 = vmatpush1.msra.mxu0 0.0
        %1029 = vmatprep.subr.mxu0 0.0
        %1030 = vmatpush1.msra.mxu0 0.0
        %1031 = vmatprep.subr.mxu0 0.0
        %1032 = vmatpush1.msra.mxu0 0.0
        %1033 = vmatprep.subr.mxu0 0.0
        %1034 = vmatpush1.msra.mxu0 0.0
        %1035 = vmatprep.subr.mxu0 0.0
        %1036 = vmatpush1.msra.mxu0 0.0
        %1037 = vmatprep.subr.mxu0 0.0
        %1038 = vmatpush1.msra.mxu0 0.0
        %1039 = vmatprep.subr.mxu0 0.0
        %1040 = vmatpush1.msra.mxu0 0.0
        %1041 = vmatprep.subr.mxu0 0.0
        %1042 = vmatpush1.msra.mxu0 0.0
        %1043 = vmatprep.subr.mxu0 0.0
        %1044 = vmatpush1.msra.mxu0 0.0
        %1045 = vmatprep.subr.mxu0 0.0
        %1046 = vmatpush1.msra.mxu0 0.0
        %1047 = vmatprep.subr.mxu0 0.0
        %1048 = vmatpush1.msra.mxu0 0.0
        %1049 = vmatprep.subr.mxu0 0.0
        %1050 = vmatpush1.msra.mxu0 0.0
        %1051 = vmatprep.subr.mxu0 %v1025
        %1052 = vmatpush1.msra.mxu0 %v1022
        %1053 = vmatprep.subr.mxu0 %v1006
        %1054 = vmatpush1.msra.mxu0 %v1005
        %1055 = vmatprep.subr.mxu0 %v1004
        %1056 = vmatpush1.msra.mxu0 %v1003
        %1057 = vmatprep.subr.mxu0 %v1002
        %1058 = vmatpush1.msra.mxu0 %v1001
        %1059 = vmatprep.subr.mxu0 0.0
        %1060 = vmatpush2.msra.mxu0 0.0
        %1061 = vmatprep.subr.mxu0 0.0
        %1062 = vmatpush2.msra.mxu0 0.0
        %1063 = vmatprep.subr.mxu0 0.0
        %1064 = vmatpush2.msra.mxu0 0.0
        %1065 = vmatprep.subr.mxu0 0.0
        %1066 = vmatpush2.msra.mxu0 0.0
        %1067 = vmatprep.subr.mxu0 0.0
        %1068 = vmatpush2.msra.mxu0 0.0
        %1069 = vmatprep.subr.mxu0 0.0
        %1070 = vmatpush2.msra.mxu0 0.0
        %1071 = vmatprep.subr.mxu0 0.0
        %1072 = vmatpush2.msra.mxu0 0.0
        %1073 = vmatprep.subr.mxu0 0.0
        %1074 = vmatpush2.msra.mxu0 0.0
        %1075 = vmatprep.subr.mxu0 0.0
        %1076 = vmatpush2.msra.mxu0 0.0
        %1077 = vmatprep.subr.mxu0 0.0
        %1078 = vmatpush2.msra.mxu0 0.0
        %1079 = vmatprep.subr.mxu0 0.0
        %1080 = vmatpush2.msra.mxu0 0.0
        %1081 = vmatprep.subr.mxu0 0.0
        %1082 = vmatpush2.msra.mxu0 0.0
        %1083 = vmatprep.subr.mxu0 0.0
        %1084 = vmatpush2.msra.mxu0 0.0
        %1085 = vmatprep.subr.mxu0 0.0
        %1086 = vmatpush2.msra.mxu0 0.0
        %1087 = vmatprep.subr.mxu0 0.0
        %1088 = vmatpush2.msra.mxu0 0.0
        %1089 = vmatprep.subr.mxu0 0.0
        %1090 = vmatpush2.msra.mxu0 0.0
        %1091 = vmatprep.mubr.f32.mxu0 0.0
        %1092 = vmatmul.mubr.f32.gmra.mxu0 %v1010
        %v1093 = vpop.f32.mrf.mxu0
        %v1094 = vadd.f32 0.0, %v1093
        %v1095 = vpop.f32.mrf.mxu0
        %v1096 = vadd.f32 0.0, %v1095
        %1097 = vmatprep.mubr.f32.mxu0 0.0
        %1098 = vmatmul.mubr.f32.gmra.mxu0 %v1013
        %v1099 = vpop.f32.mrf.mxu0
        %v1100 = vadd.f32 0.0, %v1099
        %v1101 = vpop.f32.mrf.mxu0
        %v1102 = vadd.f32 0.0, %v1101
        %1103 = vmatprep.mubr.f32.mxu0 0.0
        %1104 = vmatmul.mubr.f32.gmra.mxu0 %v1016
        %v1105 = vpop.f32.mrf.mxu0
        %v1106 = vadd.f32 0.0, %v1105
        %v1107 = vpop.f32.mrf.mxu0
        %v1108 = vadd.f32 0.0, %v1107
        %1109 = vmatprep.mubr.f32.mxu0 0.0
        %1110 = vmatmul.mubr.f32.gmra.mxu0 %v1019
        %v1111 = vpop.f32.mrf.mxu0
        %v1112 = vadd.f32 0.0, %v1111
        %v1113 = vpop.f32.mrf.mxu0
        %v1114 = vadd.f32 0.0, %v1113
        %1115 = vdwg.mxu0
        %v1117 = vsel %vm521, %v653, 0
        %v1120 = vsel %vm521, %v658, 0
        %v1123 = vsel %vm521, %v663, 0
        %v1126 = vsel %vm521, %v668, 0
        %v1129 = vsel %vm582, %v757, 0
        %v1132 = vsel %vm582, %v758, 0
        %1134 = vmatprep.subr.mxu0 0.0
        %1135 = vmatpush1.msra.mxu0 0.0
        %1136 = vmatprep.subr.mxu0 0.0
        %1137 = vmatpush1.msra.mxu0 0.0
        %1138 = vmatprep.subr.mxu0 0.0
        %1139 = vmatpush1.msra.mxu0 0.0
        %1140 = vmatprep.subr.mxu0 0.0
        %1141 = vmatpush1.msra.mxu0 0.0
        %1142 = vmatprep.subr.mxu0 0.0
        %1143 = vmatpush1.msra.mxu0 0.0
        %1144 = vmatprep.subr.mxu0 0.0
        %1145 = vmatpush1.msra.mxu0 0.0
        %1146 = vmatprep.subr.mxu0 0.0
        %1147 = vmatpush1.msra.mxu0 0.0
        %1148 = vmatprep.subr.mxu0 0.0
        %1149 = vmatpush1.msra.mxu0 0.0
        %1150 = vmatprep.subr.mxu0 0.0
        %1151 = vmatpush1.msra.mxu0 0.0
        %1152 = vmatprep.subr.mxu0 0.0
        %1153 = vmatpush1.msra.mxu0 0.0
        %1154 = vmatprep.subr.mxu0 0.0
        %1155 = vmatpush1.msra.mxu0 0.0
        %1156 = vmatprep.subr.mxu0 0.0
        %1157 = vmatpush1.msra.mxu0 0.0
        %1158 = vmatprep.subr.mxu0 %v1132
        %1159 = vmatpush1.msra.mxu0 %v1129
        %1160 = vmatprep.subr.mxu0 %v756
        %1161 = vmatpush1.msra.mxu0 %v755
        %1162 = vmatprep.subr.mxu0 %v754
        %1163 = vmatpush1.msra.mxu0 %v753
        %1164 = vmatprep.subr.mxu0 %v752
        %1165 = vmatpush1.msra.mxu0 %v751
        %1166 = vmatprep.subr.mxu0 0.0
        %1167 = vmatpush2.msra.mxu0 0.0
        %1168 = vmatprep.subr.mxu0 0.0
        %1169 = vmatpush2.msra.mxu0 0.0
        %1170 = vmatprep.subr.mxu0 0.0
        %1171 = vmatpush2.msra.mxu0 0.0
        %1172 = vmatprep.subr.mxu0 0.0
        %1173 = vmatpush2.msra.mxu0 0.0
        %1174 = vmatprep.subr.mxu0 0.0
        %1175 = vmatpush2.msra.mxu0 0.0
        %1176 = vmatprep.subr.mxu0 0.0
        %1177 = vmatpush2.msra.mxu0 0.0
        %1178 = vmatprep.subr.mxu0 0.0
        %1179 = vmatpush2.msra.mxu0 0.0
        %1180 = vmatprep.subr.mxu0 0.0
        %1181 = vmatpush2.msra.mxu0 0.0
        %1182 = vmatprep.subr.mxu0 0.0
        %1183 = vmatpush2.msra.mxu0 0.0
        %1184 = vmatprep.subr.mxu0 0.0
        %1185 = vmatpush2.msra.mxu0 0.0
        %1186 = vmatprep.subr.mxu0 0.0
        %1187 = vmatpush2.msra.mxu0 0.0
        %1188 = vmatprep.subr.mxu0 0.0
        %1189 = vmatpush2.msra.mxu0 0.0
        %1190 = vmatprep.subr.mxu0 0.0
        %1191 = vmatpush2.msra.mxu0 0.0
        %1192 = vmatprep.subr.mxu0 0.0
        %1193 = vmatpush2.msra.mxu0 0.0
        %1194 = vmatprep.subr.mxu0 0.0
        %1195 = vmatpush2.msra.mxu0 0.0
        %1196 = vmatprep.subr.mxu0 0.0
        %1197 = vmatpush2.msra.mxu0 0.0
        %1198 = vmatprep.mubr.f32.mxu0 0.0
        %1199 = vmatmul.mubr.f32.gmra.mxu0 %v1117
        %v1200 = vpop.f32.mrf.mxu0
        %v1201 = vadd.f32 %v853, %v1200
        %v1202 = vpop.f32.mrf.mxu0
        %v1203 = vadd.f32 %v855, %v1202
        %1204 = vmatprep.mubr.f32.mxu0 0.0
        %1205 = vmatmul.mubr.f32.gmra.mxu0 %v1120
        %v1206 = vpop.f32.mrf.mxu0
        %v1207 = vadd.f32 %v859, %v1206
        %v1208 = vpop.f32.mrf.mxu0
        %v1209 = vadd.f32 %v861, %v1208
        %1210 = vmatprep.mubr.f32.mxu0 0.0
        %1211 = vmatmul.mubr.f32.gmra.mxu0 %v1123
        %v1212 = vpop.f32.mrf.mxu0
        %v1213 = vadd.f32 %v865, %v1212
        %v1214 = vpop.f32.mrf.mxu0
        %v1215 = vadd.f32 %v867, %v1214
        %1216 = vmatprep.mubr.f32.mxu0 0.0
        %1217 = vmatmul.mubr.f32.gmra.mxu0 %v1126
        %v1218 = vpop.f32.mrf.mxu0
        %v1219 = vadd.f32 %v871, %v1218
        %v1220 = vpop.f32.mrf.mxu0
        %v1221 = vadd.f32 %v873, %v1220
        %1222 = vdwg.mxu0
        %v1224 = vsel %vm521, %v693, 0
        %v1227 = vsel %vm521, %v698, 0
        %v1230 = vsel %vm521, %v703, 0
        %v1233 = vsel %vm521, %v708, 0
        %v1236 = vsel %vm582, %v882, 0
        %v1239 = vsel %vm582, %v883, 0
        %1241 = vmatprep.subr.mxu0 0.0
        %1242 = vmatpush1.msra.mxu0 0.0
        %1243 = vmatprep.subr.mxu0 0.0
        %1244 = vmatpush1.msra.mxu0 0.0
        %1245 = vmatprep.subr.mxu0 0.0
        %1246 = vmatpush1.msra.mxu0 0.0
        %1247 = vmatprep.subr.mxu0 0.0
        %1248 = vmatpush1.msra.mxu0 0.0
        %1249 = vmatprep.subr.mxu0 0.0
        %1250 = vmatpush1.msra.mxu0 0.0
        %1251 = vmatprep.subr.mxu0 0.0
        %1252 = vmatpush1.msra.mxu0 0.0
        %1253 = vmatprep.subr.mxu0 0.0
        %1254 = vmatpush1.msra.mxu0 0.0
        %1255 = vmatprep.subr.mxu0 0.0
        %1256 = vmatpush1.msra.mxu0 0.0
        %1257 = vmatprep.subr.mxu0 0.0
        %1258 = vmatpush1.msra.mxu0 0.0
        %1259 = vmatprep.subr.mxu0 0.0
        %1260 = vmatpush1.msra.mxu0 0.0
        %1261 = vmatprep.subr.mxu0 0.0
        %1262 = vmatpush1.msra.mxu0 0.0
        %1263 = vmatprep.subr.mxu0 0.0
        %1264 = vmatpush1.msra.mxu0 0.0
        %1265 = vmatprep.subr.mxu0 %v1239
        %1266 = vmatpush1.msra.mxu0 %v1236
        %1267 = vmatprep.subr.mxu0 %v881
        %1268 = vmatpush1.msra.mxu0 %v880
        %1269 = vmatprep.subr.mxu0 %v879
        %1270 = vmatpush1.msra.mxu0 %v878
        %1271 = vmatprep.subr.mxu0 %v877
        %1272 = vmatpush1.msra.mxu0 %v876
        %1273 = vmatprep.subr.mxu0 0.0
        %1274 = vmatpush2.msra.mxu0 0.0
        %1275 = vmatprep.subr.mxu0 0.0
        %1276 = vmatpush2.msra.mxu0 0.0
        %1277 = vmatprep.subr.mxu0 0.0
        %1278 = vmatpush2.msra.mxu0 0.0
        %1279 = vmatprep.subr.mxu0 0.0
        %1280 = vmatpush2.msra.mxu0 0.0
        %1281 = vmatprep.subr.mxu0 0.0
        %1282 = vmatpush2.msra.mxu0 0.0
        %1283 = vmatprep.subr.mxu0 0.0
        %1284 = vmatpush2.msra.mxu0 0.0
        %1285 = vmatprep.subr.mxu0 0.0
        %1286 = vmatpush2.msra.mxu0 0.0
        %1287 = vmatprep.subr.mxu0 0.0
        %1288 = vmatpush2.msra.mxu0 0.0
        %1289 = vmatprep.subr.mxu0 0.0
        %1290 = vmatpush2.msra.mxu0 0.0
        %1291 = vmatprep.subr.mxu0 0.0
        %1292 = vmatpush2.msra.mxu0 0.0
        %1293 = vmatprep.subr.mxu0 0.0
        %1294 = vmatpush2.msra.mxu0 0.0
        %1295 = vmatprep.subr.mxu0 0.0
        %1296 = vmatpush2.msra.mxu0 0.0
        %1297 = vmatprep.subr.mxu0 0.0
        %1298 = vmatpush2.msra.mxu0 0.0
        %1299 = vmatprep.subr.mxu0 0.0
        %1300 = vmatpush2.msra.mxu0 0.0
        %1301 = vmatprep.subr.mxu0 0.0
        %1302 = vmatpush2.msra.mxu0 0.0
        %1303 = vmatprep.subr.mxu0 0.0
        %1304 = vmatpush2.msra.mxu0 0.0
        %1305 = vmatprep.mubr.f32.mxu0 0.0
        %1306 = vmatmul.mubr.f32.gmra.mxu0 %v1224
        %v1307 = vpop.f32.mrf.mxu0
        %v1308 = vadd.f32 %v978, %v1307
        %v1309 = vpop.f32.mrf.mxu0
        %v1310 = vadd.f32 %v980, %v1309
        %1311 = vmatprep.mubr.f32.mxu0 0.0
        %1312 = vmatmul.mubr.f32.gmra.mxu0 %v1227
        %v1313 = vpop.f32.mrf.mxu0
        %v1314 = vadd.f32 %v984, %v1313
        %v1315 = vpop.f32.mrf.mxu0
        %v1316 = vadd.f32 %v986, %v1315
        %1317 = vmatprep.mubr.f32.mxu0 0.0
        %1318 = vmatmul.mubr.f32.gmra.mxu0 %v1230
        %v1319 = vpop.f32.mrf.mxu0
        %v1320 = vadd.f32 %v990, %v1319
        %v1321 = vpop.f32.mrf.mxu0
        %v1322 = vadd.f32 %v992, %v1321
        %1323 = vmatprep.mubr.f32.mxu0 0.0
        %1324 = vmatmul.mubr.f32.gmra.mxu0 %v1233
        %v1325 = vpop.f32.mrf.mxu0
        %v1326 = vadd.f32 %v996, %v1325
        %v1327 = vpop.f32.mrf.mxu0
        %v1328 = vadd.f32 %v998, %v1327
        %1329 = vdwg.mxu0
        %v1330 = vadd.f32 %v1201, %v1308
        %v1331 = vadd.f32 %v1203, %v1310
        %v1332 = vadd.f32 %v1207, %v1314
        %v1333 = vadd.f32 %v1209, %v1316
        %v1334 = vadd.f32 %v1213, %v1320
        %v1335 = vadd.f32 %v1215, %v1322
        %v1336 = vadd.f32 %v1219, %v1326
        %v1337 = vadd.f32 %v1221, %v1328
        %v1338 = vadd.f32 %v1330, %v1094
        %v1339 = vadd.f32 %v1331, %v1096
        %v1340 = vadd.f32 %v1332, %v1100
        %v1341 = vadd.f32 %v1333, %v1102
        %v1342 = vadd.f32 %v1334, %v1106
        %v1343 = vadd.f32 %v1335, %v1108
        %v1344 = vadd.f32 %v1336, %v1112
        %v1345 = vadd.f32 %v1337, %v1114
        %v1346 = vmax.f32 %v1338, %v1339
        %v1347 = vmax.f32 %v1340, %v1341
        %v1348 = vmax.f32 %v1342, %v1343
        %v1349 = vmax.f32 %v1344, %v1345
        %v1350 = vmax.f32 %v1346, %v1348
        %v1351 = vmax.f32 %v1347, %v1349
        %v1352 = vld [vmem:[%s3] sm:$0x1]
        %v1354 = vlaneseq
        %v1355 = vshrl.u32 %v1354, 7
        %v1356 = vsub.s32 0, %v1355
        %v1357 = vrot.slane %v1352, %v1356
        %v1359 = vadd.f32 %v1350, %v1357
        %v1360 = vadd.f32 %v1351, %v1357
        %v1361 = vmax.f32 %v1359, 0.0
        %v1362 = vmax.f32 %v1360, 0.0
        %v1363 = vld [vmem:[%s4] sm:$0xff]
        %v1364 = vld [vmem:[%s4 + $0x8] sm:$0xff]
        %v1365 = vld [vmem:[%s4 + $0x10] sm:$0xff]
        %v1366 = vld [vmem:[%s4 + $0x18] sm:$0xff]
        %v1367 = vld [vmem:[%s4 + $0x20] sm:$0xff]
        %v1368 = vld [vmem:[%s4 + $0x28] sm:$0xff]
        %v1369 = vld [vmem:[%s4 + $0x30] sm:$0xff]
        %v1370 = vld [vmem:[%s4 + $0x38] sm:$0xff]
        %v1371 = vld [vmem:[%s4 + $0x40] sm:$0xff]
        %v1372 = vld [vmem:[%s4 + $0x48] sm:$0xff]
        %vm1373 = vcmask 97280
        %v1375 = vsel %vm1373, %v1363, 0
        %v1378 = vsel %vm1373, %v1364, 0
        %v1381 = vsel %vm1373, %v1365, 0
        %v1384 = vsel %vm1373, %v1366, 0
        %v1387 = vsel %vm1373, %v1367, 0
        %v1390 = vsel %vm1373, %v1368, 0
        %v1393 = vsel %vm1373, %v1369, 0
        %v1396 = vsel %vm1373, %v1370, 0
        %v1399 = vsel %vm1373, %v1371, 0
        %v1402 = vsel %vm1373, %v1372, 0
        %v1405 = vsel %vm582, %v1362, 0
        %1407 = vmatprep.subr.mxu0 0.0
        %1408 = vmatpush1.msra.mxu0 0.0
        %1409 = vmatprep.subr.mxu0 0.0
        %1410 = vmatpush1.msra.mxu0 0.0
        %1411 = vmatprep.subr.mxu0 0.0
        %1412 = vmatpush1.msra.mxu0 0.0
        %1413 = vmatprep.subr.mxu0 0.0
        %1414 = vmatpush1.msra.mxu0 0.0
        %1415 = vmatprep.subr.mxu0 0.0
        %1416 = vmatpush1.msra.mxu0 0.0
        %1417 = vmatprep.subr.mxu0 0.0
        %1418 = vmatpush1.msra.mxu0 0.0
        %1419 = vmatprep.subr.mxu0 0.0
        %1420 = vmatpush1.msra.mxu0 0.0
        %1421 = vmatprep.subr.mxu0 0.0
        %1422 = vmatpush1.msra.mxu0 0.0
        %1423 = vmatprep.subr.mxu0 0.0
        %1424 = vmatpush1.msra.mxu0 0.0
        %1425 = vmatprep.subr.mxu0 0.0
        %1426 = vmatpush1.msra.mxu0 0.0
        %1427 = vmatprep.subr.mxu0 0.0
        %1428 = vmatpush1.msra.mxu0 0.0
        %1429 = vmatprep.subr.mxu0 0.0
        %1430 = vmatpush1.msra.mxu0 0.0
        %1431 = vmatprep.subr.mxu0 0.0
        %1432 = vmatpush1.msra.mxu0 0.0
        %1433 = vmatprep.subr.mxu0 0.0
        %1434 = vmatpush1.msra.mxu0 0.0
        %1435 = vmatprep.subr.mxu0 0.0
        %1436 = vmatpush1.msra.mxu0 %v1405
        %1437 = vmatprep.subr.mxu0 0.0
        %1438 = vmatpush1.msra.mxu0 %v1361
        %1439 = vmatprep.subr.mxu0 0.0
        %1440 = vmatpush2.msra.mxu0 0.0
        %1441 = vmatprep.subr.mxu0 0.0
        %1442 = vmatpush2.msra.mxu0 0.0
        %1443 = vmatprep.subr.mxu0 0.0
        %1444 = vmatpush2.msra.mxu0 0.0
        %1445 = vmatprep.subr.mxu0 0.0
        %1446 = vmatpush2.msra.mxu0 0.0
        %1447 = vmatprep.subr.mxu0 0.0
        %1448 = vmatpush2.msra.mxu0 0.0
        %1449 = vmatprep.subr.mxu0 0.0
        %1450 = vmatpush2.msra.mxu0 0.0
        %1451 = vmatprep.subr.mxu0 0.0
        %1452 = vmatpush2.msra.mxu0 0.0
        %1453 = vmatprep.subr.mxu0 0.0
        %1454 = vmatpush2.msra.mxu0 0.0
        %1455 = vmatprep.subr.mxu0 0.0
        %1456 = vmatpush2.msra.mxu0 0.0
        %1457 = vmatprep.subr.mxu0 0.0
        %1458 = vmatpush2.msra.mxu0 0.0
        %1459 = vmatprep.subr.mxu0 0.0
        %1460 = vmatpush2.msra.mxu0 0.0
        %1461 = vmatprep.subr.mxu0 0.0
        %1462 = vmatpush2.msra.mxu0 0.0
        %1463 = vmatprep.subr.mxu0 0.0
        %1464 = vmatpush2.msra.mxu0 0.0
        %1465 = vmatprep.subr.mxu0 0.0
        %1466 = vmatpush2.msra.mxu0 0.0
        %1467 = vmatprep.subr.mxu0 0.0
        %1468 = vmatpush2.msra.mxu0 0.0
        %1469 = vmatprep.subr.mxu0 0.0
        %1470 = vmatpush2.msra.mxu0 0.0
        %1471 = vmatprep.mubr.f32.mxu0 0.0
        %1472 = vmatmul.mubr.f32.gmra.mxu0 %v1375
        %v1473 = vpop.f32.mrf.mxu0
        %v1474 = vadd.f32 0.0, %v1473
        %v1475 = vpop.f32.mrf.mxu0
        %1476 = vmatprep.mubr.f32.mxu0 0.0
        %1477 = vmatmul.mubr.f32.gmra.mxu0 %v1378
        %v1478 = vpop.f32.mrf.mxu0
        %v1479 = vadd.f32 0.0, %v1478
        %v1480 = vpop.f32.mrf.mxu0
        %1481 = vmatprep.mubr.f32.mxu0 0.0
        %1482 = vmatmul.mubr.f32.gmra.mxu0 %v1381
        %v1483 = vpop.f32.mrf.mxu0
        %v1484 = vadd.f32 0.0, %v1483
        %v1485 = vpop.f32.mrf.mxu0
        %1486 = vmatprep.mubr.f32.mxu0 0.0
        %1487 = vmatmul.mubr.f32.gmra.mxu0 %v1384
        %v1488 = vpop.f32.mrf.mxu0
        %v1489 = vadd.f32 0.0, %v1488
        %v1490 = vpop.f32.mrf.mxu0
        %1491 = vmatprep.mubr.f32.mxu0 0.0
        %1492 = vmatmul.mubr.f32.gmra.mxu0 %v1387
        %v1493 = vpop.f32.mrf.mxu0
        %v1494 = vadd.f32 0.0, %v1493
        %v1495 = vpop.f32.mrf.mxu0
        %1496 = vmatprep.mubr.f32.mxu0 0.0
        %1497 = vmatmul.mubr.f32.gmra.mxu0 %v1390
        %v1498 = vpop.f32.mrf.mxu0
        %v1499 = vadd.f32 0.0, %v1498
        %v1500 = vpop.f32.mrf.mxu0
        %1501 = vmatprep.mubr.f32.mxu0 0.0
        %1502 = vmatmul.mubr.f32.gmra.mxu0 %v1393
        %v1503 = vpop.f32.mrf.mxu0
        %v1504 = vadd.f32 0.0, %v1503
        %v1505 = vpop.f32.mrf.mxu0
        %1506 = vmatprep.mubr.f32.mxu0 0.0
        %1507 = vmatmul.mubr.f32.gmra.mxu0 %v1396
        %v1508 = vpop.f32.mrf.mxu0
        %v1509 = vadd.f32 0.0, %v1508
        %v1510 = vpop.f32.mrf.mxu0
        %1511 = vmatprep.mubr.f32.mxu0 0.0
        %1512 = vmatmul.mubr.f32.gmra.mxu0 %v1399
        %v1513 = vpop.f32.mrf.mxu0
        %v1514 = vadd.f32 0.0, %v1513
        %v1515 = vpop.f32.mrf.mxu0
        %1516 = vmatprep.mubr.f32.mxu0 0.0
        %1517 = vmatmul.mubr.f32.gmra.mxu0 %v1402
        %v1518 = vpop.f32.mrf.mxu0
        %v1519 = vadd.f32 0.0, %v1518
        %v1520 = vpop.f32.mrf.mxu0
        %1521 = vdwg.mxu0
        %v1522 = vld [vmem:[#allocation5] sm:$0xff]
        %v1523 = vld [vmem:[#allocation5 + $0x8] sm:$0xff]
        %v1524 = vld [vmem:[#allocation5 + $0x10] sm:$0xff]
        %v1525 = vld [vmem:[#allocation5 + $0x18] sm:$0xff]
        %v1526 = vld [vmem:[#allocation5 + $0x20] sm:$0xff]
        %v1527 = vld [vmem:[#allocation5 + $0x28] sm:$0xff]
        %v1528 = vld [vmem:[#allocation5 + $0x30] sm:$0xff]
        %v1529 = vld [vmem:[#allocation5 + $0x38] sm:$0xff]
        %v1530 = vld [vmem:[#allocation5 + $0x40] sm:$0xff]
        %v1531 = vld [vmem:[#allocation5 + $0x48] sm:$0xff]
        %v1532 = vld [vmem:[#allocation5 + $0x50] sm:$0xff]
        %v1533 = vld [vmem:[#allocation5 + $0x58] sm:$0xff]
        %v1534 = vld [vmem:[#allocation5 + $0x60] sm:$0xff]
        %v1535 = vld [vmem:[#allocation5 + $0x68] sm:$0xff]
        %v1536 = vld [vmem:[#allocation5 + $0x70] sm:$0xff]
        %v1537 = vld [vmem:[#allocation5 + $0x78] sm:$0xff]
        %v1538 = vld [vmem:[#allocation5 + $0x80] sm:$0xff]
        %v1539 = vld [vmem:[#allocation5 + $0x88] sm:$0xff]
        %v1540 = vld [vmem:[#allocation5 + $0x90] sm:$0xff]
        %v1541 = vld [vmem:[#allocation5 + $0x98] sm:$0xff]
        %v1542 = vld [vmem:[#allocation5 + $0xa0] sm:$0xff]
        %v1543 = vld [vmem:[#allocation5 + $0xa8] sm:$0xff]
        %v1544 = vld [vmem:[#allocation5 + $0xb0] sm:$0xff]
        %v1545 = vld [vmem:[#allocation5 + $0xb8] sm:$0xff]
        %v1546 = vld [vmem:[#allocation5 + $0xc0] sm:$0xff]
        %v1547 = vld [vmem:[#allocation5 + $0xc8] sm:$0xff]
        %v1548 = vld [vmem:[#allocation5 + $0xd0] sm:$0xff]
        %v1549 = vld [vmem:[#allocation5 + $0xd8] sm:$0xff]
        %v1550 = vld [vmem:[#allocation5 + $0xe0] sm:$0xff]
        %v1551 = vld [vmem:[#allocation5 + $0xe8] sm:$0xff]
        %v1552 = vld [vmem:[#allocation5 + $0xf0] sm:$0xff]
        %v1553 = vld [vmem:[#allocation5 + $0xf8] sm:$0xff]
        %s1554 = scalar_lea.vmem [#allocation5], 256
        %v1555 = vld [vmem:[%s1554] sm:$0xff]
        %v1556 = vld [vmem:[%s1554 + $0x8] sm:$0xff]
        %v1557 = vld [vmem:[%s1554 + $0x10] sm:$0xff]
        %v1558 = vld [vmem:[%s1554 + $0x18] sm:$0xff]
        %v1559 = vld [vmem:[%s1554 + $0x20] sm:$0xff]
        %v1560 = vld [vmem:[%s1554 + $0x28] sm:$0xff]
        %v1561 = vld [vmem:[%s1554 + $0x30] sm:$0xff]
        %v1562 = vld [vmem:[%s1554 + $0x38] sm:$0xff]
        %v1563 = vld [vmem:[%s1554 + $0x40] sm:$0xff]
        %v1564 = vld [vmem:[%s1554 + $0x48] sm:$0xff]
        %v1565 = vld [vmem:[%s1554 + $0x50] sm:$0xff]
        %v1566 = vld [vmem:[%s1554 + $0x58] sm:$0xff]
        %v1567 = vld [vmem:[%s1554 + $0x60] sm:$0xff]
        %v1568 = vld [vmem:[%s1554 + $0x68] sm:$0xff]
        %v1569 = vld [vmem:[%s1554 + $0x70] sm:$0xff]
        %v1570 = vld [vmem:[%s1554 + $0x78] sm:$0xff]
        %v1571 = vld [vmem:[%s1554 + $0x80] sm:$0xff]
        %v1572 = vld [vmem:[%s1554 + $0x88] sm:$0xff]
        %v1573 = vld [vmem:[%s1554 + $0x90] sm:$0xff]
        %v1574 = vld [vmem:[%s1554 + $0x98] sm:$0xff]
        %v1575 = vld [vmem:[%s1554 + $0xa0] sm:$0xff]
        %v1576 = vld [vmem:[%s1554 + $0xa8] sm:$0xff]
        %v1577 = vld [vmem:[%s1554 + $0xb0] sm:$0xff]
        %v1578 = vld [vmem:[%s1554 + $0xb8] sm:$0xff]
        %v1579 = vld [vmem:[%s1554 + $0xc0] sm:$0xff]
        %v1580 = vld [vmem:[%s1554 + $0xc8] sm:$0xff]
        %v1581 = vld [vmem:[%s1554 + $0xd0] sm:$0xff]
        %v1582 = vld [vmem:[%s1554 + $0xd8] sm:$0xff]
        %v1583 = vld [vmem:[%s1554 + $0xe0] sm:$0xff]
        %v1584 = vld [vmem:[%s1554 + $0xe8] sm:$0xff]
        %v1585 = vld [vmem:[%s1554 + $0xf0] sm:$0xff]
        %v1586 = vld [vmem:[%s1554 + $0xf8] sm:$0xff]
        %1587 = vmatprep.subr.mxu0 %v1586
        %1588 = vmatpush1.msra.mxu0 %v1585
        %1589 = vmatprep.subr.mxu0 %v1584
        %1590 = vmatpush1.msra.mxu0 %v1583
        %1591 = vmatprep.subr.mxu0 %v1582
        %1592 = vmatpush1.msra.mxu0 %v1581
        %1593 = vmatprep.subr.mxu0 %v1580
        %1594 = vmatpush1.msra.mxu0 %v1579
        %1595 = vmatprep.subr.mxu0 %v1578
        %1596 = vmatpush1.msra.mxu0 %v1577
        %1597 = vmatprep.subr.mxu0 %v1576
        %1598 = vmatpush1.msra.mxu0 %v1575
        %1599 = vmatprep.subr.mxu0 %v1574
        %1600 = vmatpush1.msra.mxu0 %v1573
        %1601 = vmatprep.subr.mxu0 %v1572
        %1602 = vmatpush1.msra.mxu0 %v1571
        %1603 = vmatprep.subr.mxu0 %v1570
        %1604 = vmatpush1.msra.mxu0 %v1569
        %1605 = vmatprep.subr.mxu0 %v1568
        %1606 = vmatpush1.msra.mxu0 %v1567
        %1607 = vmatprep.subr.mxu0 %v1566
        %1608 = vmatpush1.msra.mxu0 %v1565
        %1609 = vmatprep.subr.mxu0 %v1564
        %1610 = vmatpush1.msra.mxu0 %v1563
        %1611 = vmatprep.subr.mxu0 %v1562
        %1612 = vmatpush1.msra.mxu0 %v1561
        %1613 = vmatprep.subr.mxu0 %v1560
        %1614 = vmatpush1.msra.mxu0 %v1559
        %1615 = vmatprep.subr.mxu0 %v1558
        %1616 = vmatpush1.msra.mxu0 %v1557
        %1617 = vmatprep.subr.mxu0 %v1556
        %1618 = vmatpush1.msra.mxu0 %v1555
        %1619 = vmatprep.subr.mxu0 0.0
        %1620 = vmatpush2.msra.mxu0 0.0
        %1621 = vmatprep.subr.mxu0 0.0
        %1622 = vmatpush2.msra.mxu0 0.0
        %1623 = vmatprep.subr.mxu0 0.0
        %1624 = vmatpush2.msra.mxu0 0.0
        %1625 = vmatprep.subr.mxu0 0.0
        %1626 = vmatpush2.msra.mxu0 0.0
        %1627 = vmatprep.subr.mxu0 0.0
        %1628 = vmatpush2.msra.mxu0 0.0
        %1629 = vmatprep.subr.mxu0 0.0
        %1630 = vmatpush2.msra.mxu0 0.0
        %1631 = vmatprep.subr.mxu0 0.0
        %1632 = vmatpush2.msra.mxu0 0.0
        %1633 = vmatprep.subr.mxu0 0.0
        %1634 = vmatpush2.msra.mxu0 0.0
        %1635 = vmatprep.subr.mxu0 0.0
        %1636 = vmatpush2.msra.mxu0 0.0
        %1637 = vmatprep.subr.mxu0 0.0
        %1638 = vmatpush2.msra.mxu0 0.0
        %1639 = vmatprep.subr.mxu0 0.0
        %1640 = vmatpush2.msra.mxu0 0.0
        %1641 = vmatprep.subr.mxu0 0.0
        %1642 = vmatpush2.msra.mxu0 0.0
        %1643 = vmatprep.subr.mxu0 0.0
        %1644 = vmatpush2.msra.mxu0 0.0
        %1645 = vmatprep.subr.mxu0 0.0
        %1646 = vmatpush2.msra.mxu0 0.0
        %1647 = vmatprep.subr.mxu0 0.0
        %1648 = vmatpush2.msra.mxu0 0.0
        %1649 = vmatprep.subr.mxu0 0.0
        %1650 = vmatpush2.msra.mxu0 0.0
        %1651 = vmatprep.mubr.f32.mxu0 0.0
        %1652 = vmatmul.mubr.f32.gmra.mxu0 %v1484
        %v1653 = vpop.f32.mrf.mxu0
        %v1654 = vadd.f32 0.0, %v1653
        %v1655 = vpop.f32.mrf.mxu0
        %v1656 = vadd.f32 0.0, %v1655
        %1657 = vmatprep.mubr.f32.mxu0 0.0
        %1658 = vmatmul.mubr.f32.gmra.mxu0 %v1489
        %v1659 = vpop.f32.mrf.mxu0
        %v1660 = vadd.f32 0.0, %v1659
        %v1661 = vpop.f32.mrf.mxu0
        %v1662 = vadd.f32 0.0, %v1661
        %1663 = vdwg.mxu0
        %s1664 = scalar_lea.vmem [#allocation5], 512
        %v1665 = vld [vmem:[%s1664] sm:$0xff]
        %v1666 = vld [vmem:[%s1664 + $0x8] sm:$0xff]
        %v1667 = vld [vmem:[%s1664 + $0x10] sm:$0xff]
        %v1668 = vld [vmem:[%s1664 + $0x18] sm:$0xff]
        %v1669 = vld [vmem:[%s1664 + $0x20] sm:$0xff]
        %v1670 = vld [vmem:[%s1664 + $0x28] sm:$0xff]
        %v1671 = vld [vmem:[%s1664 + $0x30] sm:$0xff]
        %v1672 = vld [vmem:[%s1664 + $0x38] sm:$0xff]
        %v1673 = vld [vmem:[%s1664 + $0x40] sm:$0xff]
        %v1674 = vld [vmem:[%s1664 + $0x48] sm:$0xff]
        %v1675 = vld [vmem:[%s1664 + $0x50] sm:$0xff]
        %v1676 = vld [vmem:[%s1664 + $0x58] sm:$0xff]
        %v1677 = vld [vmem:[%s1664 + $0x60] sm:$0xff]
        %v1678 = vld [vmem:[%s1664 + $0x68] sm:$0xff]
        %v1679 = vld [vmem:[%s1664 + $0x70] sm:$0xff]
        %v1680 = vld [vmem:[%s1664 + $0x78] sm:$0xff]
        %v1681 = vld [vmem:[%s1664 + $0x80] sm:$0xff]
        %v1682 = vld [vmem:[%s1664 + $0x88] sm:$0xff]
        %v1683 = vld [vmem:[%s1664 + $0x90] sm:$0xff]
        %v1684 = vld [vmem:[%s1664 + $0x98] sm:$0xff]
        %v1685 = vld [vmem:[%s1664 + $0xa0] sm:$0xff]
        %v1686 = vld [vmem:[%s1664 + $0xa8] sm:$0xff]
        %v1687 = vld [vmem:[%s1664 + $0xb0] sm:$0xff]
        %v1688 = vld [vmem:[%s1664 + $0xb8] sm:$0xff]
        %v1689 = vld [vmem:[%s1664 + $0xc0] sm:$0xff]
        %v1690 = vld [vmem:[%s1664 + $0xc8] sm:$0xff]
        %v1691 = vld [vmem:[%s1664 + $0xd0] sm:$0xff]
        %v1692 = vld [vmem:[%s1664 + $0xd8] sm:$0xff]
        %v1693 = vld [vmem:[%s1664 + $0xe0] sm:$0xff]
        %v1694 = vld [vmem:[%s1664 + $0xe8] sm:$0xff]
        %v1695 = vld [vmem:[%s1664 + $0xf0] sm:$0xff]
        %v1696 = vld [vmem:[%s1664 + $0xf8] sm:$0xff]
        %s1697 = scalar_lea.vmem [#allocation5], 768
        %v1698 = vld [vmem:[%s1697] sm:$0xff]
        %v1699 = vld [vmem:[%s1697 + $0x8] sm:$0xff]
        %v1700 = vld [vmem:[%s1697 + $0x10] sm:$0xff]
        %v1701 = vld [vmem:[%s1697 + $0x18] sm:$0xff]
        %v1702 = vld [vmem:[%s1697 + $0x20] sm:$0xff]
        %v1703 = vld [vmem:[%s1697 + $0x28] sm:$0xff]
        %v1704 = vld [vmem:[%s1697 + $0x30] sm:$0xff]
        %v1705 = vld [vmem:[%s1697 + $0x38] sm:$0xff]
        %v1706 = vld [vmem:[%s1697 + $0x40] sm:$0xff]
        %v1707 = vld [vmem:[%s1697 + $0x48] sm:$0xff]
        %v1708 = vld [vmem:[%s1697 + $0x50] sm:$0xff]
        %v1709 = vld [vmem:[%s1697 + $0x58] sm:$0xff]
        %v1710 = vld [vmem:[%s1697 + $0x60] sm:$0xff]
        %v1711 = vld [vmem:[%s1697 + $0x68] sm:$0xff]
        %v1712 = vld [vmem:[%s1697 + $0x70] sm:$0xff]
        %v1713 = vld [vmem:[%s1697 + $0x78] sm:$0xff]
        %v1714 = vld [vmem:[%s1697 + $0x80] sm:$0xff]
        %v1715 = vld [vmem:[%s1697 + $0x88] sm:$0xff]
        %v1716 = vld [vmem:[%s1697 + $0x90] sm:$0xff]
        %v1717 = vld [vmem:[%s1697 + $0x98] sm:$0xff]
        %v1718 = vld [vmem:[%s1697 + $0xa0] sm:$0xff]
        %v1719 = vld [vmem:[%s1697 + $0xa8] sm:$0xff]
        %v1720 = vld [vmem:[%s1697 + $0xb0] sm:$0xff]
        %v1721 = vld [vmem:[%s1697 + $0xb8] sm:$0xff]
        %v1722 = vld [vmem:[%s1697 + $0xc0] sm:$0xff]
        %v1723 = vld [vmem:[%s1697 + $0xc8] sm:$0xff]
        %v1724 = vld [vmem:[%s1697 + $0xd0] sm:$0xff]
        %v1725 = vld [vmem:[%s1697 + $0xd8] sm:$0xff]
        %v1726 = vld [vmem:[%s1697 + $0xe0] sm:$0xff]
        %v1727 = vld [vmem:[%s1697 + $0xe8] sm:$0xff]
        %v1728 = vld [vmem:[%s1697 + $0xf0] sm:$0xff]
        %v1729 = vld [vmem:[%s1697 + $0xf8] sm:$0xff]
        %1730 = vmatprep.subr.mxu0 %v1729
        %1731 = vmatpush1.msra.mxu0 %v1728
        %1732 = vmatprep.subr.mxu0 %v1727
        %1733 = vmatpush1.msra.mxu0 %v1726
        %1734 = vmatprep.subr.mxu0 %v1725
        %1735 = vmatpush1.msra.mxu0 %v1724
        %1736 = vmatprep.subr.mxu0 %v1723
        %1737 = vmatpush1.msra.mxu0 %v1722
        %1738 = vmatprep.subr.mxu0 %v1721
        %1739 = vmatpush1.msra.mxu0 %v1720
        %1740 = vmatprep.subr.mxu0 %v1719
        %1741 = vmatpush1.msra.mxu0 %v1718
        %1742 = vmatprep.subr.mxu0 %v1717
        %1743 = vmatpush1.msra.mxu0 %v1716
        %1744 = vmatprep.subr.mxu0 %v1715
        %1745 = vmatpush1.msra.mxu0 %v1714
        %1746 = vmatprep.subr.mxu0 %v1713
        %1747 = vmatpush1.msra.mxu0 %v1712
        %1748 = vmatprep.subr.mxu0 %v1711
        %1749 = vmatpush1.msra.mxu0 %v1710
        %1750 = vmatprep.subr.mxu0 %v1709
        %1751 = vmatpush1.msra.mxu0 %v1708
        %1752 = vmatprep.subr.mxu0 %v1707
        %1753 = vmatpush1.msra.mxu0 %v1706
        %1754 = vmatprep.subr.mxu0 %v1705
        %1755 = vmatpush1.msra.mxu0 %v1704
        %1756 = vmatprep.subr.mxu0 %v1703
        %1757 = vmatpush1.msra.mxu0 %v1702
        %1758 = vmatprep.subr.mxu0 %v1701
        %1759 = vmatpush1.msra.mxu0 %v1700
        %1760 = vmatprep.subr.mxu0 %v1699
        %1761 = vmatpush1.msra.mxu0 %v1698
        %1762 = vmatprep.subr.mxu0 0.0
        %1763 = vmatpush2.msra.mxu0 0.0
        %1764 = vmatprep.subr.mxu0 0.0
        %1765 = vmatpush2.msra.mxu0 0.0
        %1766 = vmatprep.subr.mxu0 0.0
        %1767 = vmatpush2.msra.mxu0 0.0
        %1768 = vmatprep.subr.mxu0 0.0
        %1769 = vmatpush2.msra.mxu0 0.0
        %1770 = vmatprep.subr.mxu0 0.0
        %1771 = vmatpush2.msra.mxu0 0.0
        %1772 = vmatprep.subr.mxu0 0.0
        %1773 = vmatpush2.msra.mxu0 0.0
        %1774 = vmatprep.subr.mxu0 0.0
        %1775 = vmatpush2.msra.mxu0 0.0
        %1776 = vmatprep.subr.mxu0 0.0
        %1777 = vmatpush2.msra.mxu0 0.0
        %1778 = vmatprep.subr.mxu0 0.0
        %1779 = vmatpush2.msra.mxu0 0.0
        %1780 = vmatprep.subr.mxu0 0.0
        %1781 = vmatpush2.msra.mxu0 0.0
        %1782 = vmatprep.subr.mxu0 0.0
        %1783 = vmatpush2.msra.mxu0 0.0
        %1784 = vmatprep.subr.mxu0 0.0
        %1785 = vmatpush2.msra.mxu0 0.0
        %1786 = vmatprep.subr.mxu0 0.0
        %1787 = vmatpush2.msra.mxu0 0.0
        %1788 = vmatprep.subr.mxu0 0.0
        %1789 = vmatpush2.msra.mxu0 0.0
        %1790 = vmatprep.subr.mxu0 0.0
        %1791 = vmatpush2.msra.mxu0 0.0
        %1792 = vmatprep.subr.mxu0 0.0
        %1793 = vmatpush2.msra.mxu0 0.0
        %1794 = vmatprep.mubr.f32.mxu0 0.0
        %1795 = vmatmul.mubr.f32.gmra.mxu0 %v1504
        %v1796 = vpop.f32.mrf.mxu0
        %v1797 = vadd.f32 0.0, %v1796
        %v1798 = vpop.f32.mrf.mxu0
        %v1799 = vadd.f32 0.0, %v1798
        %1800 = vmatprep.mubr.f32.mxu0 0.0
        %1801 = vmatmul.mubr.f32.gmra.mxu0 %v1509
        %v1802 = vpop.f32.mrf.mxu0
        %v1803 = vadd.f32 0.0, %v1802
        %v1804 = vpop.f32.mrf.mxu0
        %v1805 = vadd.f32 0.0, %v1804
        %1806 = vdwg.mxu0
        %s1807 = scalar_lea.vmem [#allocation5], 1024
        %v1808 = vld [vmem:[%s1807] sm:$0xff]
        %v1809 = vld [vmem:[%s1807 + $0x8] sm:$0xff]
        %v1810 = vld [vmem:[%s1807 + $0x10] sm:$0xff]
        %v1811 = vld [vmem:[%s1807 + $0x18] sm:$0xff]
        %v1812 = vld [vmem:[%s1807 + $0x20] sm:$0xff]
        %v1813 = vld [vmem:[%s1807 + $0x28] sm:$0xff]
        %v1814 = vld [vmem:[%s1807 + $0x30] sm:$0xff]
        %v1815 = vld [vmem:[%s1807 + $0x38] sm:$0xff]
        %v1816 = vld [vmem:[%s1807 + $0x40] sm:$0xff]
        %v1817 = vld [vmem:[%s1807 + $0x48] sm:$0xff]
        %v1818 = vld [vmem:[%s1807 + $0x50] sm:$0xff]
        %v1819 = vld [vmem:[%s1807 + $0x58] sm:$0xff]
        %v1820 = vld [vmem:[%s1807 + $0x60] sm:$0xff]
        %v1821 = vld [vmem:[%s1807 + $0x68] sm:$0xff]
        %v1822 = vld [vmem:[%s1807 + $0x70] sm:$0xff]
        %v1823 = vld [vmem:[%s1807 + $0x78] sm:$0xff]
        %v1824 = vld [vmem:[%s1807 + $0x80] sm:$0xff]
        %v1825 = vld [vmem:[%s1807 + $0x88] sm:$0xff]
        %v1826 = vld [vmem:[%s1807 + $0x90] sm:$0xff]
        %v1827 = vld [vmem:[%s1807 + $0x98] sm:$0xff]
        %v1828 = vld [vmem:[%s1807 + $0xa0] sm:$0xff]
        %v1829 = vld [vmem:[%s1807 + $0xa8] sm:$0xff]
        %v1830 = vld [vmem:[%s1807 + $0xb0] sm:$0xff]
        %v1831 = vld [vmem:[%s1807 + $0xb8] sm:$0xff]
        %v1832 = vld [vmem:[%s1807 + $0xc0] sm:$0xff]
        %v1833 = vld [vmem:[%s1807 + $0xc8] sm:$0xff]
        %v1834 = vld [vmem:[%s1807 + $0xd0] sm:$0xff]
        %v1835 = vld [vmem:[%s1807 + $0xd8] sm:$0xff]
        %v1836 = vld [vmem:[%s1807 + $0xe0] sm:$0xff]
        %v1837 = vld [vmem:[%s1807 + $0xe8] sm:$0xff]
        %v1838 = vld [vmem:[%s1807 + $0xf0] sm:$0xff]
        %v1839 = vld [vmem:[%s1807 + $0xf8] sm:$0xff]
        %1840 = vmatprep.subr.mxu0 %v1839
        %1841 = vmatpush1.msra.mxu0 %v1838
        %1842 = vmatprep.subr.mxu0 %v1837
        %1843 = vmatpush1.msra.mxu0 %v1836
        %1844 = vmatprep.subr.mxu0 %v1835
        %1845 = vmatpush1.msra.mxu0 %v1834
        %1846 = vmatprep.subr.mxu0 %v1833
        %1847 = vmatpush1.msra.mxu0 %v1832
        %1848 = vmatprep.subr.mxu0 %v1831
        %1849 = vmatpush1.msra.mxu0 %v1830
        %1850 = vmatprep.subr.mxu0 %v1829
        %1851 = vmatpush1.msra.mxu0 %v1828
        %1852 = vmatprep.subr.mxu0 %v1827
        %1853 = vmatpush1.msra.mxu0 %v1826
        %1854 = vmatprep.subr.mxu0 %v1825
        %1855 = vmatpush1.msra.mxu0 %v1824
        %1856 = vmatprep.subr.mxu0 %v1823
        %1857 = vmatpush1.msra.mxu0 %v1822
        %1858 = vmatprep.subr.mxu0 %v1821
        %1859 = vmatpush1.msra.mxu0 %v1820
        %1860 = vmatprep.subr.mxu0 %v1819
        %1861 = vmatpush1.msra.mxu0 %v1818
        %1862 = vmatprep.subr.mxu0 %v1817
        %1863 = vmatpush1.msra.mxu0 %v1816
        %1864 = vmatprep.subr.mxu0 %v1815
        %1865 = vmatpush1.msra.mxu0 %v1814
        %1866 = vmatprep.subr.mxu0 %v1813
        %1867 = vmatpush1.msra.mxu0 %v1812
        %1868 = vmatprep.subr.mxu0 %v1811
        %1869 = vmatpush1.msra.mxu0 %v1810
        %1870 = vmatprep.subr.mxu0 %v1809
        %1871 = vmatpush1.msra.mxu0 %v1808
        %1872 = vmatprep.subr.mxu0 0.0
        %1873 = vmatpush2.msra.mxu0 0.0
        %1874 = vmatprep.subr.mxu0 0.0
        %1875 = vmatpush2.msra.mxu0 0.0
        %1876 = vmatprep.subr.mxu0 0.0
        %1877 = vmatpush2.msra.mxu0 0.0
        %1878 = vmatprep.subr.mxu0 0.0
        %1879 = vmatpush2.msra.mxu0 0.0
        %1880 = vmatprep.subr.mxu0 0.0
        %1881 = vmatpush2.msra.mxu0 0.0
        %1882 = vmatprep.subr.mxu0 0.0
        %1883 = vmatpush2.msra.mxu0 0.0
        %1884 = vmatprep.subr.mxu0 0.0
        %1885 = vmatpush2.msra.mxu0 0.0
        %1886 = vmatprep.subr.mxu0 0.0
        %1887 = vmatpush2.msra.mxu0 0.0
        %1888 = vmatprep.subr.mxu0 0.0
        %1889 = vmatpush2.msra.mxu0 0.0
        %1890 = vmatprep.subr.mxu0 0.0
        %1891 = vmatpush2.msra.mxu0 0.0
        %1892 = vmatprep.subr.mxu0 0.0
        %1893 = vmatpush2.msra.mxu0 0.0
        %1894 = vmatprep.subr.mxu0 0.0
        %1895 = vmatpush2.msra.mxu0 0.0
        %1896 = vmatprep.subr.mxu0 0.0
        %1897 = vmatpush2.msra.mxu0 0.0
        %1898 = vmatprep.subr.mxu0 0.0
        %1899 = vmatpush2.msra.mxu0 0.0
        %1900 = vmatprep.subr.mxu0 0.0
        %1901 = vmatpush2.msra.mxu0 0.0
        %1902 = vmatprep.subr.mxu0 0.0
        %1903 = vmatpush2.msra.mxu0 0.0
        %1904 = vmatprep.mubr.f32.mxu0 0.0
        %1905 = vmatmul.mubr.f32.gmra.mxu0 %v1514
        %v1906 = vpop.f32.mrf.mxu0
        %v1907 = vadd.f32 0.0, %v1906
        %v1908 = vpop.f32.mrf.mxu0
        %v1909 = vadd.f32 0.0, %v1908
        %1910 = vmatprep.mubr.f32.mxu0 0.0
        %1911 = vmatmul.mubr.f32.gmra.mxu0 %v1519
        %v1912 = vpop.f32.mrf.mxu0
        %v1913 = vadd.f32 0.0, %v1912
        %v1914 = vpop.f32.mrf.mxu0
        %v1915 = vadd.f32 0.0, %v1914
        %1916 = vdwg.mxu0
        %1917 = vmatprep.subr.mxu0 %v1553
        %1918 = vmatpush1.msra.mxu0 %v1552
        %1919 = vmatprep.subr.mxu0 %v1551
        %1920 = vmatpush1.msra.mxu0 %v1550
        %1921 = vmatprep.subr.mxu0 %v1549
        %1922 = vmatpush1.msra.mxu0 %v1548
        %1923 = vmatprep.subr.mxu0 %v1547
        %1924 = vmatpush1.msra.mxu0 %v1546
        %1925 = vmatprep.subr.mxu0 %v1545
        %1926 = vmatpush1.msra.mxu0 %v1544
        %1927 = vmatprep.subr.mxu0 %v1543
        %1928 = vmatpush1.msra.mxu0 %v1542
        %1929 = vmatprep.subr.mxu0 %v1541
        %1930 = vmatpush1.msra.mxu0 %v1540
        %1931 = vmatprep.subr.mxu0 %v1539
        %1932 = vmatpush1.msra.mxu0 %v1538
        %1933 = vmatprep.subr.mxu0 %v1537
        %1934 = vmatpush1.msra.mxu0 %v1536
        %1935 = vmatprep.subr.mxu0 %v1535
        %1936 = vmatpush1.msra.mxu0 %v1534
        %1937 = vmatprep.subr.mxu0 %v1533
        %1938 = vmatpush1.msra.mxu0 %v1532
        %1939 = vmatprep.subr.mxu0 %v1531
        %1940 = vmatpush1.msra.mxu0 %v1530
        %1941 = vmatprep.subr.mxu0 %v1529
        %1942 = vmatpush1.msra.mxu0 %v1528
        %1943 = vmatprep.subr.mxu0 %v1527
        %1944 = vmatpush1.msra.mxu0 %v1526
        %1945 = vmatprep.subr.mxu0 %v1525
        %1946 = vmatpush1.msra.mxu0 %v1524
        %1947 = vmatprep.subr.mxu0 %v1523
        %1948 = vmatpush1.msra.mxu0 %v1522
        %1949 = vmatprep.subr.mxu0 0.0
        %1950 = vmatpush2.msra.mxu0 0.0
        %1951 = vmatprep.subr.mxu0 0.0
        %1952 = vmatpush2.msra.mxu0 0.0
        %1953 = vmatprep.subr.mxu0 0.0
        %1954 = vmatpush2.msra.mxu0 0.0
        %1955 = vmatprep.subr.mxu0 0.0
        %1956 = vmatpush2.msra.mxu0 0.0
        %1957 = vmatprep.subr.mxu0 0.0
        %1958 = vmatpush2.msra.mxu0 0.0
        %1959 = vmatprep.subr.mxu0 0.0
        %1960 = vmatpush2.msra.mxu0 0.0
        %1961 = vmatprep.subr.mxu0 0.0
        %1962 = vmatpush2.msra.mxu0 0.0
        %1963 = vmatprep.subr.mxu0 0.0
        %1964 = vmatpush2.msra.mxu0 0.0
        %1965 = vmatprep.subr.mxu0 0.0
        %1966 = vmatpush2.msra.mxu0 0.0
        %1967 = vmatprep.subr.mxu0 0.0
        %1968 = vmatpush2.msra.mxu0 0.0
        %1969 = vmatprep.subr.mxu0 0.0
        %1970 = vmatpush2.msra.mxu0 0.0
        %1971 = vmatprep.subr.mxu0 0.0
        %1972 = vmatpush2.msra.mxu0 0.0
        %1973 = vmatprep.subr.mxu0 0.0
        %1974 = vmatpush2.msra.mxu0 0.0
        %1975 = vmatprep.subr.mxu0 0.0
        %1976 = vmatpush2.msra.mxu0 0.0
        %1977 = vmatprep.subr.mxu0 0.0
        %1978 = vmatpush2.msra.mxu0 0.0
        %1979 = vmatprep.subr.mxu0 0.0
        %1980 = vmatpush2.msra.mxu0 0.0
        %1981 = vmatprep.mubr.f32.mxu0 0.0
        %1982 = vmatmul.mubr.f32.gmra.mxu0 %v1474
        %v1983 = vpop.f32.mrf.mxu0
        %v1984 = vadd.f32 %v1654, %v1983
        %v1985 = vpop.f32.mrf.mxu0
        %v1986 = vadd.f32 %v1656, %v1985
        %1987 = vmatprep.mubr.f32.mxu0 0.0
        %1988 = vmatmul.mubr.f32.gmra.mxu0 %v1479
        %v1989 = vpop.f32.mrf.mxu0
        %v1990 = vadd.f32 %v1660, %v1989
        %v1991 = vpop.f32.mrf.mxu0
        %v1992 = vadd.f32 %v1662, %v1991
        %1993 = vdwg.mxu0
        %1994 = vmatprep.subr.mxu0 %v1696
        %1995 = vmatpush1.msra.mxu0 %v1695
        %1996 = vmatprep.subr.mxu0 %v1694
        %1997 = vmatpush1.msra.mxu0 %v1693
        %1998 = vmatprep.subr.mxu0 %v1692
        %1999 = vmatpush1.msra.mxu0 %v1691
        %2000 = vmatprep.subr.mxu0 %v1690
        %2001 = vmatpush1.msra.mxu0 %v1689
        %2002 = vmatprep.subr.mxu0 %v1688
        %2003 = vmatpush1.msra.mxu0 %v1687
        %2004 = vmatprep.subr.mxu0 %v1686
        %2005 = vmatpush1.msra.mxu0 %v1685
        %2006 = vmatprep.subr.mxu0 %v1684
        %2007 = vmatpush1.msra.mxu0 %v1683
        %2008 = vmatprep.subr.mxu0 %v1682
        %2009 = vmatpush1.msra.mxu0 %v1681
        %2010 = vmatprep.subr.mxu0 %v1680
        %2011 = vmatpush1.msra.mxu0 %v1679
        %2012 = vmatprep.subr.mxu0 %v1678
        %2013 = vmatpush1.msra.mxu0 %v1677
        %2014 = vmatprep.subr.mxu0 %v1676
        %2015 = vmatpush1.msra.mxu0 %v1675
        %2016 = vmatprep.subr.mxu0 %v1674
        %2017 = vmatpush1.msra.mxu0 %v1673
        %2018 = vmatprep.subr.mxu0 %v1672
        %2019 = vmatpush1.msra.mxu0 %v1671
        %2020 = vmatprep.subr.mxu0 %v1670
        %2021 = vmatpush1.msra.mxu0 %v1669
        %2022 = vmatprep.subr.mxu0 %v1668
        %2023 = vmatpush1.msra.mxu0 %v1667
        %2024 = vmatprep.subr.mxu0 %v1666
        %2025 = vmatpush1.msra.mxu0 %v1665
        %2026 = vmatprep.subr.mxu0 0.0
        %2027 = vmatpush2.msra.mxu0 0.0
        %2028 = vmatprep.subr.mxu0 0.0
        %2029 = vmatpush2.msra.mxu0 0.0
        %2030 = vmatprep.subr.mxu0 0.0
        %2031 = vmatpush2.msra.mxu0 0.0
        %2032 = vmatprep.subr.mxu0 0.0
        %2033 = vmatpush2.msra.mxu0 0.0
        %2034 = vmatprep.subr.mxu0 0.0
        %2035 = vmatpush2.msra.mxu0 0.0
        %2036 = vmatprep.subr.mxu0 0.0
        %2037 = vmatpush2.msra.mxu0 0.0
        %2038 = vmatprep.subr.mxu0 0.0
        %2039 = vmatpush2.msra.mxu0 0.0
        %2040 = vmatprep.subr.mxu0 0.0
        %2041 = vmatpush2.msra.mxu0 0.0
        %2042 = vmatprep.subr.mxu0 0.0
        %2043 = vmatpush2.msra.mxu0 0.0
        %2044 = vmatprep.subr.mxu0 0.0
        %2045 = vmatpush2.msra.mxu0 0.0
        %2046 = vmatprep.subr.mxu0 0.0
        %2047 = vmatpush2.msra.mxu0 0.0
        %2048 = vmatprep.subr.mxu0 0.0
        %2049 = vmatpush2.msra.mxu0 0.0
        %2050 = vmatprep.subr.mxu0 0.0
        %2051 = vmatpush2.msra.mxu0 0.0
        %2052 = vmatprep.subr.mxu0 0.0
        %2053 = vmatpush2.msra.mxu0 0.0
        %2054 = vmatprep.subr.mxu0 0.0
        %2055 = vmatpush2.msra.mxu0 0.0
        %2056 = vmatprep.subr.mxu0 0.0
        %2057 = vmatpush2.msra.mxu0 0.0
        %2058 = vmatprep.mubr.f32.mxu0 0.0
        %2059 = vmatmul.mubr.f32.gmra.mxu0 %v1494
        %v2060 = vpop.f32.mrf.mxu0
        %v2061 = vadd.f32 %v1797, %v2060
        %v2062 = vpop.f32.mrf.mxu0
        %v2063 = vadd.f32 %v1799, %v2062
        %2064 = vmatprep.mubr.f32.mxu0 0.0
        %2065 = vmatmul.mubr.f32.gmra.mxu0 %v1499
        %v2066 = vpop.f32.mrf.mxu0
        %v2067 = vadd.f32 %v1803, %v2066
        %v2068 = vpop.f32.mrf.mxu0
        %v2069 = vadd.f32 %v1805, %v2068
        %2070 = vdwg.mxu0
        %v2071 = vadd.f32 %v1984, %v2061
        %v2072 = vadd.f32 %v1986, %v2063
        %v2073 = vadd.f32 %v1990, %v2067
        %v2074 = vadd.f32 %v1992, %v2069
        %v2075 = vadd.f32 %v2071, %v1907
        %v2076 = vadd.f32 %v2072, %v1909
        %v2077 = vadd.f32 %v2073, %v1913
        %v2078 = vadd.f32 %v2074, %v1915
        %v2079 = vmax.f32 %v2075, %v2076
        %v2080 = vmax.f32 %v2077, %v2078
        %v2081 = vmax.f32 %v2079, %v2080
        %v2082 = vld [vmem:[%s6] sm:$0x1]
        %v2084 = vlaneseq
        %v2085 = vshrl.u32 %v2084, 7
        %v2086 = vsub.s32 0, %v2085
        %v2087 = vrot.slane %v2082, %v2086
        %v2089 = vadd.f32 %v2081, %v2087
        %v2090 = vmax.f32 %v2089, 0.0
        %v2091 = vld [vmem:[%s7] sm:$0xff]
        %v2092 = vld [vmem:[%s7 + $0x8] sm:$0xff]
        %v2093 = vld [vmem:[%s7 + $0x10] sm:$0xff]
        %v2094 = vld [vmem:[%s7 + $0x18] sm:$0xff]
        %v2095 = vld [vmem:[%s7 + $0x20] sm:$0xff]
        %v2096 = vld [vmem:[%s7 + $0x28] sm:$0xff]
        %v2097 = vld [vmem:[%s7 + $0x30] sm:$0xff]
        %v2098 = vld [vmem:[%s7 + $0x38] sm:$0xff]
        %v2099 = vld [vmem:[%s7 + $0x40] sm:$0xff]
        %v2100 = vld [vmem:[%s7 + $0x48] sm:$0xff]
        %v2101 = vld [vmem:[%s7 + $0x50] sm:$0xff]
        %v2102 = vld [vmem:[%s7 + $0x58] sm:$0xff]
        %v2103 = vld [vmem:[%s7 + $0x60] sm:$0xff]
        %v2104 = vld [vmem:[%s7 + $0x68] sm:$0xff]
        %v2105 = vld [vmem:[%s7 + $0x70] sm:$0xff]
        %v2106 = vld [vmem:[%s7 + $0x78] sm:$0xff]
        %s2107 = scalar_lea.vmem %s7, 128
        %v2108 = vld [vmem:[%s2107] sm:$0xff]
        %v2109 = vld [vmem:[%s2107 + $0x8] sm:$0xff]
        %v2110 = vld [vmem:[%s2107 + $0x10] sm:$0xff]
        %v2111 = vld [vmem:[%s2107 + $0x18] sm:$0xff]
        %v2112 = vld [vmem:[%s2107 + $0x20] sm:$0xff]
        %v2113 = vld [vmem:[%s2107 + $0x28] sm:$0xff]
        %v2114 = vld [vmem:[%s2107 + $0x30] sm:$0xff]
        %v2115 = vld [vmem:[%s2107 + $0x38] sm:$0xff]
        %v2116 = vld [vmem:[%s2107 + $0x40] sm:$0xff]
        %v2117 = vld [vmem:[%s2107 + $0x48] sm:$0xff]
        %v2118 = vld [vmem:[%s2107 + $0x50] sm:$0xff]
        %v2119 = vld [vmem:[%s2107 + $0x58] sm:$0xff]
        %v2120 = vld [vmem:[%s2107 + $0x60] sm:$0xff]
        %v2121 = vld [vmem:[%s2107 + $0x68] sm:$0xff]
        %v2122 = vld [vmem:[%s2107 + $0x70] sm:$0xff]
        %v2123 = vld [vmem:[%s2107 + $0x78] sm:$0xff]
        %v2125 = vrot.slane %v2090, 1
        %2127 = vmatprep.subr.mxu0 0.0
        %2128 = vmatpush1.msra.mxu0 %v2123
        %2129 = vmatprep.subr.mxu0 0.0
        %2130 = vmatpush1.msra.mxu0 %v2122
        %2131 = vmatprep.subr.mxu0 0.0
        %2132 = vmatpush1.msra.mxu0 %v2121
        %2133 = vmatprep.subr.mxu0 0.0
        %2134 = vmatpush1.msra.mxu0 %v2120
        %2135 = vmatprep.subr.mxu0 0.0
        %2136 = vmatpush1.msra.mxu0 %v2119
        %2137 = vmatprep.subr.mxu0 0.0
        %2138 = vmatpush1.msra.mxu0 %v2118
        %2139 = vmatprep.subr.mxu0 0.0
        %2140 = vmatpush1.msra.mxu0 %v2117
        %2141 = vmatprep.subr.mxu0 0.0
        %2142 = vmatpush1.msra.mxu0 %v2116
        %2143 = vmatprep.subr.mxu0 0.0
        %2144 = vmatpush1.msra.mxu0 %v2115
        %2145 = vmatprep.subr.mxu0 0.0
        %2146 = vmatpush1.msra.mxu0 %v2114
        %2147 = vmatprep.subr.mxu0 0.0
        %2148 = vmatpush1.msra.mxu0 %v2113
        %2149 = vmatprep.subr.mxu0 0.0
        %2150 = vmatpush1.msra.mxu0 %v2112
        %2151 = vmatprep.subr.mxu0 0.0
        %2152 = vmatpush1.msra.mxu0 %v2111
        %2153 = vmatprep.subr.mxu0 0.0
        %2154 = vmatpush1.msra.mxu0 %v2110
        %2155 = vmatprep.subr.mxu0 0.0
        %2156 = vmatpush1.msra.mxu0 %v2109
        %2157 = vmatprep.subr.mxu0 0.0
        %2158 = vmatpush1.msra.mxu0 %v2108
        %2159 = vmatprep.subr.mxu0 0.0
        %2160 = vmatpush2.msra.mxu0 0.0
        %2161 = vmatprep.subr.mxu0 0.0
        %2162 = vmatpush2.msra.mxu0 0.0
        %2163 = vmatprep.subr.mxu0 0.0
        %2164 = vmatpush2.msra.mxu0 0.0
        %2165 = vmatprep.subr.mxu0 0.0
        %2166 = vmatpush2.msra.mxu0 0.0
        %2167 = vmatprep.subr.mxu0 0.0
        %2168 = vmatpush2.msra.mxu0 0.0
        %2169 = vmatprep.subr.mxu0 0.0
        %2170 = vmatpush2.msra.mxu0 0.0
        %2171 = vmatprep.subr.mxu0 0.0
        %2172 = vmatpush2.msra.mxu0 0.0
        %2173 = vmatprep.subr.mxu0 0.0
        %2174 = vmatpush2.msra.mxu0 0.0
        %2175 = vmatprep.subr.mxu0 0.0
        %2176 = vmatpush2.msra.mxu0 0.0
        %2177 = vmatprep.subr.mxu0 0.0
        %2178 = vmatpush2.msra.mxu0 0.0
        %2179 = vmatprep.subr.mxu0 0.0
        %2180 = vmatpush2.msra.mxu0 0.0
        %2181 = vmatprep.subr.mxu0 0.0
        %2182 = vmatpush2.msra.mxu0 0.0
        %2183 = vmatprep.subr.mxu0 0.0
        %2184 = vmatpush2.msra.mxu0 0.0
        %2185 = vmatprep.subr.mxu0 0.0
        %2186 = vmatpush2.msra.mxu0 0.0
        %2187 = vmatprep.subr.mxu0 0.0
        %2188 = vmatpush2.msra.mxu0 0.0
        %2189 = vmatprep.subr.mxu0 0.0
        %2190 = vmatpush2.msra.mxu0 0.0
        %2191 = vmatprep.mubr.f32.mxu0 0.0
        %2192 = vmatmul.mubr.f32.gmra.mxu0 %v2125
        %v2193 = vpop.f32.mrf.mxu0
        %v2194 = vadd.f32 0.0, %v2193
        %v2195 = vpop.f32.mrf.mxu0
        %2196 = vdwg.mxu0
        %2197 = vmatprep.subr.mxu0 0.0
        %2198 = vmatpush1.msra.mxu0 %v2106
        %2199 = vmatprep.subr.mxu0 0.0
        %2200 = vmatpush1.msra.mxu0 %v2105
        %2201 = vmatprep.subr.mxu0 0.0
        %2202 = vmatpush1.msra.mxu0 %v2104
        %2203 = vmatprep.subr.mxu0 0.0
        %2204 = vmatpush1.msra.mxu0 %v2103
        %2205 = vmatprep.subr.mxu0 0.0
        %2206 = vmatpush1.msra.mxu0 %v2102
        %2207 = vmatprep.subr.mxu0 0.0
        %2208 = vmatpush1.msra.mxu0 %v2101
        %2209 = vmatprep.subr.mxu0 0.0
        %2210 = vmatpush1.msra.mxu0 %v2100
        %2211 = vmatprep.subr.mxu0 0.0
        %2212 = vmatpush1.msra.mxu0 %v2099
        %2213 = vmatprep.subr.mxu0 0.0
        %2214 = vmatpush1.msra.mxu0 %v2098
        %2215 = vmatprep.subr.mxu0 0.0
        %2216 = vmatpush1.msra.mxu0 %v2097
        %2217 = vmatprep.subr.mxu0 0.0
        %2218 = vmatpush1.msra.mxu0 %v2096
        %2219 = vmatprep.subr.mxu0 0.0
        %2220 = vmatpush1.msra.mxu0 %v2095
        %2221 = vmatprep.subr.mxu0 0.0
        %2222 = vmatpush1.msra.mxu0 %v2094
        %2223 = vmatprep.subr.mxu0 0.0
        %2224 = vmatpush1.msra.mxu0 %v2093
        %2225 = vmatprep.subr.mxu0 0.0
        %2226 = vmatpush1.msra.mxu0 %v2092
        %2227 = vmatprep.subr.mxu0 0.0
        %2228 = vmatpush1.msra.mxu0 %v2091
        %2229 = vmatprep.subr.mxu0 0.0
        %2230 = vmatpush2.msra.mxu0 0.0
        %2231 = vmatprep.subr.mxu0 0.0
        %2232 = vmatpush2.msra.mxu0 0.0
        %2233 = vmatprep.subr.mxu0 0.0
        %2234 = vmatpush2.msra.mxu0 0.0
        %2235 = vmatprep.subr.mxu0 0.0
        %2236 = vmatpush2.msra.mxu0 0.0
        %2237 = vmatprep.subr.mxu0 0.0
        %2238 = vmatpush2.msra.mxu0 0.0
        %2239 = vmatprep.subr.mxu0 0.0
        %2240 = vmatpush2.msra.mxu0 0.0
        %2241 = vmatprep.subr.mxu0 0.0
        %2242 = vmatpush2.msra.mxu0 0.0
        %2243 = vmatprep.subr.mxu0 0.0
        %2244 = vmatpush2.msra.mxu0 0.0
        %2245 = vmatprep.subr.mxu0 0.0
        %2246 = vmatpush2.msra.mxu0 0.0
        %2247 = vmatprep.subr.mxu0 0.0
        %2248 = vmatpush2.msra.mxu0 0.0
        %2249 = vmatprep.subr.mxu0 0.0
        %2250 = vmatpush2.msra.mxu0 0.0
        %2251 = vmatprep.subr.mxu0 0.0
        %2252 = vmatpush2.msra.mxu0 0.0
        %2253 = vmatprep.subr.mxu0 0.0
        %2254 = vmatpush2.msra.mxu0 0.0
        %2255 = vmatprep.subr.mxu0 0.0
        %2256 = vmatpush2.msra.mxu0 0.0
        %2257 = vmatprep.subr.mxu0 0.0
        %2258 = vmatpush2.msra.mxu0 0.0
        %2259 = vmatprep.subr.mxu0 0.0
        %2260 = vmatpush2.msra.mxu0 0.0
        %2261 = vmatprep.mubr.f32.mxu0 0.0
        %2262 = vmatmul.mubr.f32.gmra.mxu0 %v2090
        %v2263 = vpop.f32.mrf.mxu0
        %v2264 = vadd.f32 %v2194, %v2263
        %v2265 = vpop.f32.mrf.mxu0
        %2266 = vdwg.mxu0
        %s2267 = scalar_lea.vmem %s7, 256
        %v2268 = vld [vmem:[%s2267] sm:$0xff]
        %v2269 = vld [vmem:[%s2267 + $0x8] sm:$0xff]
        %v2270 = vld [vmem:[%s2267 + $0x10] sm:$0xff]
        %v2271 = vld [vmem:[%s2267 + $0x18] sm:$0xff]
        %v2272 = vld [vmem:[%s2267 + $0x20] sm:$0xff]
        %v2273 = vld [vmem:[%s2267 + $0x28] sm:$0xff]
        %v2274 = vld [vmem:[%s2267 + $0x30] sm:$0xff]
        %v2275 = vld [vmem:[%s2267 + $0x38] sm:$0xff]
        %v2276 = vld [vmem:[%s2267 + $0x40] sm:$0xff]
        %v2277 = vld [vmem:[%s2267 + $0x48] sm:$0xff]
        %v2278 = vld [vmem:[%s2267 + $0x50] sm:$0xff]
        %v2279 = vld [vmem:[%s2267 + $0x58] sm:$0xff]
        %v2280 = vld [vmem:[%s2267 + $0x60] sm:$0xff]
        %v2281 = vld [vmem:[%s2267 + $0x68] sm:$0xff]
        %v2282 = vld [vmem:[%s2267 + $0x70] sm:$0xff]
        %v2283 = vld [vmem:[%s2267 + $0x78] sm:$0xff]
        %s2284 = scalar_lea.vmem %s7, 384
        %v2285 = vld [vmem:[%s2284] sm:$0xff]
        %v2286 = vld [vmem:[%s2284 + $0x8] sm:$0xff]
        %v2287 = vld [vmem:[%s2284 + $0x10] sm:$0xff]
        %v2288 = vld [vmem:[%s2284 + $0x18] sm:$0xff]
        %v2289 = vld [vmem:[%s2284 + $0x20] sm:$0xff]
        %v2290 = vld [vmem:[%s2284 + $0x28] sm:$0xff]
        %v2291 = vld [vmem:[%s2284 + $0x30] sm:$0xff]
        %v2292 = vld [vmem:[%s2284 + $0x38] sm:$0xff]
        %v2293 = vld [vmem:[%s2284 + $0x40] sm:$0xff]
        %v2294 = vld [vmem:[%s2284 + $0x48] sm:$0xff]
        %v2295 = vld [vmem:[%s2284 + $0x50] sm:$0xff]
        %v2296 = vld [vmem:[%s2284 + $0x58] sm:$0xff]
        %v2297 = vld [vmem:[%s2284 + $0x60] sm:$0xff]
        %v2298 = vld [vmem:[%s2284 + $0x68] sm:$0xff]
        %v2299 = vld [vmem:[%s2284 + $0x70] sm:$0xff]
        %v2300 = vld [vmem:[%s2284 + $0x78] sm:$0xff]
        %v2301 = vrot.slane %v2090, 3
        %2303 = vmatprep.subr.mxu0 0.0
        %2304 = vmatpush1.msra.mxu0 %v2300
        %2305 = vmatprep.subr.mxu0 0.0
        %2306 = vmatpush1.msra.mxu0 %v2299
        %2307 = vmatprep.subr.mxu0 0.0
        %2308 = vmatpush1.msra.mxu0 %v2298
        %2309 = vmatprep.subr.mxu0 0.0
        %2310 = vmatpush1.msra.mxu0 %v2297
        %2311 = vmatprep.subr.mxu0 0.0
        %2312 = vmatpush1.msra.mxu0 %v2296
        %2313 = vmatprep.subr.mxu0 0.0
        %2314 = vmatpush1.msra.mxu0 %v2295
        %2315 = vmatprep.subr.mxu0 0.0
        %2316 = vmatpush1.msra.mxu0 %v2294
        %2317 = vmatprep.subr.mxu0 0.0
        %2318 = vmatpush1.msra.mxu0 %v2293
        %2319 = vmatprep.subr.mxu0 0.0
        %2320 = vmatpush1.msra.mxu0 %v2292
        %2321 = vmatprep.subr.mxu0 0.0
        %2322 = vmatpush1.msra.mxu0 %v2291
        %2323 = vmatprep.subr.mxu0 0.0
        %2324 = vmatpush1.msra.mxu0 %v2290
        %2325 = vmatprep.subr.mxu0 0.0
        %2326 = vmatpush1.msra.mxu0 %v2289
        %2327 = vmatprep.subr.mxu0 0.0
        %2328 = vmatpush1.msra.mxu0 %v2288
        %2329 = vmatprep.subr.mxu0 0.0
        %2330 = vmatpush1.msra.mxu0 %v2287
        %2331 = vmatprep.subr.mxu0 0.0
        %2332 = vmatpush1.msra.mxu0 %v2286
        %2333 = vmatprep.subr.mxu0 0.0
        %2334 = vmatpush1.msra.mxu0 %v2285
        %2335 = vmatprep.subr.mxu0 0.0
        %2336 = vmatpush2.msra.mxu0 0.0
        %2337 = vmatprep.subr.mxu0 0.0
        %2338 = vmatpush2.msra.mxu0 0.0
        %2339 = vmatprep.subr.mxu0 0.0
        %2340 = vmatpush2.msra.mxu0 0.0
        %2341 = vmatprep.subr.mxu0 0.0
        %2342 = vmatpush2.msra.mxu0 0.0
        %2343 = vmatprep.subr.mxu0 0.0
        %2344 = vmatpush2.msra.mxu0 0.0
        %2345 = vmatprep.subr.mxu0 0.0
        %2346 = vmatpush2.msra.mxu0 0.0
        %2347 = vmatprep.subr.mxu0 0.0
        %2348 = vmatpush2.msra.mxu0 0.0
        %2349 = vmatprep.subr.mxu0 0.0
        %2350 = vmatpush2.msra.mxu0 0.0
        %2351 = vmatprep.subr.mxu0 0.0
        %2352 = vmatpush2.msra.mxu0 0.0
        %2353 = vmatprep.subr.mxu0 0.0
        %2354 = vmatpush2.msra.mxu0 0.0
        %2355 = vmatprep.subr.mxu0 0.0
        %2356 = vmatpush2.msra.mxu0 0.0
        %2357 = vmatprep.subr.mxu0 0.0
        %2358 = vmatpush2.msra.mxu0 0.0
        %2359 = vmatprep.subr.mxu0 0.0
        %2360 = vmatpush2.msra.mxu0 0.0
        %2361 = vmatprep.subr.mxu0 0.0
        %2362 = vmatpush2.msra.mxu0 0.0
        %2363 = vmatprep.subr.mxu0 0.0
        %2364 = vmatpush2.msra.mxu0 0.0
        %2365 = vmatprep.subr.mxu0 0.0
        %2366 = vmatpush2.msra.mxu0 0.0
        %2367 = vmatprep.mubr.f32.mxu0 0.0
        %2368 = vmatmul.mubr.f32.gmra.mxu0 %v2301
        %v2369 = vpop.f32.mrf.mxu0
        %v2370 = vadd.f32 0.0, %v2369
        %v2371 = vpop.f32.mrf.mxu0
        %2372 = vdwg.mxu0
        %v2373 = vrot.slane %v2090, 2
        %2375 = vmatprep.subr.mxu0 0.0
        %2376 = vmatpush1.msra.mxu0 %v2283
        %2377 = vmatprep.subr.mxu0 0.0
        %2378 = vmatpush1.msra.mxu0 %v2282
        %2379 = vmatprep.subr.mxu0 0.0
        %2380 = vmatpush1.msra.mxu0 %v2281
        %2381 = vmatprep.subr.mxu0 0.0
        %2382 = vmatpush1.msra.mxu0 %v2280
        %2383 = vmatprep.subr.mxu0 0.0
        %2384 = vmatpush1.msra.mxu0 %v2279
        %2385 = vmatprep.subr.mxu0 0.0
        %2386 = vmatpush1.msra.mxu0 %v2278
        %2387 = vmatprep.subr.mxu0 0.0
        %2388 = vmatpush1.msra.mxu0 %v2277
        %2389 = vmatprep.subr.mxu0 0.0
        %2390 = vmatpush1.msra.mxu0 %v2276
        %2391 = vmatprep.subr.mxu0 0.0
        %2392 = vmatpush1.msra.mxu0 %v2275
        %2393 = vmatprep.subr.mxu0 0.0
        %2394 = vmatpush1.msra.mxu0 %v2274
        %2395 = vmatprep.subr.mxu0 0.0
        %2396 = vmatpush1.msra.mxu0 %v2273
        %2397 = vmatprep.subr.mxu0 0.0
        %2398 = vmatpush1.msra.mxu0 %v2272
        %2399 = vmatprep.subr.mxu0 0.0
        %2400 = vmatpush1.msra.mxu0 %v2271
        %2401 = vmatprep.subr.mxu0 0.0
        %2402 = vmatpush1.msra.mxu0 %v2270
        %2403 = vmatprep.subr.mxu0 0.0
        %2404 = vmatpush1.msra.mxu0 %v2269
        %2405 = vmatprep.subr.mxu0 0.0
        %2406 = vmatpush1.msra.mxu0 %v2268
        %2407 = vmatprep.subr.mxu0 0.0
        %2408 = vmatpush2.msra.mxu0 0.0
        %2409 = vmatprep.subr.mxu0 0.0
        %2410 = vmatpush2.msra.mxu0 0.0
        %2411 = vmatprep.subr.mxu0 0.0
        %2412 = vmatpush2.msra.mxu0 0.0
        %2413 = vmatprep.subr.mxu0 0.0
        %2414 = vmatpush2.msra.mxu0 0.0
        %2415 = vmatprep.subr.mxu0 0.0
        %2416 = vmatpush2.msra.mxu0 0.0
        %2417 = vmatprep.subr.mxu0 0.0
        %2418 = vmatpush2.msra.mxu0 0.0
        %2419 = vmatprep.subr.mxu0 0.0
        %2420 = vmatpush2.msra.mxu0 0.0
        %2421 = vmatprep.subr.mxu0 0.0
        %2422 = vmatpush2.msra.mxu0 0.0
        %2423 = vmatprep.subr.mxu0 0.0
        %2424 = vmatpush2.msra.mxu0 0.0
        %2425 = vmatprep.subr.mxu0 0.0
        %2426 = vmatpush2.msra.mxu0 0.0
        %2427 = vmatprep.subr.mxu0 0.0
        %2428 = vmatpush2.msra.mxu0 0.0
        %2429 = vmatprep.subr.mxu0 0.0
        %2430 = vmatpush2.msra.mxu0 0.0
        %2431 = vmatprep.subr.mxu0 0.0
        %2432 = vmatpush2.msra.mxu0 0.0
        %2433 = vmatprep.subr.mxu0 0.0
        %2434 = vmatpush2.msra.mxu0 0.0
        %2435 = vmatprep.subr.mxu0 0.0
        %2436 = vmatpush2.msra.mxu0 0.0
        %2437 = vmatprep.subr.mxu0 0.0
        %2438 = vmatpush2.msra.mxu0 0.0
        %2439 = vmatprep.mubr.f32.mxu0 0.0
        %2440 = vmatmul.mubr.f32.gmra.mxu0 %v2373
        %v2441 = vpop.f32.mrf.mxu0
        %v2442 = vadd.f32 %v2370, %v2441
        %v2443 = vpop.f32.mrf.mxu0
        %2444 = vdwg.mxu0
        %v2445 = vadd.f32 %v2264, %v2442
        %v2446 = vld [vmem:[%s8] sm:$0x1]
        %v2447 = vadd.f32 %v2445, %v2446
        %v2448 = vmax.f32 %v2447, 0.0
        %v2449 = vld [vmem:[#allocation7] sm:$0xff]
        %v2450 = vld [vmem:[#allocation7 + $0x8] sm:$0xff]
        %v2451 = vld [vmem:[#allocation7 + $0x10] sm:$0xff]
        %v2452 = vld [vmem:[#allocation7 + $0x18] sm:$0xff]
        %v2453 = vld [vmem:[#allocation7 + $0x20] sm:$0xff]
        %v2454 = vld [vmem:[#allocation7 + $0x28] sm:$0xff]
        %v2455 = vld [vmem:[#allocation7 + $0x30] sm:$0xff]
        %v2456 = vld [vmem:[#allocation7 + $0x38] sm:$0xff]
        %v2457 = vld [vmem:[#allocation7 + $0x40] sm:$0xff]
        %v2458 = vld [vmem:[#allocation7 + $0x48] sm:$0xff]
        %v2459 = vld [vmem:[#allocation7 + $0x50] sm:$0xff]
        %v2460 = vld [vmem:[#allocation7 + $0x58] sm:$0xff]
        %v2461 = vld [vmem:[#allocation7 + $0x60] sm:$0xff]
        %v2462 = vld [vmem:[#allocation7 + $0x68] sm:$0xff]
        %v2463 = vld [vmem:[#allocation7 + $0x70] sm:$0xff]
        %v2464 = vld [vmem:[#allocation7 + $0x78] sm:$0xff]
        %v2465 = vld [vmem:[%s10] sm:$0x1]
        %2466 = vmatprep.subr.mxu0 0.0
        %2467 = vmatpush1.msra.mxu0 %v2464
        %2468 = vmatprep.subr.mxu0 0.0
        %2469 = vmatpush1.msra.mxu0 %v2463
        %2470 = vmatprep.subr.mxu0 0.0
        %2471 = vmatpush1.msra.mxu0 %v2462
        %2472 = vmatprep.subr.mxu0 0.0
        %2473 = vmatpush1.msra.mxu0 %v2461
        %2474 = vmatprep.subr.mxu0 0.0
        %2475 = vmatpush1.msra.mxu0 %v2460
        %2476 = vmatprep.subr.mxu0 0.0
        %2477 = vmatpush1.msra.mxu0 %v2459
        %2478 = vmatprep.subr.mxu0 0.0
        %2479 = vmatpush1.msra.mxu0 %v2458
        %2480 = vmatprep.subr.mxu0 0.0
        %2481 = vmatpush1.msra.mxu0 %v2457
        %2482 = vmatprep.subr.mxu0 0.0
        %2483 = vmatpush1.msra.mxu0 %v2456
        %2484 = vmatprep.subr.mxu0 0.0
        %2485 = vmatpush1.msra.mxu0 %v2455
        %2486 = vmatprep.subr.mxu0 0.0
        %2487 = vmatpush1.msra.mxu0 %v2454
        %2488 = vmatprep.subr.mxu0 0.0
        %2489 = vmatpush1.msra.mxu0 %v2453
        %2490 = vmatprep.subr.mxu0 0.0
        %2491 = vmatpush1.msra.mxu0 %v2452
        %2492 = vmatprep.subr.mxu0 0.0
        %2493 = vmatpush1.msra.mxu0 %v2451
        %2494 = vmatprep.subr.mxu0 0.0
        %2495 = vmatpush1.msra.mxu0 %v2450
        %2496 = vmatprep.subr.mxu0 0.0
        %2497 = vmatpush1.msra.mxu0 %v2449
        %2498 = vmatprep.subr.mxu0 0.0
        %2499 = vmatpush2.msra.mxu0 0.0
        %2500 = vmatprep.subr.mxu0 0.0
        %2501 = vmatpush2.msra.mxu0 0.0
        %2502 = vmatprep.subr.mxu0 0.0
        %2503 = vmatpush2.msra.mxu0 0.0
        %2504 = vmatprep.subr.mxu0 0.0
        %2505 = vmatpush2.msra.mxu0 0.0
        %2506 = vmatprep.subr.mxu0 0.0
        %2507 = vmatpush2.msra.mxu0 0.0
        %2508 = vmatprep.subr.mxu0 0.0
        %2509 = vmatpush2.msra.mxu0 0.0
        %2510 = vmatprep.subr.mxu0 0.0
        %2511 = vmatpush2.msra.mxu0 0.0
        %2512 = vmatprep.subr.mxu0 0.0
        %2513 = vmatpush2.msra.mxu0 0.0
        %2514 = vmatprep.subr.mxu0 0.0
        %2515 = vmatpush2.msra.mxu0 0.0
        %2516 = vmatprep.subr.mxu0 0.0
        %2517 = vmatpush2.msra.mxu0 0.0
        %2518 = vmatprep.subr.mxu0 0.0
        %2519 = vmatpush2.msra.mxu0 0.0
        %2520 = vmatprep.subr.mxu0 0.0
        %2521 = vmatpush2.msra.mxu0 0.0
        %2522 = vmatprep.subr.mxu0 0.0
        %2523 = vmatpush2.msra.mxu0 0.0
        %2524 = vmatprep.subr.mxu0 0.0
        %2525 = vmatpush2.msra.mxu0 0.0
        %2526 = vmatprep.subr.mxu0 0.0
        %2527 = vmatpush2.msra.mxu0 0.0
        %2528 = vmatprep.subr.mxu0 0.0
        %2529 = vmatpush2.msra.mxu0 0.0
        %2530 = vmatprep.mubr.f32.mxu0 0.0
        %2531 = vmatmul.mubr.f32.gmra.mxu0 %v2448
        %v2532 = vpop.f32.mrf.mxu0
        %v2533 = vadd.f32 %v2465, %v2532
        %v2534 = vpop.f32.mrf.mxu0
        %2535 = vdwg.mxu0
        %v2536 = vmax.f32 %v2533, 0.0
        %v2537 = vld [vmem:[#allocation8] sm:$0xff]
        %v2538 = vld [vmem:[#allocation8 + $0x8] sm:$0xff]
        %v2539 = vld [vmem:[#allocation8 + $0x10] sm:$0xff]
        %v2540 = vld [vmem:[#allocation8 + $0x18] sm:$0xff]
        %v2541 = vld [vmem:[#allocation8 + $0x20] sm:$0xff]
        %v2542 = vld [vmem:[#allocation8 + $0x28] sm:$0xff]
        %v2543 = vld [vmem:[#allocation8 + $0x30] sm:$0xff]
        %v2544 = vld [vmem:[#allocation8 + $0x38] sm:$0xff]
        %v2545 = vld [vmem:[#allocation8 + $0x40] sm:$0xff]
        %v2546 = vld [vmem:[#allocation8 + $0x48] sm:$0xff]
        %v2547 = vld [vmem:[#allocation8 + $0x50] sm:$0xff]
        %v2548 = vld [vmem:[#allocation8 + $0x58] sm:$0xff]
        %v2549 = vld [vmem:[#allocation8 + $0x60] sm:$0xff]
        %v2550 = vld [vmem:[#allocation8 + $0x68] sm:$0xff]
        %v2551 = vld [vmem:[#allocation8 + $0x70] sm:$0xff]
        %v2552 = vld [vmem:[#allocation8 + $0x78] sm:$0xff]
        %v2553 = vld [vmem:[%s12] sm:$0x1]
        %2554 = vmatprep.subr.mxu0 0.0
        %2555 = vmatpush1.msra.mxu0 %v2552
        %2556 = vmatprep.subr.mxu0 0.0
        %2557 = vmatpush1.msra.mxu0 %v2551
        %2558 = vmatprep.subr.mxu0 0.0
        %2559 = vmatpush1.msra.mxu0 %v2550
        %2560 = vmatprep.subr.mxu0 0.0
        %2561 = vmatpush1.msra.mxu0 %v2549
        %2562 = vmatprep.subr.mxu0 0.0
        %2563 = vmatpush1.msra.mxu0 %v2548
        %2564 = vmatprep.subr.mxu0 0.0
        %2565 = vmatpush1.msra.mxu0 %v2547
        %2566 = vmatprep.subr.mxu0 0.0
        %2567 = vmatpush1.msra.mxu0 %v2546
        %2568 = vmatprep.subr.mxu0 0.0
        %2569 = vmatpush1.msra.mxu0 %v2545
        %2570 = vmatprep.subr.mxu0 0.0
        %2571 = vmatpush1.msra.mxu0 %v2544
        %2572 = vmatprep.subr.mxu0 0.0
        %2573 = vmatpush1.msra.mxu0 %v2543
        %2574 = vmatprep.subr.mxu0 0.0
        %2575 = vmatpush1.msra.mxu0 %v2542
        %2576 = vmatprep.subr.mxu0 0.0
        %2577 = vmatpush1.msra.mxu0 %v2541
        %2578 = vmatprep.subr.mxu0 0.0
        %2579 = vmatpush1.msra.mxu0 %v2540
        %2580 = vmatprep.subr.mxu0 0.0
        %2581 = vmatpush1.msra.mxu0 %v2539
        %2582 = vmatprep.subr.mxu0 0.0
        %2583 = vmatpush1.msra.mxu0 %v2538
        %2584 = vmatprep.subr.mxu0 0.0
        %2585 = vmatpush1.msra.mxu0 %v2537
        %2586 = vmatprep.subr.mxu0 0.0
        %2587 = vmatpush2.msra.mxu0 0.0
        %2588 = vmatprep.subr.mxu0 0.0
        %2589 = vmatpush2.msra.mxu0 0.0
        %2590 = vmatprep.subr.mxu0 0.0
        %2591 = vmatpush2.msra.mxu0 0.0
        %2592 = vmatprep.subr.mxu0 0.0
        %2593 = vmatpush2.msra.mxu0 0.0
        %2594 = vmatprep.subr.mxu0 0.0
        %2595 = vmatpush2.msra.mxu0 0.0
        %2596 = vmatprep.subr.mxu0 0.0
        %2597 = vmatpush2.msra.mxu0 0.0
        %2598 = vmatprep.subr.mxu0 0.0
        %2599 = vmatpush2.msra.mxu0 0.0
        %2600 = vmatprep.subr.mxu0 0.0
        %2601 = vmatpush2.msra.mxu0 0.0
        %2602 = vmatprep.subr.mxu0 0.0
        %2603 = vmatpush2.msra.mxu0 0.0
        %2604 = vmatprep.subr.mxu0 0.0
        %2605 = vmatpush2.msra.mxu0 0.0
        %2606 = vmatprep.subr.mxu0 0.0
        %2607 = vmatpush2.msra.mxu0 0.0
        %2608 = vmatprep.subr.mxu0 0.0
        %2609 = vmatpush2.msra.mxu0 0.0
        %2610 = vmatprep.subr.mxu0 0.0
        %2611 = vmatpush2.msra.mxu0 0.0
        %2612 = vmatprep.subr.mxu0 0.0
        %2613 = vmatpush2.msra.mxu0 0.0
        %2614 = vmatprep.subr.mxu0 0.0
        %2615 = vmatpush2.msra.mxu0 0.0
        %2616 = vmatprep.subr.mxu0 0.0
        %2617 = vmatpush2.msra.mxu0 0.0
        %2618 = vmatprep.mubr.f32.mxu0 0.0
        %2619 = vmatmul.mubr.f32.gmra.mxu0 %v2536
        %v2620 = vpop.f32.mrf.mxu0
        %v2621 = vadd.f32 %v2553, %v2620
        %v2622 = vpop.f32.mrf.mxu0
        %2623 = vdwg.mxu0
        %2624 = vst [vmem:[%s491] sm:$0x1] %v2621
        %s2625 = sand.u32 %s316, 1
        %s2626 = scalar_lea.sflag [#allocation4], %s2625
        %s2627 = sand.u32 %s316, 1
        %s2628 = scalar_lea.vmem [#allocation10], %s2627
        // Predicated region
        $region89: #{lenet_forward.1} parent=71 // pred_check
          %p2629 = pneg %p326
        $region90: #{lenet_forward.1} parent=71 // pred_check_branch
          %2631 = sbr.rel (%p2629) target = $region92
        $region91: #{lenet_forward.1} parent=71 // pred_region
          %s2633 = ssub.s32 16, 16
          %2634 = vsyncadd %s2626, %s2633
          %s2635 = smul.addr %s30, 16
          %s2636 = scalar_lea.hbm %s13, %s2635
          %s2638 = sshll.u32 %s2628, 4
          %s2639 = int_to_ptr.vmem [resolvable:$true] %s2638
          %2641 = dma.vmem_to_hbm [thread:$0]  %s2639, 16, %s2636, %s2626
        $region92: #{lenet_forward.1} parent=71 // pred_fallthru
          _
      $region72: #{lenet_forward.1} parent=5 // pred_fallthru
        _
      %p2642 = scmp.le.s32.totalorder 2, %s25
      // Predicated region
      $region93: #{lenet_forward.1} parent=5 // pred_check
        %p2643 = pneg %p2642
      $region94: #{lenet_forward.1} parent=5 // pred_check_branch
        %2645 = sbr.rel (%p2643) target = $region96
      $region95: #{lenet_forward.1} parent=5 // pred_region
        %s2646 = ssub.s32 %s25, 2
        // Predicated region
        $region97: #{lenet_forward.1} parent=95 // pred_check
          %p2647 = pneg %p332
        $region98: #{lenet_forward.1} parent=95 // pred_check_branch
          %2649 = sbr.rel (%p2647) target = $region100
        $region99: #{lenet_forward.1} parent=95 // pred_region
          %s2650 = sand.u32 %s317, 1
          %s2651 = scalar_lea.sflag [#allocation4], %s2650
          %s2652 = sand.u32 %s317, 1
          %s2653 = scalar_lea.vmem [#allocation10], %s2652
          %2654 = dma.done %s2651, 16
        $region100: #{lenet_forward.1} parent=95 // pred_fallthru
          _
      $region96: #{lenet_forward.1} parent=5 // pred_fallthru
        _
    $region6: #{lenet_forward.1} parent=1 // loop_footer
      %s29 = sadd.s32 1, %s25
    $region7: #{lenet_forward.1} parent=1 // loop_footer_branch
      %24 = sbr.rel target = $region3
    $region8: #{lenet_forward.1} parent=1 // loop_exit
      _
    %2655 = vsyncpa [#allocation3], 1
    %s2656 = scalar_lea.sflag [#allocation3], 1
    %2657 = vsyncpa %s2656, 1
    %2658 = vsyncpa [#allocation6], 1
    %2659 = vsyncpa [#allocation9], 1
    %2660 = vsyncpa [#allocation4], 1
    %s2661 = scalar_lea.sflag [#allocation4], 1
    %2662 = vsyncpa %s2661, 1

</llo_original>
